<compile_context>
chip_gen: v7x
topology: tpu7x:2x2x1
jax: 0.10.0
libtpu: 0.0.40
codegen_flags: <defaults>
</compile_context>

<pallas_src>
import functools

import jax
import jax.numpy as jnp
from jax import lax
from jax.experimental import pallas as pl
from jax.experimental.pallas import tpu as pltpu


# ----------------------------------------------------------------------------
# fused decoder-layer kernel (one grid step == one layer of the stack)
# ----------------------------------------------------------------------------
def _decoder_layer_kernel(q_ref, qp_ref, kin_ref, v_ref,
                          sa_wqk_ref, aw_ref, f_w1_ref, f_w2_ref, vecs_ref,
                          o_ref, ctx_ref,
                          *, B, Lq, Lk, H, hd, eps):
    D = H * hd
    F = f_w1_ref.shape[-1]
    scale = 1.0 / float(hd) ** 0.5

    # layer 0: seed the carried activation (kept resident in the output block)
    @pl.when(pl.program_id(0) == 0)
    def _():
        o_ref[...] = q_ref[...]

    x = o_ref[...]                       # (B*Lq, D) f32, carried across layers
    qpos = qp_ref[...]                   # (B*Lq, D) f32
    vecs = vecs_ref[...]                 # (16, max(D, F)) f32

    sa_bq = vecs[0:1, :D]; sa_bk = vecs[1:2, :D]
    sa_bv = vecs[2:3, :D]; sa_bo = vecs[3:4, :D]
    ca_bq = vecs[4:5, :D]; ca_bk = vecs[5:6, :D]
    ca_bv = vecs[6:7, :D]; ca_bo = vecs[7:8, :D]
    f_b1 = vecs[8:9, :F];  f_b2 = vecs[9:10, :D]
    g0 = vecs[10:11, :D]; b0 = vecs[11:12, :D]
    g1 = vecs[12:13, :D]; b1 = vecs[13:14, :D]
    g2 = vecs[14:15, :D]; b2 = vecs[15:16, :D]

    def bdot(a, b):
        return jnp.dot(a, b, preferred_element_type=jnp.float32)

    def layer_norm(y, g, b_):
        m = jnp.mean(y, axis=-1, keepdims=True)
        var = jnp.mean((y - m) ** 2, axis=-1, keepdims=True)
        return (y - m) * lax.rsqrt(var + eps) * g + b_

    # (L, D) f32 -> (H, L, hd)  using 2-D transpose + major reshape + minor swap
    def heads_major(m2d):
        L = m2d.shape[0]
        return jnp.transpose(m2d.T.reshape(H, hd, L), (0, 2, 1))

    # (L, D) f32 -> (H, hd, L)   (per-head K^T, no extra swap needed)
    def heads_major_t(m2d):
        L = m2d.shape[0]
        return m2d.T.reshape(H, hd, L)

    def attention_core(Q, K, V, Lkv):
        """Q: (B*Lq, D), K/V: (B*Lkv, D) f32.  Writes context to ctx_ref."""
        for b in range(B):                         # B is tiny and static
            rq = slice(b * Lq, (b + 1) * Lq)
            rk = slice(b * Lkv, (b + 1) * Lkv)
            Qh = heads_major(Q[rq] * scale).astype(jnp.bfloat16)   # (H, Lq, hd)
            Kt = heads_major_t(K[rk]).astype(jnp.bfloat16)         # (H, hd, Lkv)
            Vh = heads_major(V[rk]).astype(jnp.bfloat16)           # (H, Lkv, hd)
            # all heads in one batched matmul (MXU), f32 accumulation
            s = jnp.einsum('hqd,hdk->hqk', Qh, Kt,
                           preferred_element_type=jnp.float32)     # (H, Lq, Lkv)
            s = s - jnp.max(s, axis=-1, keepdims=True)
            p = jnp.exp(s)
            p = p * pl.reciprocal(jnp.sum(p, axis=-1, keepdims=True), approx=True)
            ctx = jnp.einsum('hqk,hkd->hqd', p.astype(jnp.bfloat16), Vh,
                             preferred_element_type=jnp.float32)    # (H, Lq, hd)
            ctx_ref[rq, :] = jnp.transpose(ctx, (0, 2, 1)).reshape(D, Lq).T

    # ---- self attention (+ residual) -> norm0 ----
    q_in = x + qpos
    qk = bdot(q_in.astype(jnp.bfloat16), sa_wqk_ref[...])          # (N, 2D) fused Q|K
    Q = qk[:, :D] + sa_bq
    K = qk[:, D:] + sa_bk
    V = bdot(x.astype(jnp.bfloat16), aw_ref[0]) + sa_bv
    attention_core(Q, K, V, Lq)
    attn = bdot(ctx_ref[...].astype(jnp.bfloat16), aw_ref[1]) + sa_bo
    x = layer_norm(x + attn, g0, b0)

    # ---- cross attention (+ residual) -> norm1 ----
    q_in = x + qpos
    Q = bdot(q_in.astype(jnp.bfloat16), aw_ref[2]) + ca_bq
    K = bdot(kin_ref[...], aw_ref[3]) + ca_bk      # kin = key + key_pos (bf16, wrapper)
    V = bdot(v_ref[...], aw_ref[4]) + ca_bv
    attention_core(Q, K, V, Lk)
    attn = bdot(ctx_ref[...].astype(jnp.bfloat16), aw_ref[5]) + ca_bo
    x = layer_norm(x + attn, g1, b1)

    # ---- FFN (+ residual) -> norm2 ----
    h1 = jnp.maximum(bdot(x.astype(jnp.bfloat16), f_w1_ref[...]) + f_b1, 0.0)
    y = bdot(h1.astype(jnp.bfloat16), f_w2_ref[...]) + f_b2
    x = layer_norm(x + y, g2, b2)

    o_ref[...] = x


# ----------------------------------------------------------------------------
# pallas_call wrapper
# ----------------------------------------------------------------------------
def transformer_layer_sequence(query, key, value, params, num_heads,
                               query_pos=None, key_pos=None, eps=1e-5):
    """Mirrors TransformerLayerSequence.forward (post-norm decoder layers).

    Args are in the PyTorch convention: (num_queries/num_keys, bs, embed_dims).
    Returns (num_queries, bs, embed_dims).
    """
    Lq, B, D = query.shape
    Lk = key.shape[0]
    NL = params["sa_wq"].shape[0]
    H = num_heads
    hd = D // H
    F = params["f_w1"].shape[-1]
    VD = max(D, F)

    def to_slab(x, L):
        return jnp.transpose(x, (1, 0, 2)).reshape(B * L, D).astype(jnp.float32)

    q2 = to_slab(query, Lq)
    qp2 = to_slab(query_pos, Lq) if query_pos is not None else jnp.zeros_like(q2)
    k2 = to_slab(key, Lk)
    kp2 = to_slab(key_pos, Lk) if key_pos is not None else jnp.zeros_like(k2)
    kin2 = (k2 + kp2).astype(jnp.bfloat16)          # layer-invariant key + key_pos
    v2 = to_slab(value, Lk).astype(jnp.bfloat16)

    # ---- pack per-layer parameters into few, larger streamed inputs ----
    sa_wqk = jnp.concatenate([params["sa_wq"], params["sa_wk"]],
                             axis=-1).astype(jnp.bfloat16)            # (NL, D, 2D)
    aw = jnp.stack([params["sa_wv"], params["sa_wo"],
                    params["ca_wq"], params["ca_wk"],
                    params["ca_wv"], params["ca_wo"]],
                   axis=1).astype(jnp.bfloat16)                       # (NL, 6, D, D)
    f_w1 = params["f_w1"].astype(jnp.bfloat16)                        # (NL, D, F)
    f_w2 = params["f_w2"].astype(jnp.bfloat16)                        # (NL, F, D)

    def padv(v, w):
        return jnp.pad(v.astype(jnp.float32), ((0, 0), (0, VD - w)))

    vec_list = [padv(params[n], D) for n in
                ("sa_bq", "sa_bk", "sa_bv", "sa_bo",
                 "ca_bq", "ca_bk", "ca_bv", "ca_bo")]
    vec_list += [padv(params["f_b1"], F), padv(params["f_b2"], D)]
    vec_list += [padv(params[n], D) for n in
                 ("ln0_g", "ln0_b", "ln1_g", "ln1_b", "ln2_g", "ln2_b")]
    vecs = jnp.stack(vec_list, axis=1)                                # (NL, 16, VD)

    kernel = functools.partial(_decoder_layer_kernel,
                               B=B, Lq=Lq, Lk=Lk, H=H, hd=hd, eps=eps)

    in_specs = [
        pl.BlockSpec((B * Lq, D), lambda l: (0, 0)),            # q  (resident)
        pl.BlockSpec((B * Lq, D), lambda l: (0, 0)),            # query_pos
        pl.BlockSpec((B * Lk, D), lambda l: (0, 0)),            # key + key_pos
        pl.BlockSpec((B * Lk, D), lambda l: (0, 0)),            # value
        pl.BlockSpec((None, D, 2 * D), lambda l: (l, 0, 0)),    # fused sa Q|K
        pl.BlockSpec((None, 6, D, D), lambda l: (l, 0, 0, 0)),  # other attn weights
        pl.BlockSpec((None, D, F), lambda l: (l, 0, 0)),        # ffn up
        pl.BlockSpec((None, F, D), lambda l: (l, 0, 0)),        # ffn down
        pl.BlockSpec((None, 16, VD), lambda l: (l, 0, 0)),      # biases + LN params
    ]
    out_spec = pl.BlockSpec((B * Lq, D), lambda l: (0, 0))

    # size the scoped VMEM limit to the real working set (double-buffered
    # per-layer weights + resident activations + slack)
    def nbytes(a):
        return a.size * a.dtype.itemsize
    per_layer_w = (nbytes(sa_wqk) + nbytes(aw) + nbytes(f_w1)
                   + nbytes(f_w2) + nbytes(vecs)) // NL
    resident = (nbytes(q2) + nbytes(qp2) + nbytes(kin2) + nbytes(v2)
                + q2.size * 4)
    vmem_limit = int(min(4 * per_layer_w + 4 * resident + (8 << 20), 64 << 20))

    out2 = pl.pallas_call(
        kernel,
        out_shape=jax.ShapeDtypeStruct((B * Lq, D), jnp.float32),
        grid=(NL,),
        in_specs=in_specs,
        out_specs=out_spec,
        scratch_shapes=[pltpu.VMEM((B * Lq, D), jnp.float32)],
        compiler_params=pltpu.CompilerParams(
            dimension_semantics=("arbitrary",),   # layer axis is sequential
            vmem_limit_bytes=vmem_limit),
    )(q2, qp2, kin2, v2, sa_wqk, aw, f_w1, f_w2, vecs)

    return jnp.transpose(out2.reshape(B, Lq, D), (1, 0, 2))


# ----------------------------------------------------------------------------
# deterministic parameter construction (stacked over layers, "logical" layout)
# ----------------------------------------------------------------------------
def make_params(rng, num_layers, D, F, num_heads):
    del num_heads
    s = 0.05
    keys = iter(jax.random.split(rng, 32))
    p = {}
    for name in ("sa_wq", "sa_wk", "sa_wv", "sa_wo",
                 "ca_wq", "ca_wk", "ca_wv", "ca_wo"):
        p[name] = s * jax.random.normal(next(keys), (num_layers, D, D), jnp.float32)
    for name in ("sa_bq", "sa_bk", "sa_bv", "sa_bo",
                 "ca_bq", "ca_bk", "ca_bv", "ca_bo"):
        p[name] = s * jax.random.normal(next(keys), (num_layers, D), jnp.float32)
    p["f_w1"] = s * jax.random.normal(next(keys), (num_layers, D, F), jnp.float32)
    p["f_w2"] = s * jax.random.normal(next(keys), (num_layers, F, D), jnp.float32)
    p["f_b1"] = s * jax.random.normal(next(keys), (num_layers, F), jnp.float32)
    p["f_b2"] = s * jax.random.normal(next(keys), (num_layers, D), jnp.float32)
    for i in range(3):
        p[f"ln{i}_g"] = jnp.ones((num_layers, D), jnp.float32)
        p[f"ln{i}_b"] = jnp.zeros((num_layers, D), jnp.float32)
    return p


# ----------------------------------------------------------------------------
# pure-JAX reference (same precision policy: bf16 matmuls, f32 accumulation)
# ----------------------------------------------------------------------------
def _reference_forward(query, key, value, params, num_heads,
                       query_pos, key_pos, eps=1e-5):
    Lq, B, D = query.shape
    Lk = key.shape[0]
    H = num_heads
    hd = D // H
    scale = 1.0 / float(hd) ** 0.5

    def dot(a, b):
        return jnp.dot(a.astype(jnp.bfloat16), b.astype(jnp.bfloat16),
                       preferred_element_type=jnp.float32)

    def ln(x, g, b_):
        m = jnp.mean(x, axis=-1, keepdims=True)
        v = jnp.mean((x - m) ** 2, axis=-1, keepdims=True)
        return (x - m) * lax.rsqrt(v + eps) * g + b_

    def mha(q_in, k_in, v_in, wq, wk, wv, wo, bq, bk, bv, bo):
        Q = dot(q_in, wq) + bq
        K = dot(k_in, wk) + bk
        V = dot(v_in, wv) + bv
        Qh = jnp.transpose((Q * scale).reshape(-1, H, hd), (1, 0, 2)).astype(jnp.bfloat16)
        Kh = jnp.transpose(K.reshape(-1, H, hd), (1, 0, 2)).astype(jnp.bfloat16)
        Vh = jnp.transpose(V.reshape(-1, H, hd), (1, 0, 2)).astype(jnp.bfloat16)
        s = jnp.einsum('hqd,hkd->hqk', Qh, Kh, preferred_element_type=jnp.float32)
        p = jax.nn.softmax(s, axis=-1)
        ctx = jnp.einsum('hqk,hkd->hqd', p.astype(jnp.bfloat16), Vh,
                         preferred_element_type=jnp.float32)
        ctx = jnp.transpose(ctx, (1, 0, 2)).reshape(-1, D)
        return dot(ctx, wo) + bo

    q = jnp.transpose(query, (1, 0, 2)).astype(jnp.float32)
    k = jnp.transpose(key, (1, 0, 2)).astype(jnp.float32)
    v = jnp.transpose(value, (1, 0, 2)).astype(jnp.float32)
    qp = (jnp.transpose(query_pos, (1, 0, 2)).astype(jnp.float32)
          if query_pos is not None else jnp.zeros_like(q))
    kp = (jnp.transpose(key_pos, (1, 0, 2)).astype(jnp.float32)
          if key_pos is not None else jnp.zeros_like(k))

    NL = params["sa_wq"].shape[0]
    outs = []
    for b in range(B):
        x = q[b]
        for l in range(NL):
            def g(n):
                return params[n][l]
            qi = x + qp[b]
            a = mha(qi, qi, x,
                    g("sa_wq"), g("sa_wk"), g("sa_wv"), g("sa_wo"),
                    g("sa_bq"), g("sa_bk"), g("sa_bv"), g("sa_bo"))
            x = ln(x + a, g("ln0_g"), g("ln0_b"))
            qi = x + qp[b]
            a = mha(qi, k[b] + kp[b], v[b],
                    g("ca_wq"), g("ca_wk"), g("ca_wv"), g("ca_wo"),
                    g("ca_bq"), g("ca_bk"), g("ca_bv"), g("ca_bo"))
            x = ln(x + a, g("ln1_g"), g("ln1_b"))
            hmid = jnp.maximum(dot(x, g("f_w1")) + g("f_b1"), 0.0)
            y = dot(hmid, g("f_w2")) + g("f_b2")
            x = ln(x + y, g("ln2_g"), g("ln2_b"))
        outs.append(x)
    return jnp.transpose(jnp.stack(outs, axis=0), (1, 0, 2))


# ----------------------------------------------------------------------------
if __name__ == "__main__":
    num_layers = 2
    num_heads = 4
    embed_dims = 32
    ffn_dims = 64
    num_queries, num_keys, bs = 8, 16, 2

    root = jax.random.PRNGKey(0)
    r_q, r_k, r_v, r_qp, r_kp, r_p = jax.random.split(root, 6)

    query = jax.random.normal(r_q, (num_queries, bs, embed_dims), jnp.float32)
    key = jax.random.normal(r_k, (num_keys, bs, embed_dims), jnp.float32)
    value = jax.random.normal(r_v, (num_keys, bs, embed_dims), jnp.float32)
    query_pos = jax.random.normal(r_qp, (num_queries, bs, embed_dims), jnp.float32)
    key_pos = jax.random.normal(r_kp, (num_keys, bs, embed_dims), jnp.float32)

    params = make_params(r_p, num_layers, embed_dims, ffn_dims, num_heads)

    out = transformer_layer_sequence(query, key, value, params, num_heads,
                                     query_pos=query_pos, key_pos=key_pos)
    out = jax.block_until_ready(out)

    assert out.shape == (num_queries, bs, embed_dims), out.shape
    assert bool(jnp.all(jnp.isfinite(out)))

    ref = _reference_forward(query, key, value, params, num_heads,
                             query_pos, key_pos)
    max_err = float(jnp.max(jnp.abs(out - ref)))
    assert max_err < 5e-2, f"max abs err vs reference: {max_err}"

    print("KERNEL_OK")
</pallas_src>

<mosaic_0001>
module attributes {stable_mosaic.version = 11 : i64} {
  func.func @_decoder_layer_kernel(%arg0: i32, %arg1: memref<16x32xf32, #tpu.memory_space<vmem>>, %arg2: memref<16x32xf32, #tpu.memory_space<vmem>>, %arg3: memref<32x32xbf16, #tpu.memory_space<vmem>>, %arg4: memref<32x32xbf16, #tpu.memory_space<vmem>>, %arg5: memref<1x32x64xbf16, #tpu.memory_space<vmem>>, %arg6: memref<1x6x32x32xbf16, #tpu.memory_space<vmem>>, %arg7: memref<1x32x64xbf16, #tpu.memory_space<vmem>>, %arg8: memref<1x64x32xbf16, #tpu.memory_space<vmem>>, %arg9: memref<1x16x64xf32, #tpu.memory_space<vmem>>, %arg10: memref<16x32xf32, #tpu.memory_space<vmem>>, %arg11: memref<16x32xf32, #tpu.memory_space<vmem>>) attributes {dimension_semantics = [#tpu.dimension_semantics<arbitrary>], iteration_bounds = array<i64: 2>, scalar_prefetch = 0 : i64, scratch_operands = 1 : i64, tpu.core_type = #tpu.core_type<tc>, window_params = [{pipeline_mode = #tpu.pipeline_mode<synchronous>, transform_indices = @transform_0, window_bounds = array<i64: 16, 32>}, {pipeline_mode = #tpu.pipeline_mode<synchronous>, transform_indices = @transform_1, window_bounds = array<i64: 16, 32>}, {pipeline_mode = #tpu.pipeline_mode<synchronous>, transform_indices = @transform_2, window_bounds = array<i64: 32, 32>}, {pipeline_mode = #tpu.pipeline_mode<synchronous>, transform_indices = @transform_3, window_bounds = array<i64: 32, 32>}, {transform_indices = @transform_4, window_bounds = array<i64: 1, 32, 64>}, {transform_indices = @transform_5, window_bounds = array<i64: 1, 6, 32, 32>}, {transform_indices = @transform_6, window_bounds = array<i64: 1, 32, 64>}, {transform_indices = @transform_7, window_bounds = array<i64: 1, 64, 32>}, {transform_indices = @transform_8, window_bounds = array<i64: 1, 16, 64>}, {pipeline_mode = #tpu.pipeline_mode<synchronous>, transform_indices = @transform_9, window_bounds = array<i64: 16, 32>}]} {
    %c0_i32 = arith.constant 0 : i32
    %0 = arith.cmpi eq, %arg0, %c0_i32 : i32
    %1 = arith.extui %0 : i1 to i32
    %c0_i32_0 = arith.constant 0 : i32
    %2 = arith.cmpi ne, %1, %c0_i32_0 : i32
    scf.if %2 {
      %c0_96 = arith.constant 0 : index
      %c0_97 = arith.constant 0 : index
      %289 = vector.load %arg1[%c0_96, %c0_97] : memref<16x32xf32, #tpu.memory_space<vmem>>, vector<16x32xf32>
      %c0_98 = arith.constant 0 : index
      %c0_99 = arith.constant 0 : index
      %290 = vector.load %arg10[%c0_98, %c0_99] : memref<16x32xf32, #tpu.memory_space<vmem>>, vector<16x32xf32>
      tpu.vector_store %arg10[%c0_98, %c0_99], %289 {strides = array<i32>} : memref<16x32xf32, #tpu.memory_space<vmem>>, vector<16x32xf32>,
    } else {
    }
    %c0 = arith.constant 0 : index
    %c0_1 = arith.constant 0 : index
    %3 = vector.load %arg10[%c0, %c0_1] : memref<16x32xf32, #tpu.memory_space<vmem>>, vector<16x32xf32>
    %c0_2 = arith.constant 0 : index
    %c0_3 = arith.constant 0 : index
    %4 = vector.load %arg2[%c0_2, %c0_3] : memref<16x32xf32, #tpu.memory_space<vmem>>, vector<16x32xf32>
    %c0_4 = arith.constant 0 : index
    %c0_5 = arith.constant 0 : index
    %c0_6 = arith.constant 0 : index
    %5 = vector.load %arg9[%c0_4, %c0_5, %c0_6] : memref<1x16x64xf32, #tpu.memory_space<vmem>>, vector<1x16x64xf32>
    %6 = vector.shape_cast %5 : vector<1x16x64xf32> to vector<16x64xf32>
    %7 = vector.extract_strided_slice %6 {offsets = [0, 0], sizes = [1, 32], strides = [1, 1]} : vector<16x64xf32> to vector<1x32xf32>
    %8 = vector.extract_strided_slice %6 {offsets = [1, 0], sizes = [1, 32], strides = [1, 1]} : vector<16x64xf32> to vector<1x32xf32>
    %9 = vector.extract_strided_slice %6 {offsets = [2, 0], sizes = [1, 32], strides = [1, 1]} : vector<16x64xf32> to vector<1x32xf32>
    %10 = vector.extract_strided_slice %6 {offsets = [3, 0], sizes = [1, 32], strides = [1, 1]} : vector<16x64xf32> to vector<1x32xf32>
    %11 = vector.extract_strided_slice %6 {offsets = [4, 0], sizes = [1, 32], strides = [1, 1]} : vector<16x64xf32> to vector<1x32xf32>
    %12 = vector.extract_strided_slice %6 {offsets = [5, 0], sizes = [1, 32], strides = [1, 1]} : vector<16x64xf32> to vector<1x32xf32>
    %13 = vector.extract_strided_slice %6 {offsets = [6, 0], sizes = [1, 32], strides = [1, 1]} : vector<16x64xf32> to vector<1x32xf32>
    %14 = vector.extract_strided_slice %6 {offsets = [7, 0], sizes = [1, 32], strides = [1, 1]} : vector<16x64xf32> to vector<1x32xf32>
    %15 = vector.extract_strided_slice %6 {offsets = [8, 0], sizes = [1, 64], strides = [1, 1]} : vector<16x64xf32> to vector<1x64xf32>
    %16 = vector.extract_strided_slice %6 {offsets = [9, 0], sizes = [1, 32], strides = [1, 1]} : vector<16x64xf32> to vector<1x32xf32>
    %17 = vector.extract_strided_slice %6 {offsets = [10, 0], sizes = [1, 32], strides = [1, 1]} : vector<16x64xf32> to vector<1x32xf32>
    %18 = vector.extract_strided_slice %6 {offsets = [11, 0], sizes = [1, 32], strides = [1, 1]} : vector<16x64xf32> to vector<1x32xf32>
    %19 = vector.extract_strided_slice %6 {offsets = [12, 0], sizes = [1, 32], strides = [1, 1]} : vector<16x64xf32> to vector<1x32xf32>
    %20 = vector.extract_strided_slice %6 {offsets = [13, 0], sizes = [1, 32], strides = [1, 1]} : vector<16x64xf32> to vector<1x32xf32>
    %21 = vector.extract_strided_slice %6 {offsets = [14, 0], sizes = [1, 32], strides = [1, 1]} : vector<16x64xf32> to vector<1x32xf32>
    %22 = vector.extract_strided_slice %6 {offsets = [15, 0], sizes = [1, 32], strides = [1, 1]} : vector<16x64xf32> to vector<1x32xf32>
    %23 = arith.addf %3, %4 : vector<16x32xf32>
    %24 = arith.truncf %23 : vector<16x32xf32> to vector<16x32xbf16>
    %c0_7 = arith.constant 0 : index
    %c0_8 = arith.constant 0 : index
    %c0_9 = arith.constant 0 : index
    %25 = vector.load %arg5[%c0_7, %c0_8, %c0_9] : memref<1x32x64xbf16, #tpu.memory_space<vmem>>, vector<1x32x64xbf16>
    %26 = vector.shape_cast %25 : vector<1x32x64xbf16> to vector<32x64xbf16>
    %cst = arith.constant dense<0.000000e+00> : vector<16x64xf32>
    %27 = tpu.matmul %24, %26, %cst {dimension_numbers = #tpu.dot_dimension_numbers<[1], [0], [0], [1], [0, 0, 1, 1], [], []>} : vector<16x32xbf16>, vector<32x64xbf16>, vector<16x64xf32> -> vector<16x64xf32>
    %28 = vector.extract_strided_slice %27 {offsets = [0, 0], sizes = [16, 32], strides = [1, 1]} : vector<16x64xf32> to vector<16x32xf32>
    %29 = vector.broadcast %7 : vector<1x32xf32> to vector<16x32xf32>
    %30 = arith.addf %28, %29 : vector<16x32xf32>
    %31 = vector.extract_strided_slice %27 {offsets = [0, 32], sizes = [16, 32], strides = [1, 1]} : vector<16x64xf32> to vector<16x32xf32>
    %32 = vector.broadcast %8 : vector<1x32xf32> to vector<16x32xf32>
    %33 = arith.addf %31, %32 : vector<16x32xf32>
    %34 = arith.truncf %3 : vector<16x32xf32> to vector<16x32xbf16>
    %c0_10 = arith.constant 0 : index
    %c0_11 = arith.constant 0 : index
    %c0_12 = arith.constant 0 : index
    %c0_13 = arith.constant 0 : index
    %35 = vector.load %arg6[%c0_10, %c0_11, %c0_12, %c0_13] : memref<1x6x32x32xbf16, #tpu.memory_space<vmem>>, vector<1x1x32x32xbf16>
    %36 = vector.shape_cast %35 : vector<1x1x32x32xbf16> to vector<32x32xbf16>
    %cst_14 = arith.constant dense<0.000000e+00> : vector<16x32xf32>
    %37 = tpu.matmul %34, %36, %cst_14 {dimension_numbers = #tpu.dot_dimension_numbers<[1], [0], [0], [1], [0, 0, 1, 1], [], []>} : vector<16x32xbf16>, vector<32x32xbf16>, vector<16x32xf32> -> vector<16x32xf32>
    %38 = vector.broadcast %9 : vector<1x32xf32> to vector<16x32xf32>
    %39 = arith.addf %37, %38 : vector<16x32xf32>
    %40 = vector.extract_strided_slice %30 {offsets = [0, 0], sizes = [8, 32], strides = [1, 1]} : vector<16x32xf32> to vector<8x32xf32>
    %cst_15 = arith.constant 0.353553385 : f32
    %41 = vector.broadcast %cst_15 : f32 to vector<8x32xf32>
    %42 = arith.mulf %40, %41 : vector<8x32xf32>
    %43 = tpu.transpose %42, [1, 0] : vector<8x32xf32> -> vector<32x8xf32>
    %44 = vector.shape_cast %43 : vector<32x8xf32> to vector<4x8x8xf32>
    %45 = tpu.transpose %44, [0, 2, 1] : vector<4x8x8xf32> -> vector<4x8x8xf32>
    %46 = arith.truncf %45 : vector<4x8x8xf32> to vector<4x8x8xbf16>
    %47 = vector.extract_strided_slice %33 {offsets = [0, 0], sizes = [8, 32], strides = [1, 1]} : vector<16x32xf32> to vector<8x32xf32>
    %48 = tpu.transpose %47, [1, 0] : vector<8x32xf32> -> vector<32x8xf32>
    %49 = vector.shape_cast %48 : vector<32x8xf32> to vector<4x8x8xf32>
    %50 = arith.truncf %49 : vector<4x8x8xf32> to vector<4x8x8xbf16>
    %51 = vector.extract_strided_slice %39 {offsets = [0, 0], sizes = [8, 32], strides = [1, 1]} : vector<16x32xf32> to vector<8x32xf32>
    %52 = tpu.transpose %51, [1, 0] : vector<8x32xf32> -> vector<32x8xf32>
    %53 = vector.shape_cast %52 : vector<32x8xf32> to vector<4x8x8xf32>
    %54 = tpu.transpose %53, [0, 2, 1] : vector<4x8x8xf32> -> vector<4x8x8xf32>
    %55 = arith.truncf %54 : vector<4x8x8xf32> to vector<4x8x8xbf16>
    "tpu.trace_start"() <{level = 10 : i32, message = "hqd,hdk->hqk"}> : () -> ()
    %cst_16 = arith.constant dense<0.000000e+00> : vector<4x8x8xf32>
    %56 = tpu.matmul %46, %50, %cst_16 {dimension_numbers = #tpu.dot_dimension_numbers<[2], [1], [1], [2], [0, 0, 0, 1, 1, 2], [0], [0]>} : vector<4x8x8xbf16>, vector<4x8x8xbf16>, vector<4x8x8xf32> -> vector<4x8x8xf32>
    "tpu.trace_stop"() : () -> ()
    %cst_17 = arith.constant dense<0xFF800000> : vector<4x8xf32>
    %57 = vector.multi_reduction <maximumf>, %56, %cst_17 [2] : vector<4x8x8xf32> to vector<4x8xf32>
    %58 = vector.shape_cast %57 : vector<4x8xf32> to vector<4x8x1xf32>
    %59 = vector.broadcast %58 : vector<4x8x1xf32> to vector<4x8x8xf32>
    %60 = arith.subf %56, %59 : vector<4x8x8xf32>
    %61 = math.exp %60 : vector<4x8x8xf32>
    %cst_18 = arith.constant dense<0.000000e+00> : vector<4x8xf32>
    %62 = vector.multi_reduction <add>, %61, %cst_18 [2] : vector<4x8x8xf32> to vector<4x8xf32>
    %63 = vector.shape_cast %62 : vector<4x8xf32> to vector<4x8x1xf32>
    %64 = tpu.reciprocal %63 {approx = true} : vector<4x8x1xf32> -> vector<4x8x1xf32>
    %65 = vector.broadcast %64 : vector<4x8x1xf32> to vector<4x8x8xf32>
    %66 = arith.mulf %61, %65 : vector<4x8x8xf32>
    %67 = arith.truncf %66 : vector<4x8x8xf32> to vector<4x8x8xbf16>
    "tpu.trace_start"() <{level = 10 : i32, message = "hqk,hkd->hqd"}> : () -> ()
    %cst_19 = arith.constant dense<0.000000e+00> : vector<4x8x8xf32>
    %68 = tpu.matmul %67, %55, %cst_19 {dimension_numbers = #tpu.dot_dimension_numbers<[2], [1], [1], [2], [0, 0, 0, 1, 1, 2], [0], [0]>} : vector<4x8x8xbf16>, vector<4x8x8xbf16>, vector<4x8x8xf32> -> vector<4x8x8xf32>
    "tpu.trace_stop"() : () -> ()
    %69 = tpu.transpose %68, [0, 2, 1] : vector<4x8x8xf32> -> vector<4x8x8xf32>
    %70 = vector.shape_cast %69 : vector<4x8x8xf32> to vector<32x8xf32>
    %71 = tpu.transpose %70, [1, 0] : vector<32x8xf32> -> vector<8x32xf32>
    %c0_20 = arith.constant 0 : index
    %c0_21 = arith.constant 0 : index
    %72 = vector.load %arg11[%c0_20, %c0_21] : memref<16x32xf32, #tpu.memory_space<vmem>>, vector<8x32xf32>
    tpu.vector_store %arg11[%c0_20, %c0_21], %71 {strides = array<i32>} : memref<16x32xf32, #tpu.memory_space<vmem>>, vector<8x32xf32>,
    %73 = vector.extract_strided_slice %30 {offsets = [8, 0], sizes = [8, 32], strides = [1, 1]} : vector<16x32xf32> to vector<8x32xf32>
    %cst_22 = arith.constant 0.353553385 : f32
    %74 = vector.broadcast %cst_22 : f32 to vector<8x32xf32>
    %75 = arith.mulf %73, %74 : vector<8x32xf32>
    %76 = tpu.transpose %75, [1, 0] : vector<8x32xf32> -> vector<32x8xf32>
    %77 = vector.shape_cast %76 : vector<32x8xf32> to vector<4x8x8xf32>
    %78 = tpu.transpose %77, [0, 2, 1] : vector<4x8x8xf32> -> vector<4x8x8xf32>
    %79 = arith.truncf %78 : vector<4x8x8xf32> to vector<4x8x8xbf16>
    %80 = vector.extract_strided_slice %33 {offsets = [8, 0], sizes = [8, 32], strides = [1, 1]} : vector<16x32xf32> to vector<8x32xf32>
    %81 = tpu.transpose %80, [1, 0] : vector<8x32xf32> -> vector<32x8xf32>
    %82 = vector.shape_cast %81 : vector<32x8xf32> to vector<4x8x8xf32>
    %83 = arith.truncf %82 : vector<4x8x8xf32> to vector<4x8x8xbf16>
    %84 = vector.extract_strided_slice %39 {offsets = [8, 0], sizes = [8, 32], strides = [1, 1]} : vector<16x32xf32> to vector<8x32xf32>
    %85 = tpu.transpose %84, [1, 0] : vector<8x32xf32> -> vector<32x8xf32>
    %86 = vector.shape_cast %85 : vector<32x8xf32> to vector<4x8x8xf32>
    %87 = tpu.transpose %86, [0, 2, 1] : vector<4x8x8xf32> -> vector<4x8x8xf32>
    %88 = arith.truncf %87 : vector<4x8x8xf32> to vector<4x8x8xbf16>
    "tpu.trace_start"() <{level = 10 : i32, message = "hqd,hdk->hqk"}> : () -> ()
    %cst_23 = arith.constant dense<0.000000e+00> : vector<4x8x8xf32>
    %89 = tpu.matmul %79, %83, %cst_23 {dimension_numbers = #tpu.dot_dimension_numbers<[2], [1], [1], [2], [0, 0, 0, 1, 1, 2], [0], [0]>} : vector<4x8x8xbf16>, vector<4x8x8xbf16>, vector<4x8x8xf32> -> vector<4x8x8xf32>
    "tpu.trace_stop"() : () -> ()
    %cst_24 = arith.constant dense<0xFF800000> : vector<4x8xf32>
    %90 = vector.multi_reduction <maximumf>, %89, %cst_24 [2] : vector<4x8x8xf32> to vector<4x8xf32>
    %91 = vector.shape_cast %90 : vector<4x8xf32> to vector<4x8x1xf32>
    %92 = vector.broadcast %91 : vector<4x8x1xf32> to vector<4x8x8xf32>
    %93 = arith.subf %89, %92 : vector<4x8x8xf32>
    %94 = math.exp %93 : vector<4x8x8xf32>
    %cst_25 = arith.constant dense<0.000000e+00> : vector<4x8xf32>
    %95 = vector.multi_reduction <add>, %94, %cst_25 [2] : vector<4x8x8xf32> to vector<4x8xf32>
    %96 = vector.shape_cast %95 : vector<4x8xf32> to vector<4x8x1xf32>
    %97 = tpu.reciprocal %96 {approx = true} : vector<4x8x1xf32> -> vector<4x8x1xf32>
    %98 = vector.broadcast %97 : vector<4x8x1xf32> to vector<4x8x8xf32>
    %99 = arith.mulf %94, %98 : vector<4x8x8xf32>
    %100 = arith.truncf %99 : vector<4x8x8xf32> to vector<4x8x8xbf16>
    "tpu.trace_start"() <{level = 10 : i32, message = "hqk,hkd->hqd"}> : () -> ()
    %cst_26 = arith.constant dense<0.000000e+00> : vector<4x8x8xf32>
    %101 = tpu.matmul %100, %88, %cst_26 {dimension_numbers = #tpu.dot_dimension_numbers<[2], [1], [1], [2], [0, 0, 0, 1, 1, 2], [0], [0]>} : vector<4x8x8xbf16>, vector<4x8x8xbf16>, vector<4x8x8xf32> -> vector<4x8x8xf32>
    "tpu.trace_stop"() : () -> ()
    %102 = tpu.transpose %101, [0, 2, 1] : vector<4x8x8xf32> -> vector<4x8x8xf32>
    %103 = vector.shape_cast %102 : vector<4x8x8xf32> to vector<32x8xf32>
    %104 = tpu.transpose %103, [1, 0] : vector<32x8xf32> -> vector<8x32xf32>
    %c8 = arith.constant 8 : index
    %c0_27 = arith.constant 0 : index
    %105 = vector.load %arg11[%c8, %c0_27] : memref<16x32xf32, #tpu.memory_space<vmem>>, vector<8x32xf32>
    tpu.vector_store %arg11[%c8, %c0_27], %104 {strides = array<i32>} : memref<16x32xf32, #tpu.memory_space<vmem>>, vector<8x32xf32>,
    %c0_28 = arith.constant 0 : index
    %c0_29 = arith.constant 0 : index
    %106 = vector.load %arg11[%c0_28, %c0_29] : memref<16x32xf32, #tpu.memory_space<vmem>>, vector<16x32xf32>
    %107 = arith.truncf %106 : vector<16x32xf32> to vector<16x32xbf16>
    %c0_30 = arith.constant 0 : index
    %c1 = arith.constant 1 : index
    %c0_31 = arith.constant 0 : index
    %c0_32 = arith.constant 0 : index
    %108 = vector.load %arg6[%c0_30, %c1, %c0_31, %c0_32] : memref<1x6x32x32xbf16, #tpu.memory_space<vmem>>, vector<1x1x32x32xbf16>
    %109 = vector.shape_cast %108 : vector<1x1x32x32xbf16> to vector<32x32xbf16>
    %cst_33 = arith.constant dense<0.000000e+00> : vector<16x32xf32>
    %110 = tpu.matmul %107, %109, %cst_33 {dimension_numbers = #tpu.dot_dimension_numbers<[1], [0], [0], [1], [0, 0, 1, 1], [], []>} : vector<16x32xbf16>, vector<32x32xbf16>, vector<16x32xf32> -> vector<16x32xf32>
    %111 = vector.broadcast %10 : vector<1x32xf32> to vector<16x32xf32>
    %112 = arith.addf %110, %111 : vector<16x32xf32>
    %113 = arith.addf %3, %112 : vector<16x32xf32>
    %cst_34 = arith.constant dense<0.000000e+00> : vector<16xf32>
    %114 = vector.multi_reduction <add>, %113, %cst_34 [1] : vector<16x32xf32> to vector<16xf32>
    %115 = vector.shape_cast %114 : vector<16xf32> to vector<16x1xf32>
    %cst_35 = arith.constant 3.200000e+01 : f32
    %116 = vector.broadcast %cst_35 : f32 to vector<16x1xf32>
    %117 = arith.divf %115, %116 : vector<16x1xf32>
    %118 = vector.broadcast %117 : vector<16x1xf32> to vector<16x32xf32>
    %119 = arith.subf %113, %118 : vector<16x32xf32>
    %120 = arith.mulf %119, %119 : vector<16x32xf32>
    %cst_36 = arith.constant dense<0.000000e+00> : vector<16xf32>
    %121 = vector.multi_reduction <add>, %120, %cst_36 [1] : vector<16x32xf32> to vector<16xf32>
    %122 = vector.shape_cast %121 : vector<16xf32> to vector<16x1xf32>
    %cst_37 = arith.constant 3.200000e+01 : f32
    %123 = vector.broadcast %cst_37 : f32 to vector<16x1xf32>
    %124 = arith.divf %122, %123 : vector<16x1xf32>
    %125 = vector.broadcast %117 : vector<16x1xf32> to vector<16x32xf32>
    %126 = arith.subf %113, %125 : vector<16x32xf32>
    %cst_38 = arith.constant 9.99999974E-6 : f32
    %127 = vector.broadcast %cst_38 : f32 to vector<16x1xf32>
    %128 = arith.addf %124, %127 : vector<16x1xf32>
    %129 = math.rsqrt %128 : vector<16x1xf32>
    %130 = vector.broadcast %129 : vector<16x1xf32> to vector<16x32xf32>
    %131 = arith.mulf %126, %130 : vector<16x32xf32>
    %132 = vector.broadcast %17 : vector<1x32xf32> to vector<16x32xf32>
    %133 = arith.mulf %131, %132 : vector<16x32xf32>
    %134 = vector.broadcast %18 : vector<1x32xf32> to vector<16x32xf32>
    %135 = arith.addf %133, %134 : vector<16x32xf32>
    %136 = arith.addf %135, %4 : vector<16x32xf32>
    %137 = arith.truncf %136 : vector<16x32xf32> to vector<16x32xbf16>
    %c0_39 = arith.constant 0 : index
    %c2 = arith.constant 2 : index
    %c0_40 = arith.constant 0 : index
    %c0_41 = arith.constant 0 : index
    %138 = vector.load %arg6[%c0_39, %c2, %c0_40, %c0_41] : memref<1x6x32x32xbf16, #tpu.memory_space<vmem>>, vector<1x1x32x32xbf16>
    %139 = vector.shape_cast %138 : vector<1x1x32x32xbf16> to vector<32x32xbf16>
    %cst_42 = arith.constant dense<0.000000e+00> : vector<16x32xf32>
    %140 = tpu.matmul %137, %139, %cst_42 {dimension_numbers = #tpu.dot_dimension_numbers<[1], [0], [0], [1], [0, 0, 1, 1], [], []>} : vector<16x32xbf16>, vector<32x32xbf16>, vector<16x32xf32> -> vector<16x32xf32>
    %141 = vector.broadcast %11 : vector<1x32xf32> to vector<16x32xf32>
    %142 = arith.addf %140, %141 : vector<16x32xf32>
    %c0_43 = arith.constant 0 : index
    %c0_44 = arith.constant 0 : index
    %143 = vector.load %arg3[%c0_43, %c0_44] : memref<32x32xbf16, #tpu.memory_space<vmem>>, vector<32x32xbf16>
    %c0_45 = arith.constant 0 : index
    %c3 = arith.constant 3 : index
    %c0_46 = arith.constant 0 : index
    %c0_47 = arith.constant 0 : index
    %144 = vector.load %arg6[%c0_45, %c3, %c0_46, %c0_47] : memref<1x6x32x32xbf16, #tpu.memory_space<vmem>>, vector<1x1x32x32xbf16>
    %145 = vector.shape_cast %144 : vector<1x1x32x32xbf16> to vector<32x32xbf16>
    %cst_48 = arith.constant dense<0.000000e+00> : vector<32x32xf32>
    %146 = tpu.matmul %143, %145, %cst_48 {dimension_numbers = #tpu.dot_dimension_numbers<[1], [0], [0], [1], [0, 0, 1, 1], [], []>} : vector<32x32xbf16>, vector<32x32xbf16>, vector<32x32xf32> -> vector<32x32xf32>
    %147 = vector.broadcast %12 : vector<1x32xf32> to vector<32x32xf32>
    %148 = arith.addf %146, %147 : vector<32x32xf32>
    %c0_49 = arith.constant 0 : index
    %c0_50 = arith.constant 0 : index
    %149 = vector.load %arg4[%c0_49, %c0_50] : memref<32x32xbf16, #tpu.memory_space<vmem>>, vector<32x32xbf16>
    %c0_51 = arith.constant 0 : index
    %c4 = arith.constant 4 : index
    %c0_52 = arith.constant 0 : index
    %c0_53 = arith.constant 0 : index
    %150 = vector.load %arg6[%c0_51, %c4, %c0_52, %c0_53] : memref<1x6x32x32xbf16, #tpu.memory_space<vmem>>, vector<1x1x32x32xbf16>
    %151 = vector.shape_cast %150 : vector<1x1x32x32xbf16> to vector<32x32xbf16>
    %cst_54 = arith.constant dense<0.000000e+00> : vector<32x32xf32>
    %152 = tpu.matmul %149, %151, %cst_54 {dimension_numbers = #tpu.dot_dimension_numbers<[1], [0], [0], [1], [0, 0, 1, 1], [], []>} : vector<32x32xbf16>, vector<32x32xbf16>, vector<32x32xf32> -> vector<32x32xf32>
    %153 = vector.broadcast %13 : vector<1x32xf32> to vector<32x32xf32>
    %154 = arith.addf %152, %153 : vector<32x32xf32>
    %155 = vector.extract_strided_slice %142 {offsets = [0, 0], sizes = [8, 32], strides = [1, 1]} : vector<16x32xf32> to vector<8x32xf32>
    %cst_55 = arith.constant 0.353553385 : f32
    %156 = vector.broadcast %cst_55 : f32 to vector<8x32xf32>
    %157 = arith.mulf %155, %156 : vector<8x32xf32>
    %158 = tpu.transpose %157, [1, 0] : vector<8x32xf32> -> vector<32x8xf32>
    %159 = vector.shape_cast %158 : vector<32x8xf32> to vector<4x8x8xf32>
    %160 = tpu.transpose %159, [0, 2, 1] : vector<4x8x8xf32> -> vector<4x8x8xf32>
    %161 = arith.truncf %160 : vector<4x8x8xf32> to vector<4x8x8xbf16>
    %162 = vector.extract_strided_slice %148 {offsets = [0, 0], sizes = [16, 32], strides = [1, 1]} : vector<32x32xf32> to vector<16x32xf32>
    %163 = tpu.transpose %162, [1, 0] : vector<16x32xf32> -> vector<32x16xf32>
    %164 = vector.shape_cast %163 : vector<32x16xf32> to vector<4x8x16xf32>
    %165 = arith.truncf %164 : vector<4x8x16xf32> to vector<4x8x16xbf16>
    %166 = vector.extract_strided_slice %154 {offsets = [0, 0], sizes = [16, 32], strides = [1, 1]} : vector<32x32xf32> to vector<16x32xf32>
    %167 = tpu.transpose %166, [1, 0] : vector<16x32xf32> -> vector<32x16xf32>
    %168 = vector.shape_cast %167 : vector<32x16xf32> to vector<4x8x16xf32>
    %169 = tpu.transpose %168, [0, 2, 1] : vector<4x8x16xf32> -> vector<4x16x8xf32>
    %170 = arith.truncf %169 : vector<4x16x8xf32> to vector<4x16x8xbf16>
    "tpu.trace_start"() <{level = 10 : i32, message = "hqd,hdk->hqk"}> : () -> ()
    %cst_56 = arith.constant dense<0.000000e+00> : vector<4x8x16xf32>
    %171 = tpu.matmul %161, %165, %cst_56 {dimension_numbers = #tpu.dot_dimension_numbers<[2], [1], [1], [2], [0, 0, 0, 1, 1, 2], [0], [0]>} : vector<4x8x8xbf16>, vector<4x8x16xbf16>, vector<4x8x16xf32> -> vector<4x8x16xf32>
    "tpu.trace_stop"() : () -> ()
    %cst_57 = arith.constant dense<0xFF800000> : vector<4x8xf32>
    %172 = vector.multi_reduction <maximumf>, %171, %cst_57 [2] : vector<4x8x16xf32> to vector<4x8xf32>
    %173 = vector.shape_cast %172 : vector<4x8xf32> to vector<4x8x1xf32>
    %174 = vector.broadcast %173 : vector<4x8x1xf32> to vector<4x8x16xf32>
    %175 = arith.subf %171, %174 : vector<4x8x16xf32>
    %176 = math.exp %175 : vector<4x8x16xf32>
    %cst_58 = arith.constant dense<0.000000e+00> : vector<4x8xf32>
    %177 = vector.multi_reduction <add>, %176, %cst_58 [2] : vector<4x8x16xf32> to vector<4x8xf32>
    %178 = vector.shape_cast %177 : vector<4x8xf32> to vector<4x8x1xf32>
    %179 = tpu.reciprocal %178 {approx = true} : vector<4x8x1xf32> -> vector<4x8x1xf32>
    %180 = vector.broadcast %179 : vector<4x8x1xf32> to vector<4x8x16xf32>
    %181 = arith.mulf %176, %180 : vector<4x8x16xf32>
    %182 = arith.truncf %181 : vector<4x8x16xf32> to vector<4x8x16xbf16>
    "tpu.trace_start"() <{level = 10 : i32, message = "hqk,hkd->hqd"}> : () -> ()
    %cst_59 = arith.constant dense<0.000000e+00> : vector<4x8x8xf32>
    %183 = tpu.matmul %182, %170, %cst_59 {dimension_numbers = #tpu.dot_dimension_numbers<[2], [1], [1], [2], [0, 0, 0, 1, 1, 2], [0], [0]>} : vector<4x8x16xbf16>, vector<4x16x8xbf16>, vector<4x8x8xf32> -> vector<4x8x8xf32>
    "tpu.trace_stop"() : () -> ()
    %184 = tpu.transpose %183, [0, 2, 1] : vector<4x8x8xf32> -> vector<4x8x8xf32>
    %185 = vector.shape_cast %184 : vector<4x8x8xf32> to vector<32x8xf32>
    %186 = tpu.transpose %185, [1, 0] : vector<32x8xf32> -> vector<8x32xf32>
    %c0_60 = arith.constant 0 : index
    %c0_61 = arith.constant 0 : index
    %187 = vector.load %arg11[%c0_60, %c0_61] : memref<16x32xf32, #tpu.memory_space<vmem>>, vector<8x32xf32>
    tpu.vector_store %arg11[%c0_60, %c0_61], %186 {strides = array<i32>} : memref<16x32xf32, #tpu.memory_space<vmem>>, vector<8x32xf32>,
    %188 = vector.extract_strided_slice %142 {offsets = [8, 0], sizes = [8, 32], strides = [1, 1]} : vector<16x32xf32> to vector<8x32xf32>
    %cst_62 = arith.constant 0.353553385 : f32
    %189 = vector.broadcast %cst_62 : f32 to vector<8x32xf32>
    %190 = arith.mulf %188, %189 : vector<8x32xf32>
    %191 = tpu.transpose %190, [1, 0] : vector<8x32xf32> -> vector<32x8xf32>
    %192 = vector.shape_cast %191 : vector<32x8xf32> to vector<4x8x8xf32>
    %193 = tpu.transpose %192, [0, 2, 1] : vector<4x8x8xf32> -> vector<4x8x8xf32>
    %194 = arith.truncf %193 : vector<4x8x8xf32> to vector<4x8x8xbf16>
    %195 = vector.extract_strided_slice %148 {offsets = [16, 0], sizes = [16, 32], strides = [1, 1]} : vector<32x32xf32> to vector<16x32xf32>
    %196 = tpu.transpose %195, [1, 0] : vector<16x32xf32> -> vector<32x16xf32>
    %197 = vector.shape_cast %196 : vector<32x16xf32> to vector<4x8x16xf32>
    %198 = arith.truncf %197 : vector<4x8x16xf32> to vector<4x8x16xbf16>
    %199 = vector.extract_strided_slice %154 {offsets = [16, 0], sizes = [16, 32], strides = [1, 1]} : vector<32x32xf32> to vector<16x32xf32>
    %200 = tpu.transpose %199, [1, 0] : vector<16x32xf32> -> vector<32x16xf32>
    %201 = vector.shape_cast %200 : vector<32x16xf32> to vector<4x8x16xf32>
    %202 = tpu.transpose %201, [0, 2, 1] : vector<4x8x16xf32> -> vector<4x16x8xf32>
    %203 = arith.truncf %202 : vector<4x16x8xf32> to vector<4x16x8xbf16>
    "tpu.trace_start"() <{level = 10 : i32, message = "hqd,hdk->hqk"}> : () -> ()
    %cst_63 = arith.constant dense<0.000000e+00> : vector<4x8x16xf32>
    %204 = tpu.matmul %194, %198, %cst_63 {dimension_numbers = #tpu.dot_dimension_numbers<[2], [1], [1], [2], [0, 0, 0, 1, 1, 2], [0], [0]>} : vector<4x8x8xbf16>, vector<4x8x16xbf16>, vector<4x8x16xf32> -> vector<4x8x16xf32>
    "tpu.trace_stop"() : () -> ()
    %cst_64 = arith.constant dense<0xFF800000> : vector<4x8xf32>
    %205 = vector.multi_reduction <maximumf>, %204, %cst_64 [2] : vector<4x8x16xf32> to vector<4x8xf32>
    %206 = vector.shape_cast %205 : vector<4x8xf32> to vector<4x8x1xf32>
    %207 = vector.broadcast %206 : vector<4x8x1xf32> to vector<4x8x16xf32>
    %208 = arith.subf %204, %207 : vector<4x8x16xf32>
    %209 = math.exp %208 : vector<4x8x16xf32>
    %cst_65 = arith.constant dense<0.000000e+00> : vector<4x8xf32>
    %210 = vector.multi_reduction <add>, %209, %cst_65 [2] : vector<4x8x16xf32> to vector<4x8xf32>
    %211 = vector.shape_cast %210 : vector<4x8xf32> to vector<4x8x1xf32>
    %212 = tpu.reciprocal %211 {approx = true} : vector<4x8x1xf32> -> vector<4x8x1xf32>
    %213 = vector.broadcast %212 : vector<4x8x1xf32> to vector<4x8x16xf32>
    %214 = arith.mulf %209, %213 : vector<4x8x16xf32>
    %215 = arith.truncf %214 : vector<4x8x16xf32> to vector<4x8x16xbf16>
    "tpu.trace_start"() <{level = 10 : i32, message = "hqk,hkd->hqd"}> : () -> ()
    %cst_66 = arith.constant dense<0.000000e+00> : vector<4x8x8xf32>
    %216 = tpu.matmul %215, %203, %cst_66 {dimension_numbers = #tpu.dot_dimension_numbers<[2], [1], [1], [2], [0, 0, 0, 1, 1, 2], [0], [0]>} : vector<4x8x16xbf16>, vector<4x16x8xbf16>, vector<4x8x8xf32> -> vector<4x8x8xf32>
    "tpu.trace_stop"() : () -> ()
    %217 = tpu.transpose %216, [0, 2, 1] : vector<4x8x8xf32> -> vector<4x8x8xf32>
    %218 = vector.shape_cast %217 : vector<4x8x8xf32> to vector<32x8xf32>
    %219 = tpu.transpose %218, [1, 0] : vector<32x8xf32> -> vector<8x32xf32>
    %c8_67 = arith.constant 8 : index
    %c0_68 = arith.constant 0 : index
    %220 = vector.load %arg11[%c8_67, %c0_68] : memref<16x32xf32, #tpu.memory_space<vmem>>, vector<8x32xf32>
    tpu.vector_store %arg11[%c8_67, %c0_68], %219 {strides = array<i32>} : memref<16x32xf32, #tpu.memory_space<vmem>>, vector<8x32xf32>,
    %c0_69 = arith.constant 0 : index
    %c0_70 = arith.constant 0 : index
    %221 = vector.load %arg11[%c0_69, %c0_70] : memref<16x32xf32, #tpu.memory_space<vmem>>, vector<16x32xf32>
    %222 = arith.truncf %221 : vector<16x32xf32> to vector<16x32xbf16>
    %c0_71 = arith.constant 0 : index
    %c5 = arith.constant 5 : index
    %c0_72 = arith.constant 0 : index
    %c0_73 = arith.constant 0 : index
    %223 = vector.load %arg6[%c0_71, %c5, %c0_72, %c0_73] : memref<1x6x32x32xbf16, #tpu.memory_space<vmem>>, vector<1x1x32x32xbf16>
    %224 = vector.shape_cast %223 : vector<1x1x32x32xbf16> to vector<32x32xbf16>
    %cst_74 = arith.constant dense<0.000000e+00> : vector<16x32xf32>
    %225 = tpu.matmul %222, %224, %cst_74 {dimension_numbers = #tpu.dot_dimension_numbers<[1], [0], [0], [1], [0, 0, 1, 1], [], []>} : vector<16x32xbf16>, vector<32x32xbf16>, vector<16x32xf32> -> vector<16x32xf32>
    %226 = vector.broadcast %14 : vector<1x32xf32> to vector<16x32xf32>
    %227 = arith.addf %225, %226 : vector<16x32xf32>
    %228 = arith.addf %135, %227 : vector<16x32xf32>
    %cst_75 = arith.constant dense<0.000000e+00> : vector<16xf32>
    %229 = vector.multi_reduction <add>, %228, %cst_75 [1] : vector<16x32xf32> to vector<16xf32>
    %230 = vector.shape_cast %229 : vector<16xf32> to vector<16x1xf32>
    %cst_76 = arith.constant 3.200000e+01 : f32
    %231 = vector.broadcast %cst_76 : f32 to vector<16x1xf32>
    %232 = arith.divf %230, %231 : vector<16x1xf32>
    %233 = vector.broadcast %232 : vector<16x1xf32> to vector<16x32xf32>
    %234 = arith.subf %228, %233 : vector<16x32xf32>
    %235 = arith.mulf %234, %234 : vector<16x32xf32>
    %cst_77 = arith.constant dense<0.000000e+00> : vector<16xf32>
    %236 = vector.multi_reduction <add>, %235, %cst_77 [1] : vector<16x32xf32> to vector<16xf32>
    %237 = vector.shape_cast %236 : vector<16xf32> to vector<16x1xf32>
    %cst_78 = arith.constant 3.200000e+01 : f32
    %238 = vector.broadcast %cst_78 : f32 to vector<16x1xf32>
    %239 = arith.divf %237, %238 : vector<16x1xf32>
    %240 = vector.broadcast %232 : vector<16x1xf32> to vector<16x32xf32>
    %241 = arith.subf %228, %240 : vector<16x32xf32>
    %cst_79 = arith.constant 9.99999974E-6 : f32
    %242 = vector.broadcast %cst_79 : f32 to vector<16x1xf32>
    %243 = arith.addf %239, %242 : vector<16x1xf32>
    %244 = math.rsqrt %243 : vector<16x1xf32>
    %245 = vector.broadcast %244 : vector<16x1xf32> to vector<16x32xf32>
    %246 = arith.mulf %241, %245 : vector<16x32xf32>
    %247 = vector.broadcast %19 : vector<1x32xf32> to vector<16x32xf32>
    %248 = arith.mulf %246, %247 : vector<16x32xf32>
    %249 = vector.broadcast %20 : vector<1x32xf32> to vector<16x32xf32>
    %250 = arith.addf %248, %249 : vector<16x32xf32>
    %251 = arith.truncf %250 : vector<16x32xf32> to vector<16x32xbf16>
    %c0_80 = arith.constant 0 : index
    %c0_81 = arith.constant 0 : index
    %c0_82 = arith.constant 0 : index
    %252 = vector.load %arg7[%c0_80, %c0_81, %c0_82] : memref<1x32x64xbf16, #tpu.memory_space<vmem>>, vector<1x32x64xbf16>
    %253 = vector.shape_cast %252 : vector<1x32x64xbf16> to vector<32x64xbf16>
    %cst_83 = arith.constant dense<0.000000e+00> : vector<16x64xf32>
    %254 = tpu.matmul %251, %253, %cst_83 {dimension_numbers = #tpu.dot_dimension_numbers<[1], [0], [0], [1], [0, 0, 1, 1], [], []>} : vector<16x32xbf16>, vector<32x64xbf16>, vector<16x64xf32> -> vector<16x64xf32>
    %255 = vector.broadcast %15 : vector<1x64xf32> to vector<16x64xf32>
    %256 = arith.addf %254, %255 : vector<16x64xf32>
    %cst_84 = arith.constant 0.000000e+00 : f32
    %257 = vector.broadcast %cst_84 : f32 to vector<16x64xf32>
    %258 = arith.maximumf %256, %257 : vector<16x64xf32>
    %259 = arith.truncf %258 : vector<16x64xf32> to vector<16x64xbf16>
    %c0_85 = arith.constant 0 : index
    %c0_86 = arith.constant 0 : index
    %c0_87 = arith.constant 0 : index
    %260 = vector.load %arg8[%c0_85, %c0_86, %c0_87] : memref<1x64x32xbf16, #tpu.memory_space<vmem>>, vector<1x64x32xbf16>
    %261 = vector.shape_cast %260 : vector<1x64x32xbf16> to vector<64x32xbf16>
    %cst_88 = arith.constant dense<0.000000e+00> : vector<16x32xf32>
    %262 = tpu.matmul %259, %261, %cst_88 {dimension_numbers = #tpu.dot_dimension_numbers<[1], [0], [0], [1], [0, 0, 1, 1], [], []>} : vector<16x64xbf16>, vector<64x32xbf16>, vector<16x32xf32> -> vector<16x32xf32>
    %263 = vector.broadcast %16 : vector<1x32xf32> to vector<16x32xf32>
    %264 = arith.addf %262, %263 : vector<16x32xf32>
    %265 = arith.addf %250, %264 : vector<16x32xf32>
    %cst_89 = arith.constant dense<0.000000e+00> : vector<16xf32>
    %266 = vector.multi_reduction <add>, %265, %cst_89 [1] : vector<16x32xf32> to vector<16xf32>
    %267 = vector.shape_cast %266 : vector<16xf32> to vector<16x1xf32>
    %cst_90 = arith.constant 3.200000e+01 : f32
    %268 = vector.broadcast %cst_90 : f32 to vector<16x1xf32>
    %269 = arith.divf %267, %268 : vector<16x1xf32>
    %270 = vector.broadcast %269 : vector<16x1xf32> to vector<16x32xf32>
    %271 = arith.subf %265, %270 : vector<16x32xf32>
    %272 = arith.mulf %271, %271 : vector<16x32xf32>
    %cst_91 = arith.constant dense<0.000000e+00> : vector<16xf32>
    %273 = vector.multi_reduction <add>, %272, %cst_91 [1] : vector<16x32xf32> to vector<16xf32>
    %274 = vector.shape_cast %273 : vector<16xf32> to vector<16x1xf32>
    %cst_92 = arith.constant 3.200000e+01 : f32
    %275 = vector.broadcast %cst_92 : f32 to vector<16x1xf32>
    %276 = arith.divf %274, %275 : vector<16x1xf32>
    %277 = vector.broadcast %269 : vector<16x1xf32> to vector<16x32xf32>
    %278 = arith.subf %265, %277 : vector<16x32xf32>
    %cst_93 = arith.constant 9.99999974E-6 : f32
    %279 = vector.broadcast %cst_93 : f32 to vector<16x1xf32>
    %280 = arith.addf %276, %279 : vector<16x1xf32>
    %281 = math.rsqrt %280 : vector<16x1xf32>
    %282 = vector.broadcast %281 : vector<16x1xf32> to vector<16x32xf32>
    %283 = arith.mulf %278, %282 : vector<16x32xf32>
    %284 = vector.broadcast %21 : vector<1x32xf32> to vector<16x32xf32>
    %285 = arith.mulf %283, %284 : vector<16x32xf32>
    %286 = vector.broadcast %22 : vector<1x32xf32> to vector<16x32xf32>
    %287 = arith.addf %285, %286 : vector<16x32xf32>
    %c0_94 = arith.constant 0 : index
    %c0_95 = arith.constant 0 : index
    %288 = vector.load %arg10[%c0_94, %c0_95] : memref<16x32xf32, #tpu.memory_space<vmem>>, vector<16x32xf32>
    tpu.vector_store %arg10[%c0_94, %c0_95], %287 {strides = array<i32>} : memref<16x32xf32, #tpu.memory_space<vmem>>, vector<16x32xf32>,
    return
  }
  func.func @transform_0(%arg0: i32) -> (i32, i32) {
    %c0_i32 = arith.constant 0 : i32
    %c0_i32_0 = arith.constant 0 : i32
    %c0_i32_1 = arith.constant 0 : i32
    return %c0_i32, %c0_i32_0 : i32, i32
  }
  func.func @transform_1(%arg0: i32) -> (i32, i32) {
    %c0_i32 = arith.constant 0 : i32
    %c0_i32_0 = arith.constant 0 : i32
    %c0_i32_1 = arith.constant 0 : i32
    return %c0_i32, %c0_i32_0 : i32, i32
  }
  func.func @transform_2(%arg0: i32) -> (i32, i32) {
    %c0_i32 = arith.constant 0 : i32
    %c0_i32_0 = arith.constant 0 : i32
    %c0_i32_1 = arith.constant 0 : i32
    return %c0_i32, %c0_i32_0 : i32, i32
  }
  func.func @transform_3(%arg0: i32) -> (i32, i32) {
    %c0_i32 = arith.constant 0 : i32
    %c0_i32_0 = arith.constant 0 : i32
    %c0_i32_1 = arith.constant 0 : i32
    return %c0_i32, %c0_i32_0 : i32, i32
  }
  func.func @transform_4(%arg0: i32) -> (i32, i32, i32) {
    %c0_i32 = arith.constant 0 : i32
    %c0_i32_0 = arith.constant 0 : i32
    %c0_i32_1 = arith.constant 0 : i32
    return %arg0, %c0_i32, %c0_i32_0 : i32, i32, i32
  }
  func.func @transform_5(%arg0: i32) -> (i32, i32, i32, i32) {
    %c0_i32 = arith.constant 0 : i32
    %c0_i32_0 = arith.constant 0 : i32
    %c0_i32_1 = arith.constant 0 : i32
    %c0_i32_2 = arith.constant 0 : i32
    return %arg0, %c0_i32, %c0_i32_0, %c0_i32_1 : i32, i32, i32, i32
  }
  func.func @transform_6(%arg0: i32) -> (i32, i32, i32) {
    %c0_i32 = arith.constant 0 : i32
    %c0_i32_0 = arith.constant 0 : i32
    %c0_i32_1 = arith.constant 0 : i32
    return %arg0, %c0_i32, %c0_i32_0 : i32, i32, i32
  }
  func.func @transform_7(%arg0: i32) -> (i32, i32, i32) {
    %c0_i32 = arith.constant 0 : i32
    %c0_i32_0 = arith.constant 0 : i32
    %c0_i32_1 = arith.constant 0 : i32
    return %arg0, %c0_i32, %c0_i32_0 : i32, i32, i32
  }
  func.func @transform_8(%arg0: i32) -> (i32, i32, i32) {
    %c0_i32 = arith.constant 0 : i32
    %c0_i32_0 = arith.constant 0 : i32
    %c0_i32_1 = arith.constant 0 : i32
    return %arg0, %c0_i32, %c0_i32_0 : i32, i32, i32
  }
  func.func @transform_9(%arg0: i32) -> (i32, i32) {
    %c0_i32 = arith.constant 0 : i32
    %c0_i32_0 = arith.constant 0 : i32
    %c0_i32_1 = arith.constant 0 : i32
    return %c0_i32, %c0_i32_0 : i32, i32
  }
}

</mosaic_0001>

<llo_original>
// kernel: tpu_custom_call.1
$region0: #{tpu_custom_call.1}
  #allocation0 [shape = 'u32[]', space=smem, size = 0x4, offset = 0x4, fixed_abs, tag = 'smem constant byte address 0x4 - core index']
  #allocation1 [shape = 'u32[144,128]{1,0:T(1,128)}', space=vmem, size = 0x12000, scoped, tag = 'internal scratch']
  #allocation2 [shape = 'f32[16,32]{1,0:T(8,128)}', space=vmem, size = 0x2000, scoped, tag = 'scratch operand']
  %s0 = inlined_call_operand.hbm [shape: f32[16,32], index: 0, kind: input, shape index: {}]
  %s1 = inlined_call_operand.hbm [shape: f32[16,32], index: 1, kind: input, shape index: {}]
  %s2 = inlined_call_operand.hbm [shape: bf16[32,32], index: 2, kind: input, shape index: {}]
  %s3 = inlined_call_operand.hbm [shape: bf16[32,32], index: 3, kind: input, shape index: {}]
  %s4 = inlined_call_operand.vmem [shape: bf16[2,32,64], index: 4, kind: input, shape index: {}]
  %s5 = inlined_call_operand.hbm [shape: bf16[2,6,32,32], index: 5, kind: input, shape index: {}]
  %s6 = inlined_call_operand.vmem [shape: bf16[2,32,64], index: 6, kind: input, shape index: {}]
  %s7 = inlined_call_operand.vmem [shape: bf16[2,64,32], index: 7, kind: input, shape index: {}]
  %s8 = inlined_call_operand.vmem [shape: f32[2,16,64], index: 8, kind: input, shape index: {}]
  %s9 = inlined_call_operand.hbm [shape: f32[16,32], index: 9, kind: output, shape index: {}]
  %s10 = sld [smem:[#allocation0]]
  $region93: #{tpu_custom_call.1} parent=0
    _
  %s12 = ssub.s32 1, %s10
  %s13 = scalar_select 0, %s12, %s10
  $region1: #{tpu_custom_call.1} parent=0
    #allocation3 [shape = 'u8[8192]{0}', space=vmem, size = 0x2000, scoped, tag = 'input window, operand 0, single buffered']
    #allocation4 [shape = 's32[2]{0}', space=sflag, size = 0x8, scoped, tag = 'scoped memory for tpu_custom_call.1']
    #allocation5 [shape = 's32[2]{0}', space=sflag, size = 0x8, scoped, tag = 'scoped memory for tpu_custom_call.1']
    #allocation6 [shape = 'u8[8192]{0}', space=vmem, size = 0x2000, scoped, tag = 'input window, operand 1, single buffered']
    #allocation7 [shape = 's32[1]{0}', space=sflag, size = 0x4, scoped, tag = 'scoped memory for tpu_custom_call.1']
    #allocation8 [shape = 'u8[8192]{0}', space=vmem, size = 0x2000, scoped, tag = 'input window, operand 2, single buffered']
    #allocation9 [shape = 'u8[8192]{0}', space=vmem, size = 0x2000, scoped, tag = 'input window, operand 3, single buffered']
    #allocation10 [shape = 's32[1]{0}', space=sflag, size = 0x4, scoped, tag = 'scoped memory for tpu_custom_call.1']
    #allocation11 [shape = 'u8[98304]{0}', space=vmem, size = 0x18000, scoped, tag = 'input window, operand 5']
    #allocation12 [shape = 'u8[8192]{0}', space=vmem, size = 0x2000, scoped, tag = 'output window, operand 0, single buffered']
    %14 = vsyncpa [#allocation4], 0
    %15 = vsyncpa [#allocation7], 0
    %16 = vsyncpa [#allocation10], 0
    %17 = vsyncpa [#allocation5], 0
    loop: start=0, step=1, limit=4
    $region2: #{tpu_custom_call.1} parent=1 // loop_pre_header
      _
    $region3: #{tpu_custom_call.1} parent=1 // loop_header
      %s19 = sphi 0, %s23
      %p20 = scmp.ge.s32.totalorder %s19, 4
      %s27 = sphi 0, %s27
      %s29 = sphi 0, %s27
      %s30 = sphi 0, %s29
      %s44 = sphi 0, %s30
      %s48 = sphi 0, %s48
      %s50 = sphi 0, %s48
      %s51 = sphi 0, %s50
      %s65 = sphi 0, %s51
      %s69 = sphi 0, %s69
      %s71 = sphi 0, %s69
      %s72 = sphi 0, %s71
      %s86 = sphi 0, %s72
      %s90 = sphi 0, %s90
      %s92 = sphi 0, %s90
      %s93 = sphi 0, %s92
      %s107 = sphi 0, %s93
      %s113 = sphi 0, %s115
      %s116 = sphi 0, %s113
      %s117 = sphi 0, %s116
      %s133 = sphi 0, %s117
      %s139 = sphi 0, %s141
      %s142 = sphi 0, %s139
      %s143 = sphi 0, %s142
      %s159 = sphi 0, %s143
      %s165 = sphi 0, %s167
      %s168 = sphi 0, %s165
      %s169 = sphi 0, %s168
      %s185 = sphi 0, %s169
      %s191 = sphi 0, %s193
      %s194 = sphi 0, %s191
      %s195 = sphi 0, %s194
      %s211 = sphi 0, %s195
      %s217 = sphi 0, %s219
      %s220 = sphi 0, %s217
      %s221 = sphi 0, %s220
      %s237 = sphi 0, %s221
      %s241 = sphi 0, %s241
      %s243 = sphi 0, %s241
      %s244 = sphi 0, %s243
      %s258 = sphi 0, %s244
    $region4: #{tpu_custom_call.1} parent=1 // loop_header_branch
      %22 = sbr.rel (%p20) target = $region8
    $region5: #{tpu_custom_call.1} parent=1 // loop_body
      %s24 = ssub.s32 %s19, 1
      %s25 = ssub.s32 %s19, 2
      %s26 = sadd.s32 %s19, 1
      %s28 = sadd.s32 %s27, 1
      %p31 = scmp.eq.s32.totalorder %s19, 1
      %p32 = scmp.ne.s32.totalorder %s27, %s29
      %p33 = scmp.eq.s32.totalorder %s19, 0
      %p34 = por %p32, %p33
      %p35 = scmp.ne.s32.totalorder %s27, %s29
      %p36 = scmp.eq.s32.totalorder %s24, 1
      %p37 = por %p35, %p36
      %p38 = scmp.ne.s32.totalorder %s29, %s30
      %p39 = scmp.eq.s32.totalorder %s24, 0
      %p40 = por %p38, %p39
      %p41 = scmp.ne.s32.totalorder %s29, %s30
      %p42 = scmp.eq.s32.totalorder %s25, 1
      %p43 = por %p41, %p42
      %p45 = scmp.ne.s32.totalorder %s30, %s44
      %p46 = scmp.eq.s32.totalorder %s25, 0
      %p47 = por %p45, %p46
      %s49 = sadd.s32 %s48, 1
      %p52 = scmp.eq.s32.totalorder %s19, 1
      %p53 = scmp.ne.s32.totalorder %s48, %s50
      %p54 = scmp.eq.s32.totalorder %s19, 0
      %p55 = por %p53, %p54
      %p56 = scmp.ne.s32.totalorder %s48, %s50
      %p57 = scmp.eq.s32.totalorder %s24, 1
      %p58 = por %p56, %p57
      %p59 = scmp.ne.s32.totalorder %s50, %s51
      %p60 = scmp.eq.s32.totalorder %s24, 0
      %p61 = por %p59, %p60
      %p62 = scmp.ne.s32.totalorder %s50, %s51
      %p63 = scmp.eq.s32.totalorder %s25, 1
      %p64 = por %p62, %p63
      %p66 = scmp.ne.s32.totalorder %s51, %s65
      %p67 = scmp.eq.s32.totalorder %s25, 0
      %p68 = por %p66, %p67
      %s70 = sadd.s32 %s69, 1
      %p73 = scmp.eq.s32.totalorder %s19, 1
      %p74 = scmp.ne.s32.totalorder %s69, %s71
      %p75 = scmp.eq.s32.totalorder %s19, 0
      %p76 = por %p74, %p75
      %p77 = scmp.ne.s32.totalorder %s69, %s71
      %p78 = scmp.eq.s32.totalorder %s24, 1
      %p79 = por %p77, %p78
      %p80 = scmp.ne.s32.totalorder %s71, %s72
      %p81 = scmp.eq.s32.totalorder %s24, 0
      %p82 = por %p80, %p81
      %p83 = scmp.ne.s32.totalorder %s71, %s72
      %p84 = scmp.eq.s32.totalorder %s25, 1
      %p85 = por %p83, %p84
      %p87 = scmp.ne.s32.totalorder %s72, %s86
      %p88 = scmp.eq.s32.totalorder %s25, 0
      %p89 = por %p87, %p88
      %s91 = sadd.s32 %s90, 1
      %p94 = scmp.eq.s32.totalorder %s19, 1
      %p95 = scmp.ne.s32.totalorder %s90, %s92
      %p96 = scmp.eq.s32.totalorder %s19, 0
      %p97 = por %p95, %p96
      %p98 = scmp.ne.s32.totalorder %s90, %s92
      %p99 = scmp.eq.s32.totalorder %s24, 1
      %p100 = por %p98, %p99
      %p101 = scmp.ne.s32.totalorder %s92, %s93
      %p102 = scmp.eq.s32.totalorder %s24, 0
      %p103 = por %p101, %p102
      %p104 = scmp.ne.s32.totalorder %s92, %s93
      %p105 = scmp.eq.s32.totalorder %s25, 1
      %p106 = por %p104, %p105
      %p108 = scmp.ne.s32.totalorder %s93, %s107
      %p109 = scmp.eq.s32.totalorder %s25, 0
      %p110 = por %p108, %p109
      %s111 = ssub.s32 %s19, %s26
      %p112 = scmp.eq.s32.totalorder %s111, 0
      %s114 = sadd.s32 %s113, 1
      %s115 = scalar_select %p112, %s113, %s114
      %p118 = pneg %p112
      %p119 = scmp.eq.s32.totalorder %s19, 1
      %p120 = por %p118, %p119
      %p121 = scmp.ne.s32.totalorder %s113, %s116
      %p122 = scmp.eq.s32.totalorder %s19, 0
      %p123 = por %p121, %p122
      %p124 = scmp.ne.s32.totalorder %s113, %s116
      %p125 = scmp.eq.s32.totalorder %s24, 1
      %p126 = por %p124, %p125
      %p127 = scmp.ne.s32.totalorder %s116, %s117
      %p128 = scmp.eq.s32.totalorder %s24, 0
      %p129 = por %p127, %p128
      %p130 = scmp.ne.s32.totalorder %s116, %s117
      %p131 = scmp.eq.s32.totalorder %s25, 1
      %p132 = por %p130, %p131
      %p134 = scmp.ne.s32.totalorder %s117, %s133
      %p135 = scmp.eq.s32.totalorder %s25, 0
      %p136 = por %p134, %p135
      %s137 = ssub.s32 %s19, %s26
      %p138 = scmp.eq.s32.totalorder %s137, 0
      %s140 = sadd.s32 %s139, 1
      %s141 = scalar_select %p138, %s139, %s140
      %p144 = pneg %p138
      %p145 = scmp.eq.s32.totalorder %s19, 1
      %p146 = por %p144, %p145
      %p147 = scmp.ne.s32.totalorder %s139, %s142
      %p148 = scmp.eq.s32.totalorder %s19, 0
      %p149 = por %p147, %p148
      %p150 = scmp.ne.s32.totalorder %s139, %s142
      %p151 = scmp.eq.s32.totalorder %s24, 1
      %p152 = por %p150, %p151
      %p153 = scmp.ne.s32.totalorder %s142, %s143
      %p154 = scmp.eq.s32.totalorder %s24, 0
      %p155 = por %p153, %p154
      %p156 = scmp.ne.s32.totalorder %s142, %s143
      %p157 = scmp.eq.s32.totalorder %s25, 1
      %p158 = por %p156, %p157
      %p160 = scmp.ne.s32.totalorder %s143, %s159
      %p161 = scmp.eq.s32.totalorder %s25, 0
      %p162 = por %p160, %p161
      %s163 = ssub.s32 %s19, %s26
      %p164 = scmp.eq.s32.totalorder %s163, 0
      %s166 = sadd.s32 %s165, 1
      %s167 = scalar_select %p164, %s165, %s166
      %p170 = pneg %p164
      %p171 = scmp.eq.s32.totalorder %s19, 1
      %p172 = por %p170, %p171
      %p173 = scmp.ne.s32.totalorder %s165, %s168
      %p174 = scmp.eq.s32.totalorder %s19, 0
      %p175 = por %p173, %p174
      %p176 = scmp.ne.s32.totalorder %s165, %s168
      %p177 = scmp.eq.s32.totalorder %s24, 1
      %p178 = por %p176, %p177
      %p179 = scmp.ne.s32.totalorder %s168, %s169
      %p180 = scmp.eq.s32.totalorder %s24, 0
      %p181 = por %p179, %p180
      %p182 = scmp.ne.s32.totalorder %s168, %s169
      %p183 = scmp.eq.s32.totalorder %s25, 1
      %p184 = por %p182, %p183
      %p186 = scmp.ne.s32.totalorder %s169, %s185
      %p187 = scmp.eq.s32.totalorder %s25, 0
      %p188 = por %p186, %p187
      %s189 = ssub.s32 %s19, %s26
      %p190 = scmp.eq.s32.totalorder %s189, 0
      %s192 = sadd.s32 %s191, 1
      %s193 = scalar_select %p190, %s191, %s192
      %p196 = pneg %p190
      %p197 = scmp.eq.s32.totalorder %s19, 1
      %p198 = por %p196, %p197
      %p199 = scmp.ne.s32.totalorder %s191, %s194
      %p200 = scmp.eq.s32.totalorder %s19, 0
      %p201 = por %p199, %p200
      %p202 = scmp.ne.s32.totalorder %s191, %s194
      %p203 = scmp.eq.s32.totalorder %s24, 1
      %p204 = por %p202, %p203
      %p205 = scmp.ne.s32.totalorder %s194, %s195
      %p206 = scmp.eq.s32.totalorder %s24, 0
      %p207 = por %p205, %p206
      %p208 = scmp.ne.s32.totalorder %s194, %s195
      %p209 = scmp.eq.s32.totalorder %s25, 1
      %p210 = por %p208, %p209
      %p212 = scmp.ne.s32.totalorder %s195, %s211
      %p213 = scmp.eq.s32.totalorder %s25, 0
      %p214 = por %p212, %p213
      %s215 = ssub.s32 %s19, %s26
      %p216 = scmp.eq.s32.totalorder %s215, 0
      %s218 = sadd.s32 %s217, 1
      %s219 = scalar_select %p216, %s217, %s218
      %p222 = pneg %p216
      %p223 = scmp.eq.s32.totalorder %s19, 1
      %p224 = por %p222, %p223
      %p225 = scmp.ne.s32.totalorder %s217, %s220
      %p226 = scmp.eq.s32.totalorder %s19, 0
      %p227 = por %p225, %p226
      %p228 = scmp.ne.s32.totalorder %s217, %s220
      %p229 = scmp.eq.s32.totalorder %s24, 1
      %p230 = por %p228, %p229
      %p231 = scmp.ne.s32.totalorder %s220, %s221
      %p232 = scmp.eq.s32.totalorder %s24, 0
      %p233 = por %p231, %p232
      %p234 = scmp.ne.s32.totalorder %s220, %s221
      %p235 = scmp.eq.s32.totalorder %s25, 1
      %p236 = por %p234, %p235
      %p238 = scmp.ne.s32.totalorder %s221, %s237
      %p239 = scmp.eq.s32.totalorder %s25, 0
      %p240 = por %p238, %p239
      %s242 = sadd.s32 %s241, 1
      %p245 = scmp.eq.s32.totalorder %s19, 1
      %p246 = scmp.ne.s32.totalorder %s241, %s243
      %p247 = scmp.eq.s32.totalorder %s19, 0
      %p248 = por %p246, %p247
      %p249 = scmp.ne.s32.totalorder %s241, %s243
      %p250 = scmp.eq.s32.totalorder %s24, 1
      %p251 = por %p249, %p250
      %p252 = scmp.ne.s32.totalorder %s243, %s244
      %p253 = scmp.eq.s32.totalorder %s24, 0
      %p254 = por %p252, %p253
      %p255 = scmp.ne.s32.totalorder %s243, %s244
      %p256 = scmp.eq.s32.totalorder %s25, 1
      %p257 = por %p255, %p256
      %p259 = scmp.ne.s32.totalorder %s244, %s258
      %p260 = scmp.eq.s32.totalorder %s25, 0
      %p261 = por %p259, %p260
      %p262 = scmp.le.s32.totalorder 1, %s19
      %p263 = scmp.lt.s32.totalorder %s19, 3
      %p264 = pnand %p262, %p263
      %p265 = pneg %p264
      // Predicated region
      $region9: #{tpu_custom_call.1} parent=5 // pred_check
        _
      $region10: #{tpu_custom_call.1} parent=5 // pred_check_branch
        %267 = sbr.rel (%p264) target = $region12
      $region11: #{tpu_custom_call.1} parent=5 // pred_region
        %s268 = ssub.s32 %s19, 1
        // Predicated region
        $region13: #{tpu_custom_call.1} parent=11 // pred_check
          %p269 = pneg %p40
        $region14: #{tpu_custom_call.1} parent=11 // pred_check_branch
          %271 = sbr.rel (%p269) target = $region16
        $region15: #{tpu_custom_call.1} parent=11 // pred_region
          %s273 = ssub.s32 256, 256
          %274 = vsyncadd [#allocation4], %s273
          %s275 = sshll.u32 [#allocation3], 4
          %s276 = int_to_ptr.vmem [resolvable:$true] %s275
          %281 = dma.hbm_to_vmem [thread:$0]  %s0, 256, %s276, [#allocation4], 128, 128, 8
        $region16: #{tpu_custom_call.1} parent=11 // pred_fallthru
          _
        // Predicated region
        $region17: #{tpu_custom_call.1} parent=11 // pred_check
          %p282 = pneg %p61
        $region18: #{tpu_custom_call.1} parent=11 // pred_check_branch
          %284 = sbr.rel (%p282) target = $region20
        $region19: #{tpu_custom_call.1} parent=11 // pred_region
          %s286 = ssub.s32 256, 256
          %287 = vsyncadd [#allocation7], %s286
          %s288 = sshll.u32 [#allocation6], 4
          %s289 = int_to_ptr.vmem [resolvable:$true] %s288
          %294 = dma.hbm_to_vmem [thread:$0]  %s1, 256, %s289, [#allocation7], 128, 128, 8
        $region20: #{tpu_custom_call.1} parent=11 // pred_fallthru
          _
        // Predicated region
        $region21: #{tpu_custom_call.1} parent=11 // pred_check
          %p295 = pneg %p82
        $region22: #{tpu_custom_call.1} parent=11 // pred_check_branch
          %297 = sbr.rel (%p295) target = $region24
        $region23: #{tpu_custom_call.1} parent=11 // pred_region
          %s299 = ssub.s32 256, 256
          %300 = vsyncadd [#allocation7], %s299
          %s301 = sshll.u32 [#allocation8], 4
          %s302 = int_to_ptr.vmem [resolvable:$true] %s301
          %307 = dma.hbm_to_vmem [thread:$0]  %s2, 256, %s302, [#allocation7], 64, 64, 4
        $region24: #{tpu_custom_call.1} parent=11 // pred_fallthru
          _
        // Predicated region
        $region25: #{tpu_custom_call.1} parent=11 // pred_check
          %p308 = pneg %p103
        $region26: #{tpu_custom_call.1} parent=11 // pred_check_branch
          %310 = sbr.rel (%p308) target = $region28
        $region27: #{tpu_custom_call.1} parent=11 // pred_region
          %s312 = ssub.s32 256, 256
          %313 = vsyncadd [#allocation10], %s312
          %s314 = sshll.u32 [#allocation9], 4
          %s315 = int_to_ptr.vmem [resolvable:$true] %s314
          %320 = dma.hbm_to_vmem [thread:$0]  %s3, 256, %s315, [#allocation10], 64, 64, 4
        $region28: #{tpu_custom_call.1} parent=11 // pred_fallthru
          _
      $region12: #{tpu_custom_call.1} parent=5 // pred_fallthru
        _
      %p321 = scmp.lt.s32.totalorder %s19, 2
      // Predicated region
      $region29: #{tpu_custom_call.1} parent=5 // pred_check
        %p322 = pneg %p321
      $region30: #{tpu_custom_call.1} parent=5 // pred_check_branch
        %324 = sbr.rel (%p322) target = $region32
      $region31: #{tpu_custom_call.1} parent=5 // pred_region
        // Predicated region
        $region33: #{tpu_custom_call.1} parent=31 // pred_check
          %p325 = pneg %p123
        $region34: #{tpu_custom_call.1} parent=31 // pred_check_branch
          %327 = sbr.rel (%p325) target = $region36
        $region35: #{tpu_custom_call.1} parent=31 // pred_region
          %p328 = scmp.lt.s32.totalorder %s19, 1
          %s329 = scalar_select %p328, %s19, 1
          %s330 = smul.addr %s329, 4
          %s331 = smul.addr %s330, 4
          %s332 = scalar_lea.vmem %s4, %s331
        $region36: #{tpu_custom_call.1} parent=31 // pred_fallthru
          _
        // Predicated region
        $region37: #{tpu_custom_call.1} parent=31 // pred_check
          %p333 = pneg %p149
        $region38: #{tpu_custom_call.1} parent=31 // pred_check_branch
          %335 = sbr.rel (%p333) target = $region40
        $region39: #{tpu_custom_call.1} parent=31 // pred_region
          %s336 = sand.u32 %s19, 1
          %s337 = scalar_lea.sflag [#allocation4], %s336
          %s338 = sand.u32 %s139, 1
          %s339 = smul.addr %s338, 96
          %s340 = scalar_lea.vmem [#allocation11], %s339
          %s342 = ssub.s32 1536, 1536
          %343 = vsyncadd %s337, %s342
          %s344 = smul.addr %s19, 24
          %s345 = smul.addr %s344, 64
          %s346 = scalar_lea.hbm %s5, %s345
          %s347 = sshll.u32 %s340, 4
          %s348 = int_to_ptr.vmem [resolvable:$true] %s347
          %353 = dma.hbm_to_vmem [thread:$0]  %s346, 1536, %s348, %s337, 64, 64, 4
        $region40: #{tpu_custom_call.1} parent=31 // pred_fallthru
          _
        // Predicated region
        $region41: #{tpu_custom_call.1} parent=31 // pred_check
          %p354 = pneg %p175
        $region42: #{tpu_custom_call.1} parent=31 // pred_check_branch
          %356 = sbr.rel (%p354) target = $region44
        $region43: #{tpu_custom_call.1} parent=31 // pred_region
          %p357 = scmp.lt.s32.totalorder %s19, 1
          %s358 = scalar_select %p357, %s19, 1
          %s359 = smul.addr %s358, 4
          %s360 = smul.addr %s359, 4
          %s361 = scalar_lea.vmem %s6, %s360
        $region44: #{tpu_custom_call.1} parent=31 // pred_fallthru
          _
        // Predicated region
        $region45: #{tpu_custom_call.1} parent=31 // pred_check
          %p362 = pneg %p201
        $region46: #{tpu_custom_call.1} parent=31 // pred_check_branch
          %364 = sbr.rel (%p362) target = $region48
        $region47: #{tpu_custom_call.1} parent=31 // pred_region
          %p365 = scmp.lt.s32.totalorder %s19, 1
          %s366 = scalar_select %p365, %s19, 1
          %s367 = smul.addr %s366, 8
          %s368 = smul.addr %s367, 4
          %s369 = scalar_lea.vmem %s7, %s368
        $region48: #{tpu_custom_call.1} parent=31 // pred_fallthru
          _
        // Predicated region
        $region49: #{tpu_custom_call.1} parent=31 // pred_check
          %p370 = pneg %p227
        $region50: #{tpu_custom_call.1} parent=31 // pred_check_branch
          %372 = sbr.rel (%p370) target = $region52
        $region51: #{tpu_custom_call.1} parent=31 // pred_region
          %p373 = scmp.lt.s32.totalorder %s19, 1
          %s374 = scalar_select %p373, %s19, 1
          %s375 = smul.addr %s374, 2
          %s376 = smul.addr %s375, 8
          %s377 = scalar_lea.vmem %s8, %s376
        $region52: #{tpu_custom_call.1} parent=31 // pred_fallthru
          _
      $region32: #{tpu_custom_call.1} parent=5 // pred_fallthru
        _
      %p378 = scmp.le.s32.totalorder 1, %s19
      %p379 = scmp.lt.s32.totalorder %s19, 3
      %p380 = pnand %p378, %p379
      %p381 = pneg %p380
      // Predicated region
      $region53: #{tpu_custom_call.1} parent=5 // pred_check
        _
      $region54: #{tpu_custom_call.1} parent=5 // pred_check_branch
        %383 = sbr.rel (%p380) target = $region56
      $region55: #{tpu_custom_call.1} parent=5 // pred_region
        %s384 = ssub.s32 %s19, 1
        // Predicated region
        $region57: #{tpu_custom_call.1} parent=55 // pred_check
          %p385 = pneg %p40
        $region58: #{tpu_custom_call.1} parent=55 // pred_check_branch
          %387 = sbr.rel (%p385) target = $region60
        $region59: #{tpu_custom_call.1} parent=55 // pred_region
          %388 = dma.done [#allocation4], 256
        $region60: #{tpu_custom_call.1} parent=55 // pred_fallthru
          _
        // Predicated region
        $region61: #{tpu_custom_call.1} parent=55 // pred_check
          %p389 = pneg %p61
        $region62: #{tpu_custom_call.1} parent=55 // pred_check_branch
          %391 = sbr.rel (%p389) target = $region64
        $region63: #{tpu_custom_call.1} parent=55 // pred_region
          %392 = dma.done [#allocation7], 256
        $region64: #{tpu_custom_call.1} parent=55 // pred_fallthru
          _
        // Predicated region
        $region65: #{tpu_custom_call.1} parent=55 // pred_check
          %p393 = pneg %p82
        $region66: #{tpu_custom_call.1} parent=55 // pred_check_branch
          %395 = sbr.rel (%p393) target = $region68
        $region67: #{tpu_custom_call.1} parent=55 // pred_region
          %396 = dma.done [#allocation7], 256
        $region68: #{tpu_custom_call.1} parent=55 // pred_fallthru
          _
        // Predicated region
        $region69: #{tpu_custom_call.1} parent=55 // pred_check
          %p397 = pneg %p103
        $region70: #{tpu_custom_call.1} parent=55 // pred_check_branch
          %399 = sbr.rel (%p397) target = $region72
        $region71: #{tpu_custom_call.1} parent=55 // pred_region
          %400 = dma.done [#allocation10], 256
        $region72: #{tpu_custom_call.1} parent=55 // pred_fallthru
          _
        %s401 = sand.u32 %s24, 1
        %s402 = scalar_lea.sflag [#allocation4], %s401
        %s403 = sand.u32 %s142, 1
        %s404 = smul.addr %s403, 96
        %s405 = scalar_lea.vmem [#allocation11], %s404
        // Predicated region
        $region73: #{tpu_custom_call.1} parent=55 // pred_check
          %p406 = pneg %p155
        $region74: #{tpu_custom_call.1} parent=55 // pred_check_branch
          %408 = sbr.rel (%p406) target = $region76
        $region75: #{tpu_custom_call.1} parent=55 // pred_region
          %409 = dma.done %s402, 1536
        $region76: #{tpu_custom_call.1} parent=55 // pred_fallthru
          _
        %p410 = pneg %p40
        %p411 = pneg %p37
        %p412 = pneg %p61
        %p413 = pneg %p58
        %p414 = pneg %p82
        %p415 = pneg %p79
        %p416 = pneg %p103
        %p417 = pneg %p100
        %p418 = scmp.lt.s32.totalorder %s24, 1
        %s419 = scalar_select %p418, %s24, 1
        %s420 = smul.addr %s419, 4
        %s421 = smul.addr %s420, 4
        %s422 = scalar_lea.vmem %s4, %s421
        %p423 = pneg %p129
        %p424 = pneg %p126
        %s425 = sand.u32 %s24, 1
        %s426 = scalar_lea.sflag [#allocation4], %s425
        %s427 = sand.u32 %s142, 1
        %s428 = smul.addr %s427, 96
        %s429 = scalar_lea.vmem [#allocation11], %s428
        %p430 = pneg %p155
        %p431 = pneg %p152
        %p432 = scmp.lt.s32.totalorder %s24, 1
        %s433 = scalar_select %p432, %s24, 1
        %s434 = smul.addr %s433, 4
        %s435 = smul.addr %s434, 4
        %s436 = scalar_lea.vmem %s6, %s435
        %p437 = pneg %p181
        %p438 = pneg %p178
        %p439 = scmp.lt.s32.totalorder %s24, 1
        %s440 = scalar_select %p439, %s24, 1
        %s441 = smul.addr %s440, 8
        %s442 = smul.addr %s441, 4
        %s443 = scalar_lea.vmem %s7, %s442
        %p444 = pneg %p207
        %p445 = pneg %p204
        %p446 = scmp.lt.s32.totalorder %s24, 1
        %s447 = scalar_select %p446, %s24, 1
        %s448 = smul.addr %s447, 2
        %s449 = smul.addr %s448, 8
        %s450 = scalar_lea.vmem %s8, %s449
        %p451 = pneg %p233
        %p452 = pneg %p230
        %p453 = pneg %p254
        %p454 = pneg %p251
        %p455 = scmp.lt.s32.totalorder %s24, 1
        %s456 = scalar_select %p455, %s24, 1
        %s457 = smul.addr %s456, 4
        %s458 = smul.addr %s457, 4
        %s459 = scalar_lea.vmem %s4, %s458
        %p460 = scmp.lt.s32.totalorder %s24, 1
        %s461 = scalar_select %p460, %s24, 1
        %s462 = smul.addr %s461, 4
        %s463 = smul.addr %s462, 4
        %s464 = scalar_lea.vmem %s6, %s463
        %p465 = scmp.lt.s32.totalorder %s24, 1
        %s466 = scalar_select %p465, %s24, 1
        %s467 = smul.addr %s466, 8
        %s468 = smul.addr %s467, 4
        %s469 = scalar_lea.vmem %s7, %s468
        %p470 = scmp.lt.s32.totalorder %s24, 1
        %s471 = scalar_select %p470, %s24, 1
        %s472 = smul.addr %s471, 2
        %s473 = smul.addr %s472, 8
        %s474 = scalar_lea.vmem %s8, %s473
        %p476 = scmp.eq.s32.totalorder %s24, 0
        // Predicated region
        $region77: #{tpu_custom_call.1} parent=55 // pred_check
          %p477 = pneg %p476
        $region78: #{tpu_custom_call.1} parent=55 // pred_check_branch
          %479 = sbr.rel (%p477) target = $region80
        $region79: #{tpu_custom_call.1} parent=55 // pred_region
          %v480 = vld [vmem:[#allocation3] sm:$0xff]
          %v481 = vld [vmem:[#allocation3 + $0x8] sm:$0xff]
          %vm482 = vcmask 261120
          %483 = vst.msk [vmem:[#allocation12] sm:$0xff] %vm482, %v480
          %484 = vst.msk [vmem:[#allocation12 + $0x8] sm:$0xff] %vm482, %v481
        $region80: #{tpu_custom_call.1} parent=55 // pred_fallthru
          _
        %v485 = vld [vmem:[#allocation12] sm:$0xff]
        %v486 = vld [vmem:[#allocation12 + $0x8] sm:$0xff]
        %v487 = vld [vmem:[#allocation6] sm:$0xff]
        %v488 = vld [vmem:[#allocation6 + $0x8] sm:$0xff]
        %v489 = vld [vmem:[%s474] sm:$0xff]
        %v490 = vld [vmem:[%s474 + $0x8] sm:$0xff]
        %v491 = vadd.f32 %v485, %v487
        %v492 = vadd.f32 %v486, %v488
        %v493 = vpack.c.bf16 %v492, %v491
        %v494 = vld [vmem:[%s459] sm:$0xf]
        %v495 = vld [vmem:[%s459 + $0x4] sm:$0xf]
        %v496 = vld [vmem:[%s459 + $0x8] sm:$0xf]
        %v497 = vld [vmem:[%s459 + $0xc] sm:$0xf]
        %v502 = vunpack.c.l.b16 %v494
        %v503 = vunpack.c.l.b16 %v495
        %v504 = vunpack.c.l.b16 %v496
        %v505 = vunpack.c.l.b16 %v497
        %v506 = vpack.c.b16 %v503, %v502
        %v507 = vpack.c.b16 %v505, %v504
        %vm510 = vcmask 261120
        %v512 = vsel %vm510, %v493, 0
        %514 = vmatprep.subr.bf16.mxu0 0
        %515 = vmatpush1.bf16.msra.mxu0 %v506
        %516 = vmatprep.subr.bf16.mxu0 0
        %517 = vmatpush1.bf16.msra.mxu0 %v507
        %518 = vmatprep.subr.bf16.mxu0 0
        %519 = vmatpush1.bf16.msra.mxu0 0
        %520 = vmatprep.subr.bf16.mxu0 0
        %521 = vmatpush1.bf16.msra.mxu0 0
        %522 = vmatprep.subr.bf16.mxu0 0
        %523 = vmatpush1.bf16.msra.mxu0 0
        %524 = vmatprep.subr.bf16.mxu0 0
        %525 = vmatpush1.bf16.msra.mxu0 0
        %526 = vmatprep.subr.bf16.mxu0 0
        %527 = vmatpush1.bf16.msra.mxu0 0
        %528 = vmatprep.subr.bf16.mxu0 0
        %529 = vmatpush1.bf16.msra.mxu0 0
        %530 = vmatprep.subr.bf16.mxu0 0
        %531 = vmatpush1.bf16.msra.mxu0 0
        %532 = vmatprep.subr.bf16.mxu0 0
        %533 = vmatpush1.bf16.msra.mxu0 0
        %534 = vmatprep.subr.bf16.mxu0 0
        %535 = vmatpush1.bf16.msra.mxu0 0
        %536 = vmatprep.subr.bf16.mxu0 0
        %537 = vmatpush1.bf16.msra.mxu0 0
        %538 = vmatprep.subr.bf16.mxu0 0
        %539 = vmatpush1.bf16.msra.mxu0 0
        %540 = vmatprep.subr.bf16.mxu0 0
        %541 = vmatpush1.bf16.msra.mxu0 0
        %542 = vmatprep.subr.bf16.mxu0 0
        %543 = vmatpush1.bf16.msra.mxu0 0
        %544 = vmatprep.subr.bf16.mxu0 0
        %545 = vmatpush1.bf16.msra.mxu0 0
        %546 = vmatprep.mubr.bf16.mxu0 0
        %547 = vmatmul.mubr.bf16.gmra.mrb[0].mxu0 %v512
        %v548 = vpop.f32.mrb[0].mxu0
        %v549 = vadd.f32 0.0, %v548
        %v550 = vpop.f32.mrb[0].mxu0
        %v551 = vpop.f32.mrb[0].mxu0
        %v552 = vadd.f32 0.0, %v551
        %v553 = vpop.f32.mrb[0].mxu0
        %554 = vdwg.mxu0
        %v555 = vlaneseq
        %v556 = vshrl.u32 %v555, 7
        %v557 = vsub.s32 0, %v556
        %v558 = vrot.slane %v489, %v557
        %v559 = vadd.f32 %v549, %v558
        %v560 = vadd.f32 %v552, %v558
        %v561 = vlaneseq
        %v562 = vshrl.u32 %v561, 7
        %v563 = vsub.s32 1, %v562
        %v564 = vrot.slane %v489, %v563
        %566 = vrot.lane.b32.xlu0 %v564, 32
        %v567 = vpop.permute.xlu0 %566
        %v569 = vadd.f32 %v549, %v567
        %v570 = vadd.f32 %v552, %v567
        %v571 = vpack.c.bf16 %v486, %v485
        %v572 = vld [vmem:[%s405] sm:$0xf]
        %v573 = vld [vmem:[%s405 + $0x4] sm:$0xf]
        %v574 = vld [vmem:[%s405 + $0x8] sm:$0xf]
        %v575 = vld [vmem:[%s405 + $0xc] sm:$0xf]
        %v576 = vlaneseq
        %v577 = vshrl.u32 %v576, 7
        %v578 = vsub.s32 2, %v577
        %v579 = vrot.slane %v489, %v578
        %v584 = vunpack.c.l.b16 %v572
        %v585 = vunpack.c.l.b16 %v573
        %v586 = vunpack.c.l.b16 %v574
        %v587 = vunpack.c.l.b16 %v575
        %v588 = vpack.c.b16 %v585, %v584
        %v589 = vpack.c.b16 %v587, %v586
        %v593 = vsel %vm510, %v571, 0
        %595 = vmatprep.subr.bf16.mxu0 0
        %596 = vmatpush1.bf16.msra.mxu0 %v588
        %597 = vmatprep.subr.bf16.mxu0 0
        %598 = vmatpush1.bf16.msra.mxu0 %v589
        %599 = vmatprep.subr.bf16.mxu0 0
        %600 = vmatpush1.bf16.msra.mxu0 0
        %601 = vmatprep.subr.bf16.mxu0 0
        %602 = vmatpush1.bf16.msra.mxu0 0
        %603 = vmatprep.subr.bf16.mxu0 0
        %604 = vmatpush1.bf16.msra.mxu0 0
        %605 = vmatprep.subr.bf16.mxu0 0
        %606 = vmatpush1.bf16.msra.mxu0 0
        %607 = vmatprep.subr.bf16.mxu0 0
        %608 = vmatpush1.bf16.msra.mxu0 0
        %609 = vmatprep.subr.bf16.mxu0 0
        %610 = vmatpush1.bf16.msra.mxu0 0
        %611 = vmatprep.subr.bf16.mxu0 0
        %612 = vmatpush1.bf16.msra.mxu0 0
        %613 = vmatprep.subr.bf16.mxu0 0
        %614 = vmatpush1.bf16.msra.mxu0 0
        %615 = vmatprep.subr.bf16.mxu0 0
        %616 = vmatpush1.bf16.msra.mxu0 0
        %617 = vmatprep.subr.bf16.mxu0 0
        %618 = vmatpush1.bf16.msra.mxu0 0
        %619 = vmatprep.subr.bf16.mxu0 0
        %620 = vmatpush1.bf16.msra.mxu0 0
        %621 = vmatprep.subr.bf16.mxu0 0
        %622 = vmatpush1.bf16.msra.mxu0 0
        %623 = vmatprep.subr.bf16.mxu0 0
        %624 = vmatpush1.bf16.msra.mxu0 0
        %625 = vmatprep.subr.bf16.mxu0 0
        %626 = vmatpush1.bf16.msra.mxu0 0
        %627 = vmatprep.mubr.bf16.mxu0 0
        %628 = vmatmul.mubr.bf16.gmra.mrb[0].mxu0 %v593
        %v629 = vpop.f32.mrb[0].mxu0
        %v630 = vadd.f32 %v579, %v629
        %v631 = vpop.f32.mrb[0].mxu0
        %v632 = vpop.f32.mrb[0].mxu0
        %v633 = vadd.f32 %v579, %v632
        %v634 = vpop.f32.mrb[0].mxu0
        %635 = vdwg.mxu0
        %v636 = vmul.f32 %v559, 0.35355338
        %637 = vxpose.xlu0.b32.start [1/16] %v636, 128
        %638 = vxpose.xlu0.b32.cont [2/16] 0.0, 128
        %639 = vxpose.xlu0.b32.cont [3/16] 0.0, 128
        %640 = vxpose.xlu0.b32.cont [4/16] 0.0, 128
        %641 = vxpose.xlu0.b32.cont [5/16] 0.0, 128
        %642 = vxpose.xlu0.b32.cont [6/16] 0.0, 128
        %643 = vxpose.xlu0.b32.cont [7/16] 0.0, 128
        %644 = vxpose.xlu0.b32.cont [8/16] 0.0, 128
        %645 = vxpose.xlu0.b32.cont [9/16] 0.0, 128
        %646 = vxpose.xlu0.b32.cont [10/16] 0.0, 128
        %647 = vxpose.xlu0.b32.cont [11/16] 0.0, 128
        %648 = vxpose.xlu0.b32.cont [12/16] 0.0, 128
        %649 = vxpose.xlu0.b32.cont [13/16] 0.0, 128
        %650 = vxpose.xlu0.b32.cont [14/16] 0.0, 128
        %651 = vxpose.xlu0.b32.cont [15/16] 0.0, 128
        %652 = vxpose.xlu0.b32.end [16/16] 0.0, 128
        %v653 = vpop.trf.xlu0
        %v654 = vpop.trf.xlu0
        %v655 = vpop.trf.xlu0
        %v656 = vpop.trf.xlu0
        %v657 = vpop.trf.xlu0
        %v658 = vpop.trf.xlu0
        %v659 = vpop.trf.xlu0
        %v660 = vpop.trf.xlu0
        %v661 = vpop.trf.xlu0
        %v662 = vpop.trf.xlu0
        %v663 = vpop.trf.xlu0
        %v664 = vpop.trf.xlu0
        %v665 = vpop.trf.xlu0
        %v666 = vpop.trf.xlu0
        %v667 = vpop.trf.xlu0
        %v668 = vpop.trf.xlu0
        %669 = vxpose.xlu0.b32.start [1/16] %v653, 128
        %670 = vxpose.xlu0.b32.cont [2/16] 0.0, 128
        %671 = vxpose.xlu0.b32.cont [3/16] 0.0, 128
        %672 = vxpose.xlu0.b32.cont [4/16] 0.0, 128
        %673 = vxpose.xlu0.b32.cont [5/16] 0.0, 128
        %674 = vxpose.xlu0.b32.cont [6/16] 0.0, 128
        %675 = vxpose.xlu0.b32.cont [7/16] 0.0, 128
        %676 = vxpose.xlu0.b32.cont [8/16] 0.0, 128
        %677 = vxpose.xlu0.b32.cont [9/16] 0.0, 128
        %678 = vxpose.xlu0.b32.cont [10/16] 0.0, 128
        %679 = vxpose.xlu0.b32.cont [11/16] 0.0, 128
        %680 = vxpose.xlu0.b32.cont [12/16] 0.0, 128
        %681 = vxpose.xlu0.b32.cont [13/16] 0.0, 128
        %682 = vxpose.xlu0.b32.cont [14/16] 0.0, 128
        %683 = vxpose.xlu0.b32.cont [15/16] 0.0, 128
        %684 = vxpose.xlu0.b32.end [16/16] 0.0, 128
        %v685 = vpop.trf.xlu0
        %v686 = vpop.trf.xlu0
        %v687 = vpop.trf.xlu0
        %v688 = vpop.trf.xlu0
        %v689 = vpop.trf.xlu0
        %v690 = vpop.trf.xlu0
        %v691 = vpop.trf.xlu0
        %v692 = vpop.trf.xlu0
        %v693 = vpop.trf.xlu0
        %v694 = vpop.trf.xlu0
        %v695 = vpop.trf.xlu0
        %v696 = vpop.trf.xlu0
        %v697 = vpop.trf.xlu0
        %v698 = vpop.trf.xlu0
        %v699 = vpop.trf.xlu0
        %v700 = vpop.trf.xlu0
        %701 = vxpose.xlu0.b32.start [1/16] %v654, 128
        %702 = vxpose.xlu0.b32.cont [2/16] 0.0, 128
        %703 = vxpose.xlu0.b32.cont [3/16] 0.0, 128
        %704 = vxpose.xlu0.b32.cont [4/16] 0.0, 128
        %705 = vxpose.xlu0.b32.cont [5/16] 0.0, 128
        %706 = vxpose.xlu0.b32.cont [6/16] 0.0, 128
        %707 = vxpose.xlu0.b32.cont [7/16] 0.0, 128
        %708 = vxpose.xlu0.b32.cont [8/16] 0.0, 128
        %709 = vxpose.xlu0.b32.cont [9/16] 0.0, 128
        %710 = vxpose.xlu0.b32.cont [10/16] 0.0, 128
        %711 = vxpose.xlu0.b32.cont [11/16] 0.0, 128
        %712 = vxpose.xlu0.b32.cont [12/16] 0.0, 128
        %713 = vxpose.xlu0.b32.cont [13/16] 0.0, 128
        %714 = vxpose.xlu0.b32.cont [14/16] 0.0, 128
        %715 = vxpose.xlu0.b32.cont [15/16] 0.0, 128
        %716 = vxpose.xlu0.b32.end [16/16] 0.0, 128
        %v717 = vpop.trf.xlu0
        %v718 = vpop.trf.xlu0
        %v719 = vpop.trf.xlu0
        %v720 = vpop.trf.xlu0
        %v721 = vpop.trf.xlu0
        %v722 = vpop.trf.xlu0
        %v723 = vpop.trf.xlu0
        %v724 = vpop.trf.xlu0
        %v725 = vpop.trf.xlu0
        %v726 = vpop.trf.xlu0
        %v727 = vpop.trf.xlu0
        %v728 = vpop.trf.xlu0
        %v729 = vpop.trf.xlu0
        %v730 = vpop.trf.xlu0
        %v731 = vpop.trf.xlu0
        %v732 = vpop.trf.xlu0
        %733 = vxpose.xlu0.b32.start [1/16] %v655, 128
        %734 = vxpose.xlu0.b32.cont [2/16] 0.0, 128
        %735 = vxpose.xlu0.b32.cont [3/16] 0.0, 128
        %736 = vxpose.xlu0.b32.cont [4/16] 0.0, 128
        %737 = vxpose.xlu0.b32.cont [5/16] 0.0, 128
        %738 = vxpose.xlu0.b32.cont [6/16] 0.0, 128
        %739 = vxpose.xlu0.b32.cont [7/16] 0.0, 128
        %740 = vxpose.xlu0.b32.cont [8/16] 0.0, 128
        %741 = vxpose.xlu0.b32.cont [9/16] 0.0, 128
        %742 = vxpose.xlu0.b32.cont [10/16] 0.0, 128
        %743 = vxpose.xlu0.b32.cont [11/16] 0.0, 128
        %744 = vxpose.xlu0.b32.cont [12/16] 0.0, 128
        %745 = vxpose.xlu0.b32.cont [13/16] 0.0, 128
        %746 = vxpose.xlu0.b32.cont [14/16] 0.0, 128
        %747 = vxpose.xlu0.b32.cont [15/16] 0.0, 128
        %748 = vxpose.xlu0.b32.end [16/16] 0.0, 128
        %v749 = vpop.trf.xlu0
        %v750 = vpop.trf.xlu0
        %v751 = vpop.trf.xlu0
        %v752 = vpop.trf.xlu0
        %v753 = vpop.trf.xlu0
        %v754 = vpop.trf.xlu0
        %v755 = vpop.trf.xlu0
        %v756 = vpop.trf.xlu0
        %v757 = vpop.trf.xlu0
        %v758 = vpop.trf.xlu0
        %v759 = vpop.trf.xlu0
        %v760 = vpop.trf.xlu0
        %v761 = vpop.trf.xlu0
        %v762 = vpop.trf.xlu0
        %v763 = vpop.trf.xlu0
        %v764 = vpop.trf.xlu0
        %765 = vxpose.xlu0.b32.start [1/16] %v656, 128
        %766 = vxpose.xlu0.b32.cont [2/16] 0.0, 128
        %767 = vxpose.xlu0.b32.cont [3/16] 0.0, 128
        %768 = vxpose.xlu0.b32.cont [4/16] 0.0, 128
        %769 = vxpose.xlu0.b32.cont [5/16] 0.0, 128
        %770 = vxpose.xlu0.b32.cont [6/16] 0.0, 128
        %771 = vxpose.xlu0.b32.cont [7/16] 0.0, 128
        %772 = vxpose.xlu0.b32.cont [8/16] 0.0, 128
        %773 = vxpose.xlu0.b32.cont [9/16] 0.0, 128
        %774 = vxpose.xlu0.b32.cont [10/16] 0.0, 128
        %775 = vxpose.xlu0.b32.cont [11/16] 0.0, 128
        %776 = vxpose.xlu0.b32.cont [12/16] 0.0, 128
        %777 = vxpose.xlu0.b32.cont [13/16] 0.0, 128
        %778 = vxpose.xlu0.b32.cont [14/16] 0.0, 128
        %779 = vxpose.xlu0.b32.cont [15/16] 0.0, 128
        %780 = vxpose.xlu0.b32.end [16/16] 0.0, 128
        %v781 = vpop.trf.xlu0
        %v782 = vpop.trf.xlu0
        %v783 = vpop.trf.xlu0
        %v784 = vpop.trf.xlu0
        %v785 = vpop.trf.xlu0
        %v786 = vpop.trf.xlu0
        %v787 = vpop.trf.xlu0
        %v788 = vpop.trf.xlu0
        %v789 = vpop.trf.xlu0
        %v790 = vpop.trf.xlu0
        %v791 = vpop.trf.xlu0
        %v792 = vpop.trf.xlu0
        %v793 = vpop.trf.xlu0
        %v794 = vpop.trf.xlu0
        %v795 = vpop.trf.xlu0
        %v796 = vpop.trf.xlu0
        %v797 = vpack.c.bf16 %v685, %v685
        %v798 = vpack.c.bf16 %v717, %v717
        %v799 = vpack.c.bf16 %v749, %v749
        %v800 = vpack.c.bf16 %v781, %v781
        %802 = vrot.lane.b32.xlu0 %v569, 96
        %v803 = vpop.permute.xlu0 %802
        %805 = vxpose.xlu0.b32.start [1/16] %v803, 128
        %806 = vxpose.xlu0.b32.cont [2/16] 0.0, 128
        %807 = vxpose.xlu0.b32.cont [3/16] 0.0, 128
        %808 = vxpose.xlu0.b32.cont [4/16] 0.0, 128
        %809 = vxpose.xlu0.b32.cont [5/16] 0.0, 128
        %810 = vxpose.xlu0.b32.cont [6/16] 0.0, 128
        %811 = vxpose.xlu0.b32.cont [7/16] 0.0, 128
        %812 = vxpose.xlu0.b32.cont [8/16] 0.0, 128
        %813 = vxpose.xlu0.b32.cont [9/16] 0.0, 128
        %814 = vxpose.xlu0.b32.cont [10/16] 0.0, 128
        %815 = vxpose.xlu0.b32.cont [11/16] 0.0, 128
        %816 = vxpose.xlu0.b32.cont [12/16] 0.0, 128
        %817 = vxpose.xlu0.b32.cont [13/16] 0.0, 128
        %818 = vxpose.xlu0.b32.cont [14/16] 0.0, 128
        %819 = vxpose.xlu0.b32.cont [15/16] 0.0, 128
        %820 = vxpose.xlu0.b32.end [16/16] 0.0, 128
        %v821 = vpop.trf.xlu0
        %v822 = vpop.trf.xlu0
        %v823 = vpop.trf.xlu0
        %v824 = vpop.trf.xlu0
        %v825 = vpop.trf.xlu0
        %v826 = vpop.trf.xlu0
        %v827 = vpop.trf.xlu0
        %v828 = vpop.trf.xlu0
        %v829 = vpop.trf.xlu0
        %v830 = vpop.trf.xlu0
        %v831 = vpop.trf.xlu0
        %v832 = vpop.trf.xlu0
        %v833 = vpop.trf.xlu0
        %v834 = vpop.trf.xlu0
        %v835 = vpop.trf.xlu0
        %v836 = vpop.trf.xlu0
        %v837 = vpack.c.bf16 %v821, %v821
        %v838 = vpack.c.bf16 %v822, %v822
        %v839 = vpack.c.bf16 %v823, %v823
        %v840 = vpack.c.bf16 %v824, %v824
        %841 = vxpose.xlu0.b32.start [1/16] %v630, 128
        %842 = vxpose.xlu0.b32.cont [2/16] 0.0, 128
        %843 = vxpose.xlu0.b32.cont [3/16] 0.0, 128
        %844 = vxpose.xlu0.b32.cont [4/16] 0.0, 128
        %845 = vxpose.xlu0.b32.cont [5/16] 0.0, 128
        %846 = vxpose.xlu0.b32.cont [6/16] 0.0, 128
        %847 = vxpose.xlu0.b32.cont [7/16] 0.0, 128
        %848 = vxpose.xlu0.b32.cont [8/16] 0.0, 128
        %849 = vxpose.xlu0.b32.cont [9/16] 0.0, 128
        %850 = vxpose.xlu0.b32.cont [10/16] 0.0, 128
        %851 = vxpose.xlu0.b32.cont [11/16] 0.0, 128
        %852 = vxpose.xlu0.b32.cont [12/16] 0.0, 128
        %853 = vxpose.xlu0.b32.cont [13/16] 0.0, 128
        %854 = vxpose.xlu0.b32.cont [14/16] 0.0, 128
        %855 = vxpose.xlu0.b32.cont [15/16] 0.0, 128
        %856 = vxpose.xlu0.b32.end [16/16] 0.0, 128
        %v857 = vpop.trf.xlu0
        %v858 = vpop.trf.xlu0
        %v859 = vpop.trf.xlu0
        %v860 = vpop.trf.xlu0
        %v861 = vpop.trf.xlu0
        %v862 = vpop.trf.xlu0
        %v863 = vpop.trf.xlu0
        %v864 = vpop.trf.xlu0
        %v865 = vpop.trf.xlu0
        %v866 = vpop.trf.xlu0
        %v867 = vpop.trf.xlu0
        %v868 = vpop.trf.xlu0
        %v869 = vpop.trf.xlu0
        %v870 = vpop.trf.xlu0
        %v871 = vpop.trf.xlu0
        %v872 = vpop.trf.xlu0
        %873 = vxpose.xlu0.b32.start [1/16] %v857, 128
        %874 = vxpose.xlu0.b32.cont [2/16] 0.0, 128
        %875 = vxpose.xlu0.b32.cont [3/16] 0.0, 128
        %876 = vxpose.xlu0.b32.cont [4/16] 0.0, 128
        %877 = vxpose.xlu0.b32.cont [5/16] 0.0, 128
        %878 = vxpose.xlu0.b32.cont [6/16] 0.0, 128
        %879 = vxpose.xlu0.b32.cont [7/16] 0.0, 128
        %880 = vxpose.xlu0.b32.cont [8/16] 0.0, 128
        %881 = vxpose.xlu0.b32.cont [9/16] 0.0, 128
        %882 = vxpose.xlu0.b32.cont [10/16] 0.0, 128
        %883 = vxpose.xlu0.b32.cont [11/16] 0.0, 128
        %884 = vxpose.xlu0.b32.cont [12/16] 0.0, 128
        %885 = vxpose.xlu0.b32.cont [13/16] 0.0, 128
        %886 = vxpose.xlu0.b32.cont [14/16] 0.0, 128
        %887 = vxpose.xlu0.b32.cont [15/16] 0.0, 128
        %888 = vxpose.xlu0.b32.end [16/16] 0.0, 128
        %v889 = vpop.trf.xlu0
        %v890 = vpop.trf.xlu0
        %v891 = vpop.trf.xlu0
        %v892 = vpop.trf.xlu0
        %v893 = vpop.trf.xlu0
        %v894 = vpop.trf.xlu0
        %v895 = vpop.trf.xlu0
        %v896 = vpop.trf.xlu0
        %v897 = vpop.trf.xlu0
        %v898 = vpop.trf.xlu0
        %v899 = vpop.trf.xlu0
        %v900 = vpop.trf.xlu0
        %v901 = vpop.trf.xlu0
        %v902 = vpop.trf.xlu0
        %v903 = vpop.trf.xlu0
        %v904 = vpop.trf.xlu0
        %905 = vxpose.xlu0.b32.start [1/16] %v858, 128
        %906 = vxpose.xlu0.b32.cont [2/16] 0.0, 128
        %907 = vxpose.xlu0.b32.cont [3/16] 0.0, 128
        %908 = vxpose.xlu0.b32.cont [4/16] 0.0, 128
        %909 = vxpose.xlu0.b32.cont [5/16] 0.0, 128
        %910 = vxpose.xlu0.b32.cont [6/16] 0.0, 128
        %911 = vxpose.xlu0.b32.cont [7/16] 0.0, 128
        %912 = vxpose.xlu0.b32.cont [8/16] 0.0, 128
        %913 = vxpose.xlu0.b32.cont [9/16] 0.0, 128
        %914 = vxpose.xlu0.b32.cont [10/16] 0.0, 128
        %915 = vxpose.xlu0.b32.cont [11/16] 0.0, 128
        %916 = vxpose.xlu0.b32.cont [12/16] 0.0, 128
        %917 = vxpose.xlu0.b32.cont [13/16] 0.0, 128
        %918 = vxpose.xlu0.b32.cont [14/16] 0.0, 128
        %919 = vxpose.xlu0.b32.cont [15/16] 0.0, 128
        %920 = vxpose.xlu0.b32.end [16/16] 0.0, 128
        %v921 = vpop.trf.xlu0
        %v922 = vpop.trf.xlu0
        %v923 = vpop.trf.xlu0
        %v924 = vpop.trf.xlu0
        %v925 = vpop.trf.xlu0
        %v926 = vpop.trf.xlu0
        %v927 = vpop.trf.xlu0
        %v928 = vpop.trf.xlu0
        %v929 = vpop.trf.xlu0
        %v930 = vpop.trf.xlu0
        %v931 = vpop.trf.xlu0
        %v932 = vpop.trf.xlu0
        %v933 = vpop.trf.xlu0
        %v934 = vpop.trf.xlu0
        %v935 = vpop.trf.xlu0
        %v936 = vpop.trf.xlu0
        %937 = vxpose.xlu0.b32.start [1/16] %v859, 128
        %938 = vxpose.xlu0.b32.cont [2/16] 0.0, 128
        %939 = vxpose.xlu0.b32.cont [3/16] 0.0, 128
        %940 = vxpose.xlu0.b32.cont [4/16] 0.0, 128
        %941 = vxpose.xlu0.b32.cont [5/16] 0.0, 128
        %942 = vxpose.xlu0.b32.cont [6/16] 0.0, 128
        %943 = vxpose.xlu0.b32.cont [7/16] 0.0, 128
        %944 = vxpose.xlu0.b32.cont [8/16] 0.0, 128
        %945 = vxpose.xlu0.b32.cont [9/16] 0.0, 128
        %946 = vxpose.xlu0.b32.cont [10/16] 0.0, 128
        %947 = vxpose.xlu0.b32.cont [11/16] 0.0, 128
        %948 = vxpose.xlu0.b32.cont [12/16] 0.0, 128
        %949 = vxpose.xlu0.b32.cont [13/16] 0.0, 128
        %950 = vxpose.xlu0.b32.cont [14/16] 0.0, 128
        %951 = vxpose.xlu0.b32.cont [15/16] 0.0, 128
        %952 = vxpose.xlu0.b32.end [16/16] 0.0, 128
        %v953 = vpop.trf.xlu0
        %v954 = vpop.trf.xlu0
        %v955 = vpop.trf.xlu0
        %v956 = vpop.trf.xlu0
        %v957 = vpop.trf.xlu0
        %v958 = vpop.trf.xlu0
        %v959 = vpop.trf.xlu0
        %v960 = vpop.trf.xlu0
        %v961 = vpop.trf.xlu0
        %v962 = vpop.trf.xlu0
        %v963 = vpop.trf.xlu0
        %v964 = vpop.trf.xlu0
        %v965 = vpop.trf.xlu0
        %v966 = vpop.trf.xlu0
        %v967 = vpop.trf.xlu0
        %v968 = vpop.trf.xlu0
        %969 = vxpose.xlu0.b32.start [1/16] %v860, 128
        %970 = vxpose.xlu0.b32.cont [2/16] 0.0, 128
        %971 = vxpose.xlu0.b32.cont [3/16] 0.0, 128
        %972 = vxpose.xlu0.b32.cont [4/16] 0.0, 128
        %973 = vxpose.xlu0.b32.cont [5/16] 0.0, 128
        %974 = vxpose.xlu0.b32.cont [6/16] 0.0, 128
        %975 = vxpose.xlu0.b32.cont [7/16] 0.0, 128
        %976 = vxpose.xlu0.b32.cont [8/16] 0.0, 128
        %977 = vxpose.xlu0.b32.cont [9/16] 0.0, 128
        %978 = vxpose.xlu0.b32.cont [10/16] 0.0, 128
        %979 = vxpose.xlu0.b32.cont [11/16] 0.0, 128
        %980 = vxpose.xlu0.b32.cont [12/16] 0.0, 128
        %981 = vxpose.xlu0.b32.cont [13/16] 0.0, 128
        %982 = vxpose.xlu0.b32.cont [14/16] 0.0, 128
        %983 = vxpose.xlu0.b32.cont [15/16] 0.0, 128
        %984 = vxpose.xlu0.b32.end [16/16] 0.0, 128
        %v985 = vpop.trf.xlu0
        %v986 = vpop.trf.xlu0
        %v987 = vpop.trf.xlu0
        %v988 = vpop.trf.xlu0
        %v989 = vpop.trf.xlu0
        %v990 = vpop.trf.xlu0
        %v991 = vpop.trf.xlu0
        %v992 = vpop.trf.xlu0
        %v993 = vpop.trf.xlu0
        %v994 = vpop.trf.xlu0
        %v995 = vpop.trf.xlu0
        %v996 = vpop.trf.xlu0
        %v997 = vpop.trf.xlu0
        %v998 = vpop.trf.xlu0
        %v999 = vpop.trf.xlu0
        %v1000 = vpop.trf.xlu0
        %v1001 = vpack.c.bf16 %v889, %v889
        %v1002 = vpack.c.bf16 %v921, %v921
        %v1003 = vpack.c.bf16 %v953, %v953
        %v1004 = vpack.c.bf16 %v985, %v985
        %vm1005 = vcmask 64512
        %v1007 = vsel %vm1005, %v797, 0
        %vm1009 = vcmask 1043456
        %v1011 = vsel %vm1009, %v837, 0
        %1013 = vmatprep.subr.bf16.mxu0 0
        %1014 = vmatpush1.bf16.msra.mxu0 %v1011
        %1015 = vmatprep.subr.bf16.mxu0 0
        %1016 = vmatpush1.bf16.msra.mxu0 0
        %1017 = vmatprep.subr.bf16.mxu0 0
        %1018 = vmatpush1.bf16.msra.mxu0 0
        %1019 = vmatprep.subr.bf16.mxu0 0
        %1020 = vmatpush1.bf16.msra.mxu0 0
        %1021 = vmatprep.subr.bf16.mxu0 0
        %1022 = vmatpush1.bf16.msra.mxu0 0
        %1023 = vmatprep.subr.bf16.mxu0 0
        %1024 = vmatpush1.bf16.msra.mxu0 0
        %1025 = vmatprep.subr.bf16.mxu0 0
        %1026 = vmatpush1.bf16.msra.mxu0 0
        %1027 = vmatprep.subr.bf16.mxu0 0
        %1028 = vmatpush1.bf16.msra.mxu0 0
        %1029 = vmatprep.subr.bf16.mxu0 0
        %1030 = vmatpush1.bf16.msra.mxu0 0
        %1031 = vmatprep.subr.bf16.mxu0 0
        %1032 = vmatpush1.bf16.msra.mxu0 0
        %1033 = vmatprep.subr.bf16.mxu0 0
        %1034 = vmatpush1.bf16.msra.mxu0 0
        %1035 = vmatprep.subr.bf16.mxu0 0
        %1036 = vmatpush1.bf16.msra.mxu0 0
        %1037 = vmatprep.subr.bf16.mxu0 0
        %1038 = vmatpush1.bf16.msra.mxu0 0
        %1039 = vmatprep.subr.bf16.mxu0 0
        %1040 = vmatpush1.bf16.msra.mxu0 0
        %1041 = vmatprep.subr.bf16.mxu0 0
        %1042 = vmatpush1.bf16.msra.mxu0 0
        %1043 = vmatprep.subr.bf16.mxu0 0
        %1044 = vmatpush1.bf16.msra.mxu0 0
        %1045 = vmatprep.mubr.bf16.mxu0 0
        %1046 = vmatmul.mubr.bf16.gmra.mrb[0].mxu0 %v1007
        %v1047 = vpop.f32.mrb[0].mxu0
        %v1048 = vadd.f32 0.0, %v1047
        %v1049 = vpop.f32.mrb[0].mxu0
        %v1050 = vpop.f32.mrb[0].mxu0
        %v1051 = vpop.f32.mrb[0].mxu0
        %1052 = vdwg.mxu0
        %v1054 = vsel %vm1005, %v798, 0
        %v1057 = vsel %vm1009, %v838, 0
        %1059 = vmatprep.subr.bf16.mxu0 0
        %1060 = vmatpush1.bf16.msra.mxu0 %v1057
        %1061 = vmatprep.subr.bf16.mxu0 0
        %1062 = vmatpush1.bf16.msra.mxu0 0
        %1063 = vmatprep.subr.bf16.mxu0 0
        %1064 = vmatpush1.bf16.msra.mxu0 0
        %1065 = vmatprep.subr.bf16.mxu0 0
        %1066 = vmatpush1.bf16.msra.mxu0 0
        %1067 = vmatprep.subr.bf16.mxu0 0
        %1068 = vmatpush1.bf16.msra.mxu0 0
        %1069 = vmatprep.subr.bf16.mxu0 0
        %1070 = vmatpush1.bf16.msra.mxu0 0
        %1071 = vmatprep.subr.bf16.mxu0 0
        %1072 = vmatpush1.bf16.msra.mxu0 0
        %1073 = vmatprep.subr.bf16.mxu0 0
        %1074 = vmatpush1.bf16.msra.mxu0 0
        %1075 = vmatprep.subr.bf16.mxu0 0
        %1076 = vmatpush1.bf16.msra.mxu0 0
        %1077 = vmatprep.subr.bf16.mxu0 0
        %1078 = vmatpush1.bf16.msra.mxu0 0
        %1079 = vmatprep.subr.bf16.mxu0 0
        %1080 = vmatpush1.bf16.msra.mxu0 0
        %1081 = vmatprep.subr.bf16.mxu0 0
        %1082 = vmatpush1.bf16.msra.mxu0 0
        %1083 = vmatprep.subr.bf16.mxu0 0
        %1084 = vmatpush1.bf16.msra.mxu0 0
        %1085 = vmatprep.subr.bf16.mxu0 0
        %1086 = vmatpush1.bf16.msra.mxu0 0
        %1087 = vmatprep.subr.bf16.mxu0 0
        %1088 = vmatpush1.bf16.msra.mxu0 0
        %1089 = vmatprep.subr.bf16.mxu0 0
        %1090 = vmatpush1.bf16.msra.mxu0 0
        %1091 = vmatprep.mubr.bf16.mxu0 0
        %1092 = vmatmul.mubr.bf16.gmra.mrb[0].mxu0 %v1054
        %v1093 = vpop.f32.mrb[0].mxu0
        %v1094 = vadd.f32 0.0, %v1093
        %v1095 = vpop.f32.mrb[0].mxu0
        %v1096 = vpop.f32.mrb[0].mxu0
        %v1097 = vpop.f32.mrb[0].mxu0
        %1098 = vdwg.mxu0
        %v1100 = vsel %vm1005, %v799, 0
        %v1103 = vsel %vm1009, %v839, 0
        %1105 = vmatprep.subr.bf16.mxu0 0
        %1106 = vmatpush1.bf16.msra.mxu0 %v1103
        %1107 = vmatprep.subr.bf16.mxu0 0
        %1108 = vmatpush1.bf16.msra.mxu0 0
        %1109 = vmatprep.subr.bf16.mxu0 0
        %1110 = vmatpush1.bf16.msra.mxu0 0
        %1111 = vmatprep.subr.bf16.mxu0 0
        %1112 = vmatpush1.bf16.msra.mxu0 0
        %1113 = vmatprep.subr.bf16.mxu0 0
        %1114 = vmatpush1.bf16.msra.mxu0 0
        %1115 = vmatprep.subr.bf16.mxu0 0
        %1116 = vmatpush1.bf16.msra.mxu0 0
        %1117 = vmatprep.subr.bf16.mxu0 0
        %1118 = vmatpush1.bf16.msra.mxu0 0
        %1119 = vmatprep.subr.bf16.mxu0 0
        %1120 = vmatpush1.bf16.msra.mxu0 0
        %1121 = vmatprep.subr.bf16.mxu0 0
        %1122 = vmatpush1.bf16.msra.mxu0 0
        %1123 = vmatprep.subr.bf16.mxu0 0
        %1124 = vmatpush1.bf16.msra.mxu0 0
        %1125 = vmatprep.subr.bf16.mxu0 0
        %1126 = vmatpush1.bf16.msra.mxu0 0
        %1127 = vmatprep.subr.bf16.mxu0 0
        %1128 = vmatpush1.bf16.msra.mxu0 0
        %1129 = vmatprep.subr.bf16.mxu0 0
        %1130 = vmatpush1.bf16.msra.mxu0 0
        %1131 = vmatprep.subr.bf16.mxu0 0
        %1132 = vmatpush1.bf16.msra.mxu0 0
        %1133 = vmatprep.subr.bf16.mxu0 0
        %1134 = vmatpush1.bf16.msra.mxu0 0
        %1135 = vmatprep.subr.bf16.mxu0 0
        %1136 = vmatpush1.bf16.msra.mxu0 0
        %1137 = vmatprep.mubr.bf16.mxu0 0
        %1138 = vmatmul.mubr.bf16.gmra.mrb[0].mxu0 %v1100
        %v1139 = vpop.f32.mrb[0].mxu0
        %v1140 = vadd.f32 0.0, %v1139
        %v1141 = vpop.f32.mrb[0].mxu0
        %v1142 = vpop.f32.mrb[0].mxu0
        %v1143 = vpop.f32.mrb[0].mxu0
        %1144 = vdwg.mxu0
        %v1146 = vsel %vm1005, %v800, 0
        %v1149 = vsel %vm1009, %v840, 0
        %1151 = vmatprep.subr.bf16.mxu0 0
        %1152 = vmatpush1.bf16.msra.mxu0 %v1149
        %1153 = vmatprep.subr.bf16.mxu0 0
        %1154 = vmatpush1.bf16.msra.mxu0 0
        %1155 = vmatprep.subr.bf16.mxu0 0
        %1156 = vmatpush1.bf16.msra.mxu0 0
        %1157 = vmatprep.subr.bf16.mxu0 0
        %1158 = vmatpush1.bf16.msra.mxu0 0
        %1159 = vmatprep.subr.bf16.mxu0 0
        %1160 = vmatpush1.bf16.msra.mxu0 0
        %1161 = vmatprep.subr.bf16.mxu0 0
        %1162 = vmatpush1.bf16.msra.mxu0 0
        %1163 = vmatprep.subr.bf16.mxu0 0
        %1164 = vmatpush1.bf16.msra.mxu0 0
        %1165 = vmatprep.subr.bf16.mxu0 0
        %1166 = vmatpush1.bf16.msra.mxu0 0
        %1167 = vmatprep.subr.bf16.mxu0 0
        %1168 = vmatpush1.bf16.msra.mxu0 0
        %1169 = vmatprep.subr.bf16.mxu0 0
        %1170 = vmatpush1.bf16.msra.mxu0 0
        %1171 = vmatprep.subr.bf16.mxu0 0
        %1172 = vmatpush1.bf16.msra.mxu0 0
        %1173 = vmatprep.subr.bf16.mxu0 0
        %1174 = vmatpush1.bf16.msra.mxu0 0
        %1175 = vmatprep.subr.bf16.mxu0 0
        %1176 = vmatpush1.bf16.msra.mxu0 0
        %1177 = vmatprep.subr.bf16.mxu0 0
        %1178 = vmatpush1.bf16.msra.mxu0 0
        %1179 = vmatprep.subr.bf16.mxu0 0
        %1180 = vmatpush1.bf16.msra.mxu0 0
        %1181 = vmatprep.subr.bf16.mxu0 0
        %1182 = vmatpush1.bf16.msra.mxu0 0
        %1183 = vmatprep.mubr.bf16.mxu0 0
        %1184 = vmatmul.mubr.bf16.gmra.mrb[0].mxu0 %v1146
        %v1185 = vpop.f32.mrb[0].mxu0
        %v1186 = vadd.f32 0.0, %v1185
        %v1187 = vpop.f32.mrb[0].mxu0
        %v1188 = vpop.f32.mrb[0].mxu0
        %v1189 = vpop.f32.mrb[0].mxu0
        %1190 = vdwg.mxu0
        %v1191 = vsel %vm1005, %v1048, -inf
        %1192 = vmax.xlane.f32.xlu0 %v1191
        %v1193 = vpop.xlane.xlu0 %1192
        %v1194 = vsel %vm1005, %v1094, -inf
        %1195 = vmax.xlane.f32.xlu0 %v1194
        %v1196 = vpop.xlane.xlu0 %1195
        %v1197 = vsel %vm1005, %v1140, -inf
        %1198 = vmax.xlane.f32.xlu0 %v1197
        %v1199 = vpop.xlane.xlu0 %1198
        %v1200 = vsel %vm1005, %v1186, -inf
        %1201 = vmax.xlane.f32.xlu0 %v1200
        %v1202 = vpop.xlane.xlu0 %1201
        %v1203 = vsub.f32 %v1048, %v1193
        %v1204 = vsub.f32 %v1094, %v1196
        %v1205 = vsub.f32 %v1140, %v1199
        %v1206 = vsub.f32 %v1186, %v1202
        %v1207 = vmul.f32 %v1203, 1.442695
        %v1208 = vpow.pop %v1207
        %v1209 = vmul.f32 %v1204, 1.442695
        %v1210 = vpow.pop %v1209
        %v1211 = vmul.f32 %v1205, 1.442695
        %v1212 = vpow.pop %v1211
        %v1213 = vmul.f32 %v1206, 1.442695
        %v1214 = vpow.pop %v1213
        %v1215 = vsel %vm1005, %v1208, 0.0
        %1216 = vadd.xlane.f32.xlu0 %v1215
        %v1217 = vpop.xlane.xlu0 %1216
        %v1218 = vsel %vm1005, %v1210, 0.0
        %1219 = vadd.xlane.f32.xlu0 %v1218
        %v1220 = vpop.xlane.xlu0 %1219
        %v1221 = vsel %vm1005, %v1212, 0.0
        %1222 = vadd.xlane.f32.xlu0 %v1221
        %v1223 = vpop.xlane.xlu0 %1222
        %v1224 = vsel %vm1005, %v1214, 0.0
        %1225 = vadd.xlane.f32.xlu0 %v1224
        %v1226 = vpop.xlane.xlu0 %1225
        %v1227 = vrcp.pop %v1217
        %v1228 = vrcp.pop %v1220
        %v1229 = vrcp.pop %v1223
        %v1230 = vrcp.pop %v1226
        %v1231 = vmul.f32 %v1208, %v1227
        %v1232 = vmul.f32 %v1210, %v1228
        %v1233 = vmul.f32 %v1212, %v1229
        %v1234 = vmul.f32 %v1214, %v1230
        %v1235 = vpack.c.bf16 %v1231, %v1231
        %v1236 = vpack.c.bf16 %v1232, %v1232
        %v1237 = vpack.c.bf16 %v1233, %v1233
        %v1238 = vpack.c.bf16 %v1234, %v1234
        %v1240 = vsel %vm1005, %v1235, 0
        %v1243 = vsel %vm1009, %v1001, 0
        %1245 = vmatprep.subr.bf16.mxu0 0
        %1246 = vmatpush1.bf16.msra.mxu0 %v1243
        %1247 = vmatprep.subr.bf16.mxu0 0
        %1248 = vmatpush1.bf16.msra.mxu0 0
        %1249 = vmatprep.subr.bf16.mxu0 0
        %1250 = vmatpush1.bf16.msra.mxu0 0
        %1251 = vmatprep.subr.bf16.mxu0 0
        %1252 = vmatpush1.bf16.msra.mxu0 0
        %1253 = vmatprep.subr.bf16.mxu0 0
        %1254 = vmatpush1.bf16.msra.mxu0 0
        %1255 = vmatprep.subr.bf16.mxu0 0
        %1256 = vmatpush1.bf16.msra.mxu0 0
        %1257 = vmatprep.subr.bf16.mxu0 0
        %1258 = vmatpush1.bf16.msra.mxu0 0
        %1259 = vmatprep.subr.bf16.mxu0 0
        %1260 = vmatpush1.bf16.msra.mxu0 0
        %1261 = vmatprep.subr.bf16.mxu0 0
        %1262 = vmatpush1.bf16.msra.mxu0 0
        %1263 = vmatprep.subr.bf16.mxu0 0
        %1264 = vmatpush1.bf16.msra.mxu0 0
        %1265 = vmatprep.subr.bf16.mxu0 0
        %1266 = vmatpush1.bf16.msra.mxu0 0
        %1267 = vmatprep.subr.bf16.mxu0 0
        %1268 = vmatpush1.bf16.msra.mxu0 0
        %1269 = vmatprep.subr.bf16.mxu0 0
        %1270 = vmatpush1.bf16.msra.mxu0 0
        %1271 = vmatprep.subr.bf16.mxu0 0
        %1272 = vmatpush1.bf16.msra.mxu0 0
        %1273 = vmatprep.subr.bf16.mxu0 0
        %1274 = vmatpush1.bf16.msra.mxu0 0
        %1275 = vmatprep.subr.bf16.mxu0 0
        %1276 = vmatpush1.bf16.msra.mxu0 0
        %1277 = vmatprep.mubr.bf16.mxu0 0
        %1278 = vmatmul.mubr.bf16.gmra.mrb[0].mxu0 %v1240
        %v1279 = vpop.f32.mrb[0].mxu0
        %v1280 = vadd.f32 0.0, %v1279
        %v1281 = vpop.f32.mrb[0].mxu0
        %v1282 = vpop.f32.mrb[0].mxu0
        %v1283 = vpop.f32.mrb[0].mxu0
        %1284 = vdwg.mxu0
        %v1286 = vsel %vm1005, %v1236, 0
        %v1289 = vsel %vm1009, %v1002, 0
        %1291 = vmatprep.subr.bf16.mxu0 0
        %1292 = vmatpush1.bf16.msra.mxu0 %v1289
        %1293 = vmatprep.subr.bf16.mxu0 0
        %1294 = vmatpush1.bf16.msra.mxu0 0
        %1295 = vmatprep.subr.bf16.mxu0 0
        %1296 = vmatpush1.bf16.msra.mxu0 0
        %1297 = vmatprep.subr.bf16.mxu0 0
        %1298 = vmatpush1.bf16.msra.mxu0 0
        %1299 = vmatprep.subr.bf16.mxu0 0
        %1300 = vmatpush1.bf16.msra.mxu0 0
        %1301 = vmatprep.subr.bf16.mxu0 0
        %1302 = vmatpush1.bf16.msra.mxu0 0
        %1303 = vmatprep.subr.bf16.mxu0 0
        %1304 = vmatpush1.bf16.msra.mxu0 0
        %1305 = vmatprep.subr.bf16.mxu0 0
        %1306 = vmatpush1.bf16.msra.mxu0 0
        %1307 = vmatprep.subr.bf16.mxu0 0
        %1308 = vmatpush1.bf16.msra.mxu0 0
        %1309 = vmatprep.subr.bf16.mxu0 0
        %1310 = vmatpush1.bf16.msra.mxu0 0
        %1311 = vmatprep.subr.bf16.mxu0 0
        %1312 = vmatpush1.bf16.msra.mxu0 0
        %1313 = vmatprep.subr.bf16.mxu0 0
        %1314 = vmatpush1.bf16.msra.mxu0 0
        %1315 = vmatprep.subr.bf16.mxu0 0
        %1316 = vmatpush1.bf16.msra.mxu0 0
        %1317 = vmatprep.subr.bf16.mxu0 0
        %1318 = vmatpush1.bf16.msra.mxu0 0
        %1319 = vmatprep.subr.bf16.mxu0 0
        %1320 = vmatpush1.bf16.msra.mxu0 0
        %1321 = vmatprep.subr.bf16.mxu0 0
        %1322 = vmatpush1.bf16.msra.mxu0 0
        %1323 = vmatprep.mubr.bf16.mxu0 0
        %1324 = vmatmul.mubr.bf16.gmra.mrb[0].mxu0 %v1286
        %v1325 = vpop.f32.mrb[0].mxu0
        %v1326 = vadd.f32 0.0, %v1325
        %v1327 = vpop.f32.mrb[0].mxu0
        %v1328 = vpop.f32.mrb[0].mxu0
        %v1329 = vpop.f32.mrb[0].mxu0
        %1330 = vdwg.mxu0
        %v1332 = vsel %vm1005, %v1237, 0
        %v1335 = vsel %vm1009, %v1003, 0
        %1337 = vmatprep.subr.bf16.mxu0 0
        %1338 = vmatpush1.bf16.msra.mxu0 %v1335
        %1339 = vmatprep.subr.bf16.mxu0 0
        %1340 = vmatpush1.bf16.msra.mxu0 0
        %1341 = vmatprep.subr.bf16.mxu0 0
        %1342 = vmatpush1.bf16.msra.mxu0 0
        %1343 = vmatprep.subr.bf16.mxu0 0
        %1344 = vmatpush1.bf16.msra.mxu0 0
        %1345 = vmatprep.subr.bf16.mxu0 0
        %1346 = vmatpush1.bf16.msra.mxu0 0
        %1347 = vmatprep.subr.bf16.mxu0 0
        %1348 = vmatpush1.bf16.msra.mxu0 0
        %1349 = vmatprep.subr.bf16.mxu0 0
        %1350 = vmatpush1.bf16.msra.mxu0 0
        %1351 = vmatprep.subr.bf16.mxu0 0
        %1352 = vmatpush1.bf16.msra.mxu0 0
        %1353 = vmatprep.subr.bf16.mxu0 0
        %1354 = vmatpush1.bf16.msra.mxu0 0
        %1355 = vmatprep.subr.bf16.mxu0 0
        %1356 = vmatpush1.bf16.msra.mxu0 0
        %1357 = vmatprep.subr.bf16.mxu0 0
        %1358 = vmatpush1.bf16.msra.mxu0 0
        %1359 = vmatprep.subr.bf16.mxu0 0
        %1360 = vmatpush1.bf16.msra.mxu0 0
        %1361 = vmatprep.subr.bf16.mxu0 0
        %1362 = vmatpush1.bf16.msra.mxu0 0
        %1363 = vmatprep.subr.bf16.mxu0 0
        %1364 = vmatpush1.bf16.msra.mxu0 0
        %1365 = vmatprep.subr.bf16.mxu0 0
        %1366 = vmatpush1.bf16.msra.mxu0 0
        %1367 = vmatprep.subr.bf16.mxu0 0
        %1368 = vmatpush1.bf16.msra.mxu0 0
        %1369 = vmatprep.mubr.bf16.mxu0 0
        %1370 = vmatmul.mubr.bf16.gmra.mrb[0].mxu0 %v1332
        %v1371 = vpop.f32.mrb[0].mxu0
        %v1372 = vadd.f32 0.0, %v1371
        %v1373 = vpop.f32.mrb[0].mxu0
        %v1374 = vpop.f32.mrb[0].mxu0
        %v1375 = vpop.f32.mrb[0].mxu0
        %1376 = vdwg.mxu0
        %v1378 = vsel %vm1005, %v1238, 0
        %v1381 = vsel %vm1009, %v1004, 0
        %1383 = vmatprep.subr.bf16.mxu0 0
        %1384 = vmatpush1.bf16.msra.mxu0 %v1381
        %1385 = vmatprep.subr.bf16.mxu0 0
        %1386 = vmatpush1.bf16.msra.mxu0 0
        %1387 = vmatprep.subr.bf16.mxu0 0
        %1388 = vmatpush1.bf16.msra.mxu0 0
        %1389 = vmatprep.subr.bf16.mxu0 0
        %1390 = vmatpush1.bf16.msra.mxu0 0
        %1391 = vmatprep.subr.bf16.mxu0 0
        %1392 = vmatpush1.bf16.msra.mxu0 0
        %1393 = vmatprep.subr.bf16.mxu0 0
        %1394 = vmatpush1.bf16.msra.mxu0 0
        %1395 = vmatprep.subr.bf16.mxu0 0
        %1396 = vmatpush1.bf16.msra.mxu0 0
        %1397 = vmatprep.subr.bf16.mxu0 0
        %1398 = vmatpush1.bf16.msra.mxu0 0
        %1399 = vmatprep.subr.bf16.mxu0 0
        %1400 = vmatpush1.bf16.msra.mxu0 0
        %1401 = vmatprep.subr.bf16.mxu0 0
        %1402 = vmatpush1.bf16.msra.mxu0 0
        %1403 = vmatprep.subr.bf16.mxu0 0
        %1404 = vmatpush1.bf16.msra.mxu0 0
        %1405 = vmatprep.subr.bf16.mxu0 0
        %1406 = vmatpush1.bf16.msra.mxu0 0
        %1407 = vmatprep.subr.bf16.mxu0 0
        %1408 = vmatpush1.bf16.msra.mxu0 0
        %1409 = vmatprep.subr.bf16.mxu0 0
        %1410 = vmatpush1.bf16.msra.mxu0 0
        %1411 = vmatprep.subr.bf16.mxu0 0
        %1412 = vmatpush1.bf16.msra.mxu0 0
        %1413 = vmatprep.subr.bf16.mxu0 0
        %1414 = vmatpush1.bf16.msra.mxu0 0
        %1415 = vmatprep.mubr.bf16.mxu0 0
        %1416 = vmatmul.mubr.bf16.gmra.mrb[0].mxu0 %v1378
        %v1417 = vpop.f32.mrb[0].mxu0
        %v1418 = vadd.f32 0.0, %v1417
        %v1419 = vpop.f32.mrb[0].mxu0
        %v1420 = vpop.f32.mrb[0].mxu0
        %v1421 = vpop.f32.mrb[0].mxu0
        %1422 = vdwg.mxu0
        %1423 = vxpose.xlu0.b32.start [1/16] %v1280, 128
        %1424 = vxpose.xlu0.b32.cont [2/16] 0.0, 128
        %1425 = vxpose.xlu0.b32.cont [3/16] 0.0, 128
        %1426 = vxpose.xlu0.b32.cont [4/16] 0.0, 128
        %1427 = vxpose.xlu0.b32.cont [5/16] 0.0, 128
        %1428 = vxpose.xlu0.b32.cont [6/16] 0.0, 128
        %1429 = vxpose.xlu0.b32.cont [7/16] 0.0, 128
        %1430 = vxpose.xlu0.b32.cont [8/16] 0.0, 128
        %1431 = vxpose.xlu0.b32.cont [9/16] 0.0, 128
        %1432 = vxpose.xlu0.b32.cont [10/16] 0.0, 128
        %1433 = vxpose.xlu0.b32.cont [11/16] 0.0, 128
        %1434 = vxpose.xlu0.b32.cont [12/16] 0.0, 128
        %1435 = vxpose.xlu0.b32.cont [13/16] 0.0, 128
        %1436 = vxpose.xlu0.b32.cont [14/16] 0.0, 128
        %1437 = vxpose.xlu0.b32.cont [15/16] 0.0, 128
        %1438 = vxpose.xlu0.b32.end [16/16] 0.0, 128
        %v1439 = vpop.trf.xlu0
        %v1440 = vpop.trf.xlu0
        %v1441 = vpop.trf.xlu0
        %v1442 = vpop.trf.xlu0
        %v1443 = vpop.trf.xlu0
        %v1444 = vpop.trf.xlu0
        %v1445 = vpop.trf.xlu0
        %v1446 = vpop.trf.xlu0
        %v1447 = vpop.trf.xlu0
        %v1448 = vpop.trf.xlu0
        %v1449 = vpop.trf.xlu0
        %v1450 = vpop.trf.xlu0
        %v1451 = vpop.trf.xlu0
        %v1452 = vpop.trf.xlu0
        %v1453 = vpop.trf.xlu0
        %v1454 = vpop.trf.xlu0
        %1455 = vxpose.xlu0.b32.start [1/16] %v1326, 128
        %1456 = vxpose.xlu0.b32.cont [2/16] 0.0, 128
        %1457 = vxpose.xlu0.b32.cont [3/16] 0.0, 128
        %1458 = vxpose.xlu0.b32.cont [4/16] 0.0, 128
        %1459 = vxpose.xlu0.b32.cont [5/16] 0.0, 128
        %1460 = vxpose.xlu0.b32.cont [6/16] 0.0, 128
        %1461 = vxpose.xlu0.b32.cont [7/16] 0.0, 128
        %1462 = vxpose.xlu0.b32.cont [8/16] 0.0, 128
        %1463 = vxpose.xlu0.b32.cont [9/16] 0.0, 128
        %1464 = vxpose.xlu0.b32.cont [10/16] 0.0, 128
        %1465 = vxpose.xlu0.b32.cont [11/16] 0.0, 128
        %1466 = vxpose.xlu0.b32.cont [12/16] 0.0, 128
        %1467 = vxpose.xlu0.b32.cont [13/16] 0.0, 128
        %1468 = vxpose.xlu0.b32.cont [14/16] 0.0, 128
        %1469 = vxpose.xlu0.b32.cont [15/16] 0.0, 128
        %1470 = vxpose.xlu0.b32.end [16/16] 0.0, 128
        %v1471 = vpop.trf.xlu0
        %v1472 = vpop.trf.xlu0
        %v1473 = vpop.trf.xlu0
        %v1474 = vpop.trf.xlu0
        %v1475 = vpop.trf.xlu0
        %v1476 = vpop.trf.xlu0
        %v1477 = vpop.trf.xlu0
        %v1478 = vpop.trf.xlu0
        %v1479 = vpop.trf.xlu0
        %v1480 = vpop.trf.xlu0
        %v1481 = vpop.trf.xlu0
        %v1482 = vpop.trf.xlu0
        %v1483 = vpop.trf.xlu0
        %v1484 = vpop.trf.xlu0
        %v1485 = vpop.trf.xlu0
        %v1486 = vpop.trf.xlu0
        %1487 = vxpose.xlu0.b32.start [1/16] %v1372, 128
        %1488 = vxpose.xlu0.b32.cont [2/16] 0.0, 128
        %1489 = vxpose.xlu0.b32.cont [3/16] 0.0, 128
        %1490 = vxpose.xlu0.b32.cont [4/16] 0.0, 128
        %1491 = vxpose.xlu0.b32.cont [5/16] 0.0, 128
        %1492 = vxpose.xlu0.b32.cont [6/16] 0.0, 128
        %1493 = vxpose.xlu0.b32.cont [7/16] 0.0, 128
        %1494 = vxpose.xlu0.b32.cont [8/16] 0.0, 128
        %1495 = vxpose.xlu0.b32.cont [9/16] 0.0, 128
        %1496 = vxpose.xlu0.b32.cont [10/16] 0.0, 128
        %1497 = vxpose.xlu0.b32.cont [11/16] 0.0, 128
        %1498 = vxpose.xlu0.b32.cont [12/16] 0.0, 128
        %1499 = vxpose.xlu0.b32.cont [13/16] 0.0, 128
        %1500 = vxpose.xlu0.b32.cont [14/16] 0.0, 128
        %1501 = vxpose.xlu0.b32.cont [15/16] 0.0, 128
        %1502 = vxpose.xlu0.b32.end [16/16] 0.0, 128
        %v1503 = vpop.trf.xlu0
        %v1504 = vpop.trf.xlu0
        %v1505 = vpop.trf.xlu0
        %v1506 = vpop.trf.xlu0
        %v1507 = vpop.trf.xlu0
        %v1508 = vpop.trf.xlu0
        %v1509 = vpop.trf.xlu0
        %v1510 = vpop.trf.xlu0
        %v1511 = vpop.trf.xlu0
        %v1512 = vpop.trf.xlu0
        %v1513 = vpop.trf.xlu0
        %v1514 = vpop.trf.xlu0
        %v1515 = vpop.trf.xlu0
        %v1516 = vpop.trf.xlu0
        %v1517 = vpop.trf.xlu0
        %v1518 = vpop.trf.xlu0
        %1519 = vxpose.xlu0.b32.start [1/16] %v1418, 128
        %1520 = vxpose.xlu0.b32.cont [2/16] 0.0, 128
        %1521 = vxpose.xlu0.b32.cont [3/16] 0.0, 128
        %1522 = vxpose.xlu0.b32.cont [4/16] 0.0, 128
        %1523 = vxpose.xlu0.b32.cont [5/16] 0.0, 128
        %1524 = vxpose.xlu0.b32.cont [6/16] 0.0, 128
        %1525 = vxpose.xlu0.b32.cont [7/16] 0.0, 128
        %1526 = vxpose.xlu0.b32.cont [8/16] 0.0, 128
        %1527 = vxpose.xlu0.b32.cont [9/16] 0.0, 128
        %1528 = vxpose.xlu0.b32.cont [10/16] 0.0, 128
        %1529 = vxpose.xlu0.b32.cont [11/16] 0.0, 128
        %1530 = vxpose.xlu0.b32.cont [12/16] 0.0, 128
        %1531 = vxpose.xlu0.b32.cont [13/16] 0.0, 128
        %1532 = vxpose.xlu0.b32.cont [14/16] 0.0, 128
        %1533 = vxpose.xlu0.b32.cont [15/16] 0.0, 128
        %1534 = vxpose.xlu0.b32.end [16/16] 0.0, 128
        %v1535 = vpop.trf.xlu0
        %v1536 = vpop.trf.xlu0
        %v1537 = vpop.trf.xlu0
        %v1538 = vpop.trf.xlu0
        %v1539 = vpop.trf.xlu0
        %v1540 = vpop.trf.xlu0
        %v1541 = vpop.trf.xlu0
        %v1542 = vpop.trf.xlu0
        %v1543 = vpop.trf.xlu0
        %v1544 = vpop.trf.xlu0
        %v1545 = vpop.trf.xlu0
        %v1546 = vpop.trf.xlu0
        %v1547 = vpop.trf.xlu0
        %v1548 = vpop.trf.xlu0
        %v1549 = vpop.trf.xlu0
        %v1550 = vpop.trf.xlu0
        %1551 = vxpose.xlu0.b32.start [1/16] %v1439, 128
        %1552 = vxpose.xlu0.b32.cont [2/16] %v1471, 128
        %1553 = vxpose.xlu0.b32.cont [3/16] %v1503, 128
        %1554 = vxpose.xlu0.b32.cont [4/16] %v1535, 128
        %1555 = vxpose.xlu0.b32.cont [5/16] 0.0, 128
        %1556 = vxpose.xlu0.b32.cont [6/16] 0.0, 128
        %1557 = vxpose.xlu0.b32.cont [7/16] 0.0, 128
        %1558 = vxpose.xlu0.b32.cont [8/16] 0.0, 128
        %1559 = vxpose.xlu0.b32.cont [9/16] 0.0, 128
        %1560 = vxpose.xlu0.b32.cont [10/16] 0.0, 128
        %1561 = vxpose.xlu0.b32.cont [11/16] 0.0, 128
        %1562 = vxpose.xlu0.b32.cont [12/16] 0.0, 128
        %1563 = vxpose.xlu0.b32.cont [13/16] 0.0, 128
        %1564 = vxpose.xlu0.b32.cont [14/16] 0.0, 128
        %1565 = vxpose.xlu0.b32.cont [15/16] 0.0, 128
        %1566 = vxpose.xlu0.b32.end [16/16] 0.0, 128
        %v1567 = vpop.trf.xlu0
        %v1568 = vpop.trf.xlu0
        %v1569 = vpop.trf.xlu0
        %v1570 = vpop.trf.xlu0
        %v1571 = vpop.trf.xlu0
        %v1572 = vpop.trf.xlu0
        %v1573 = vpop.trf.xlu0
        %v1574 = vpop.trf.xlu0
        %v1575 = vpop.trf.xlu0
        %v1576 = vpop.trf.xlu0
        %v1577 = vpop.trf.xlu0
        %v1578 = vpop.trf.xlu0
        %v1579 = vpop.trf.xlu0
        %v1580 = vpop.trf.xlu0
        %v1581 = vpop.trf.xlu0
        %v1582 = vpop.trf.xlu0
        %1583 = vst.msk [vmem:[#allocation2] sm:$0xff] %vm510, %v1567
        %v1584 = vmul.f32 %v560, 0.35355338
        %1585 = vxpose.xlu0.b32.start [1/16] %v1584, 128
        %1586 = vxpose.xlu0.b32.cont [2/16] 0.0, 128
        %1587 = vxpose.xlu0.b32.cont [3/16] 0.0, 128
        %1588 = vxpose.xlu0.b32.cont [4/16] 0.0, 128
        %1589 = vxpose.xlu0.b32.cont [5/16] 0.0, 128
        %1590 = vxpose.xlu0.b32.cont [6/16] 0.0, 128
        %1591 = vxpose.xlu0.b32.cont [7/16] 0.0, 128
        %1592 = vxpose.xlu0.b32.cont [8/16] 0.0, 128
        %1593 = vxpose.xlu0.b32.cont [9/16] 0.0, 128
        %1594 = vxpose.xlu0.b32.cont [10/16] 0.0, 128
        %1595 = vxpose.xlu0.b32.cont [11/16] 0.0, 128
        %1596 = vxpose.xlu0.b32.cont [12/16] 0.0, 128
        %1597 = vxpose.xlu0.b32.cont [13/16] 0.0, 128
        %1598 = vxpose.xlu0.b32.cont [14/16] 0.0, 128
        %1599 = vxpose.xlu0.b32.cont [15/16] 0.0, 128
        %1600 = vxpose.xlu0.b32.end [16/16] 0.0, 128
        %v1601 = vpop.trf.xlu0
        %v1602 = vpop.trf.xlu0
        %v1603 = vpop.trf.xlu0
        %v1604 = vpop.trf.xlu0
        %v1605 = vpop.trf.xlu0
        %v1606 = vpop.trf.xlu0
        %v1607 = vpop.trf.xlu0
        %v1608 = vpop.trf.xlu0
        %v1609 = vpop.trf.xlu0
        %v1610 = vpop.trf.xlu0
        %v1611 = vpop.trf.xlu0
        %v1612 = vpop.trf.xlu0
        %v1613 = vpop.trf.xlu0
        %v1614 = vpop.trf.xlu0
        %v1615 = vpop.trf.xlu0
        %v1616 = vpop.trf.xlu0
        %1617 = vxpose.xlu0.b32.start [1/16] %v1601, 128
        %1618 = vxpose.xlu0.b32.cont [2/16] 0.0, 128
        %1619 = vxpose.xlu0.b32.cont [3/16] 0.0, 128
        %1620 = vxpose.xlu0.b32.cont [4/16] 0.0, 128
        %1621 = vxpose.xlu0.b32.cont [5/16] 0.0, 128
        %1622 = vxpose.xlu0.b32.cont [6/16] 0.0, 128
        %1623 = vxpose.xlu0.b32.cont [7/16] 0.0, 128
        %1624 = vxpose.xlu0.b32.cont [8/16] 0.0, 128
        %1625 = vxpose.xlu0.b32.cont [9/16] 0.0, 128
        %1626 = vxpose.xlu0.b32.cont [10/16] 0.0, 128
        %1627 = vxpose.xlu0.b32.cont [11/16] 0.0, 128
        %1628 = vxpose.xlu0.b32.cont [12/16] 0.0, 128
        %1629 = vxpose.xlu0.b32.cont [13/16] 0.0, 128
        %1630 = vxpose.xlu0.b32.cont [14/16] 0.0, 128
        %1631 = vxpose.xlu0.b32.cont [15/16] 0.0, 128
        %1632 = vxpose.xlu0.b32.end [16/16] 0.0, 128
        %v1633 = vpop.trf.xlu0
        %v1634 = vpop.trf.xlu0
        %v1635 = vpop.trf.xlu0
        %v1636 = vpop.trf.xlu0
        %v1637 = vpop.trf.xlu0
        %v1638 = vpop.trf.xlu0
        %v1639 = vpop.trf.xlu0
        %v1640 = vpop.trf.xlu0
        %v1641 = vpop.trf.xlu0
        %v1642 = vpop.trf.xlu0
        %v1643 = vpop.trf.xlu0
        %v1644 = vpop.trf.xlu0
        %v1645 = vpop.trf.xlu0
        %v1646 = vpop.trf.xlu0
        %v1647 = vpop.trf.xlu0
        %v1648 = vpop.trf.xlu0
        %1649 = vxpose.xlu0.b32.start [1/16] %v1602, 128
        %1650 = vxpose.xlu0.b32.cont [2/16] 0.0, 128
        %1651 = vxpose.xlu0.b32.cont [3/16] 0.0, 128
        %1652 = vxpose.xlu0.b32.cont [4/16] 0.0, 128
        %1653 = vxpose.xlu0.b32.cont [5/16] 0.0, 128
        %1654 = vxpose.xlu0.b32.cont [6/16] 0.0, 128
        %1655 = vxpose.xlu0.b32.cont [7/16] 0.0, 128
        %1656 = vxpose.xlu0.b32.cont [8/16] 0.0, 128
        %1657 = vxpose.xlu0.b32.cont [9/16] 0.0, 128
        %1658 = vxpose.xlu0.b32.cont [10/16] 0.0, 128
        %1659 = vxpose.xlu0.b32.cont [11/16] 0.0, 128
        %1660 = vxpose.xlu0.b32.cont [12/16] 0.0, 128
        %1661 = vxpose.xlu0.b32.cont [13/16] 0.0, 128
        %1662 = vxpose.xlu0.b32.cont [14/16] 0.0, 128
        %1663 = vxpose.xlu0.b32.cont [15/16] 0.0, 128
        %1664 = vxpose.xlu0.b32.end [16/16] 0.0, 128
        %v1665 = vpop.trf.xlu0
        %v1666 = vpop.trf.xlu0
        %v1667 = vpop.trf.xlu0
        %v1668 = vpop.trf.xlu0
        %v1669 = vpop.trf.xlu0
        %v1670 = vpop.trf.xlu0
        %v1671 = vpop.trf.xlu0
        %v1672 = vpop.trf.xlu0
        %v1673 = vpop.trf.xlu0
        %v1674 = vpop.trf.xlu0
        %v1675 = vpop.trf.xlu0
        %v1676 = vpop.trf.xlu0
        %v1677 = vpop.trf.xlu0
        %v1678 = vpop.trf.xlu0
        %v1679 = vpop.trf.xlu0
        %v1680 = vpop.trf.xlu0
        %1681 = vxpose.xlu0.b32.start [1/16] %v1603, 128
        %1682 = vxpose.xlu0.b32.cont [2/16] 0.0, 128
        %1683 = vxpose.xlu0.b32.cont [3/16] 0.0, 128
        %1684 = vxpose.xlu0.b32.cont [4/16] 0.0, 128
        %1685 = vxpose.xlu0.b32.cont [5/16] 0.0, 128
        %1686 = vxpose.xlu0.b32.cont [6/16] 0.0, 128
        %1687 = vxpose.xlu0.b32.cont [7/16] 0.0, 128
        %1688 = vxpose.xlu0.b32.cont [8/16] 0.0, 128
        %1689 = vxpose.xlu0.b32.cont [9/16] 0.0, 128
        %1690 = vxpose.xlu0.b32.cont [10/16] 0.0, 128
        %1691 = vxpose.xlu0.b32.cont [11/16] 0.0, 128
        %1692 = vxpose.xlu0.b32.cont [12/16] 0.0, 128
        %1693 = vxpose.xlu0.b32.cont [13/16] 0.0, 128
        %1694 = vxpose.xlu0.b32.cont [14/16] 0.0, 128
        %1695 = vxpose.xlu0.b32.cont [15/16] 0.0, 128
        %1696 = vxpose.xlu0.b32.end [16/16] 0.0, 128
        %v1697 = vpop.trf.xlu0
        %v1698 = vpop.trf.xlu0
        %v1699 = vpop.trf.xlu0
        %v1700 = vpop.trf.xlu0
        %v1701 = vpop.trf.xlu0
        %v1702 = vpop.trf.xlu0
        %v1703 = vpop.trf.xlu0
        %v1704 = vpop.trf.xlu0
        %v1705 = vpop.trf.xlu0
        %v1706 = vpop.trf.xlu0
        %v1707 = vpop.trf.xlu0
        %v1708 = vpop.trf.xlu0
        %v1709 = vpop.trf.xlu0
        %v1710 = vpop.trf.xlu0
        %v1711 = vpop.trf.xlu0
        %v1712 = vpop.trf.xlu0
        %1713 = vxpose.xlu0.b32.start [1/16] %v1604, 128
        %1714 = vxpose.xlu0.b32.cont [2/16] 0.0, 128
        %1715 = vxpose.xlu0.b32.cont [3/16] 0.0, 128
        %1716 = vxpose.xlu0.b32.cont [4/16] 0.0, 128
        %1717 = vxpose.xlu0.b32.cont [5/16] 0.0, 128
        %1718 = vxpose.xlu0.b32.cont [6/16] 0.0, 128
        %1719 = vxpose.xlu0.b32.cont [7/16] 0.0, 128
        %1720 = vxpose.xlu0.b32.cont [8/16] 0.0, 128
        %1721 = vxpose.xlu0.b32.cont [9/16] 0.0, 128
        %1722 = vxpose.xlu0.b32.cont [10/16] 0.0, 128
        %1723 = vxpose.xlu0.b32.cont [11/16] 0.0, 128
        %1724 = vxpose.xlu0.b32.cont [12/16] 0.0, 128
        %1725 = vxpose.xlu0.b32.cont [13/16] 0.0, 128
        %1726 = vxpose.xlu0.b32.cont [14/16] 0.0, 128
        %1727 = vxpose.xlu0.b32.cont [15/16] 0.0, 128
        %1728 = vxpose.xlu0.b32.end [16/16] 0.0, 128
        %v1729 = vpop.trf.xlu0
        %v1730 = vpop.trf.xlu0
        %v1731 = vpop.trf.xlu0
        %v1732 = vpop.trf.xlu0
        %v1733 = vpop.trf.xlu0
        %v1734 = vpop.trf.xlu0
        %v1735 = vpop.trf.xlu0
        %v1736 = vpop.trf.xlu0
        %v1737 = vpop.trf.xlu0
        %v1738 = vpop.trf.xlu0
        %v1739 = vpop.trf.xlu0
        %v1740 = vpop.trf.xlu0
        %v1741 = vpop.trf.xlu0
        %v1742 = vpop.trf.xlu0
        %v1743 = vpop.trf.xlu0
        %v1744 = vpop.trf.xlu0
        %v1745 = vpack.c.bf16 %v1633, %v1633
        %v1746 = vpack.c.bf16 %v1665, %v1665
        %v1747 = vpack.c.bf16 %v1697, %v1697
        %v1748 = vpack.c.bf16 %v1729, %v1729
        %1750 = vrot.lane.b32.xlu0 %v570, 96
        %v1751 = vpop.permute.xlu0 %1750
        %1753 = vxpose.xlu0.b32.start [1/16] %v1751, 128
        %1754 = vxpose.xlu0.b32.cont [2/16] 0.0, 128
        %1755 = vxpose.xlu0.b32.cont [3/16] 0.0, 128
        %1756 = vxpose.xlu0.b32.cont [4/16] 0.0, 128
        %1757 = vxpose.xlu0.b32.cont [5/16] 0.0, 128
        %1758 = vxpose.xlu0.b32.cont [6/16] 0.0, 128
        %1759 = vxpose.xlu0.b32.cont [7/16] 0.0, 128
        %1760 = vxpose.xlu0.b32.cont [8/16] 0.0, 128
        %1761 = vxpose.xlu0.b32.cont [9/16] 0.0, 128
        %1762 = vxpose.xlu0.b32.cont [10/16] 0.0, 128
        %1763 = vxpose.xlu0.b32.cont [11/16] 0.0, 128
        %1764 = vxpose.xlu0.b32.cont [12/16] 0.0, 128
        %1765 = vxpose.xlu0.b32.cont [13/16] 0.0, 128
        %1766 = vxpose.xlu0.b32.cont [14/16] 0.0, 128
        %1767 = vxpose.xlu0.b32.cont [15/16] 0.0, 128
        %1768 = vxpose.xlu0.b32.end [16/16] 0.0, 128
        %v1769 = vpop.trf.xlu0
        %v1770 = vpop.trf.xlu0
        %v1771 = vpop.trf.xlu0
        %v1772 = vpop.trf.xlu0
        %v1773 = vpop.trf.xlu0
        %v1774 = vpop.trf.xlu0
        %v1775 = vpop.trf.xlu0
        %v1776 = vpop.trf.xlu0
        %v1777 = vpop.trf.xlu0
        %v1778 = vpop.trf.xlu0
        %v1779 = vpop.trf.xlu0
        %v1780 = vpop.trf.xlu0
        %v1781 = vpop.trf.xlu0
        %v1782 = vpop.trf.xlu0
        %v1783 = vpop.trf.xlu0
        %v1784 = vpop.trf.xlu0
        %v1785 = vpack.c.bf16 %v1769, %v1769
        %v1786 = vpack.c.bf16 %v1770, %v1770
        %v1787 = vpack.c.bf16 %v1771, %v1771
        %v1788 = vpack.c.bf16 %v1772, %v1772
        %1789 = vxpose.xlu0.b32.start [1/16] %v633, 128
        %1790 = vxpose.xlu0.b32.cont [2/16] 0.0, 128
        %1791 = vxpose.xlu0.b32.cont [3/16] 0.0, 128
        %1792 = vxpose.xlu0.b32.cont [4/16] 0.0, 128
        %1793 = vxpose.xlu0.b32.cont [5/16] 0.0, 128
        %1794 = vxpose.xlu0.b32.cont [6/16] 0.0, 128
        %1795 = vxpose.xlu0.b32.cont [7/16] 0.0, 128
        %1796 = vxpose.xlu0.b32.cont [8/16] 0.0, 128
        %1797 = vxpose.xlu0.b32.cont [9/16] 0.0, 128
        %1798 = vxpose.xlu0.b32.cont [10/16] 0.0, 128
        %1799 = vxpose.xlu0.b32.cont [11/16] 0.0, 128
        %1800 = vxpose.xlu0.b32.cont [12/16] 0.0, 128
        %1801 = vxpose.xlu0.b32.cont [13/16] 0.0, 128
        %1802 = vxpose.xlu0.b32.cont [14/16] 0.0, 128
        %1803 = vxpose.xlu0.b32.cont [15/16] 0.0, 128
        %1804 = vxpose.xlu0.b32.end [16/16] 0.0, 128
        %v1805 = vpop.trf.xlu0
        %v1806 = vpop.trf.xlu0
        %v1807 = vpop.trf.xlu0
        %v1808 = vpop.trf.xlu0
        %v1809 = vpop.trf.xlu0
        %v1810 = vpop.trf.xlu0
        %v1811 = vpop.trf.xlu0
        %v1812 = vpop.trf.xlu0
        %v1813 = vpop.trf.xlu0
        %v1814 = vpop.trf.xlu0
        %v1815 = vpop.trf.xlu0
        %v1816 = vpop.trf.xlu0
        %v1817 = vpop.trf.xlu0
        %v1818 = vpop.trf.xlu0
        %v1819 = vpop.trf.xlu0
        %v1820 = vpop.trf.xlu0
        %1821 = vxpose.xlu0.b32.start [1/16] %v1805, 128
        %1822 = vxpose.xlu0.b32.cont [2/16] 0.0, 128
        %1823 = vxpose.xlu0.b32.cont [3/16] 0.0, 128
        %1824 = vxpose.xlu0.b32.cont [4/16] 0.0, 128
        %1825 = vxpose.xlu0.b32.cont [5/16] 0.0, 128
        %1826 = vxpose.xlu0.b32.cont [6/16] 0.0, 128
        %1827 = vxpose.xlu0.b32.cont [7/16] 0.0, 128
        %1828 = vxpose.xlu0.b32.cont [8/16] 0.0, 128
        %1829 = vxpose.xlu0.b32.cont [9/16] 0.0, 128
        %1830 = vxpose.xlu0.b32.cont [10/16] 0.0, 128
        %1831 = vxpose.xlu0.b32.cont [11/16] 0.0, 128
        %1832 = vxpose.xlu0.b32.cont [12/16] 0.0, 128
        %1833 = vxpose.xlu0.b32.cont [13/16] 0.0, 128
        %1834 = vxpose.xlu0.b32.cont [14/16] 0.0, 128
        %1835 = vxpose.xlu0.b32.cont [15/16] 0.0, 128
        %1836 = vxpose.xlu0.b32.end [16/16] 0.0, 128
        %v1837 = vpop.trf.xlu0
        %v1838 = vpop.trf.xlu0
        %v1839 = vpop.trf.xlu0
        %v1840 = vpop.trf.xlu0
        %v1841 = vpop.trf.xlu0
        %v1842 = vpop.trf.xlu0
        %v1843 = vpop.trf.xlu0
        %v1844 = vpop.trf.xlu0
        %v1845 = vpop.trf.xlu0
        %v1846 = vpop.trf.xlu0
        %v1847 = vpop.trf.xlu0
        %v1848 = vpop.trf.xlu0
        %v1849 = vpop.trf.xlu0
        %v1850 = vpop.trf.xlu0
        %v1851 = vpop.trf.xlu0
        %v1852 = vpop.trf.xlu0
        %1853 = vxpose.xlu0.b32.start [1/16] %v1806, 128
        %1854 = vxpose.xlu0.b32.cont [2/16] 0.0, 128
        %1855 = vxpose.xlu0.b32.cont [3/16] 0.0, 128
        %1856 = vxpose.xlu0.b32.cont [4/16] 0.0, 128
        %1857 = vxpose.xlu0.b32.cont [5/16] 0.0, 128
        %1858 = vxpose.xlu0.b32.cont [6/16] 0.0, 128
        %1859 = vxpose.xlu0.b32.cont [7/16] 0.0, 128
        %1860 = vxpose.xlu0.b32.cont [8/16] 0.0, 128
        %1861 = vxpose.xlu0.b32.cont [9/16] 0.0, 128
        %1862 = vxpose.xlu0.b32.cont [10/16] 0.0, 128
        %1863 = vxpose.xlu0.b32.cont [11/16] 0.0, 128
        %1864 = vxpose.xlu0.b32.cont [12/16] 0.0, 128
        %1865 = vxpose.xlu0.b32.cont [13/16] 0.0, 128
        %1866 = vxpose.xlu0.b32.cont [14/16] 0.0, 128
        %1867 = vxpose.xlu0.b32.cont [15/16] 0.0, 128
        %1868 = vxpose.xlu0.b32.end [16/16] 0.0, 128
        %v1869 = vpop.trf.xlu0
        %v1870 = vpop.trf.xlu0
        %v1871 = vpop.trf.xlu0
        %v1872 = vpop.trf.xlu0
        %v1873 = vpop.trf.xlu0
        %v1874 = vpop.trf.xlu0
        %v1875 = vpop.trf.xlu0
        %v1876 = vpop.trf.xlu0
        %v1877 = vpop.trf.xlu0
        %v1878 = vpop.trf.xlu0
        %v1879 = vpop.trf.xlu0
        %v1880 = vpop.trf.xlu0
        %v1881 = vpop.trf.xlu0
        %v1882 = vpop.trf.xlu0
        %v1883 = vpop.trf.xlu0
        %v1884 = vpop.trf.xlu0
        %1885 = vxpose.xlu0.b32.start [1/16] %v1807, 128
        %1886 = vxpose.xlu0.b32.cont [2/16] 0.0, 128
        %1887 = vxpose.xlu0.b32.cont [3/16] 0.0, 128
        %1888 = vxpose.xlu0.b32.cont [4/16] 0.0, 128
        %1889 = vxpose.xlu0.b32.cont [5/16] 0.0, 128
        %1890 = vxpose.xlu0.b32.cont [6/16] 0.0, 128
        %1891 = vxpose.xlu0.b32.cont [7/16] 0.0, 128
        %1892 = vxpose.xlu0.b32.cont [8/16] 0.0, 128
        %1893 = vxpose.xlu0.b32.cont [9/16] 0.0, 128
        %1894 = vxpose.xlu0.b32.cont [10/16] 0.0, 128
        %1895 = vxpose.xlu0.b32.cont [11/16] 0.0, 128
        %1896 = vxpose.xlu0.b32.cont [12/16] 0.0, 128
        %1897 = vxpose.xlu0.b32.cont [13/16] 0.0, 128
        %1898 = vxpose.xlu0.b32.cont [14/16] 0.0, 128
        %1899 = vxpose.xlu0.b32.cont [15/16] 0.0, 128
        %1900 = vxpose.xlu0.b32.end [16/16] 0.0, 128
        %v1901 = vpop.trf.xlu0
        %v1902 = vpop.trf.xlu0
        %v1903 = vpop.trf.xlu0
        %v1904 = vpop.trf.xlu0
        %v1905 = vpop.trf.xlu0
        %v1906 = vpop.trf.xlu0
        %v1907 = vpop.trf.xlu0
        %v1908 = vpop.trf.xlu0
        %v1909 = vpop.trf.xlu0
        %v1910 = vpop.trf.xlu0
        %v1911 = vpop.trf.xlu0
        %v1912 = vpop.trf.xlu0
        %v1913 = vpop.trf.xlu0
        %v1914 = vpop.trf.xlu0
        %v1915 = vpop.trf.xlu0
        %v1916 = vpop.trf.xlu0
        %1917 = vxpose.xlu0.b32.start [1/16] %v1808, 128
        %1918 = vxpose.xlu0.b32.cont [2/16] 0.0, 128
        %1919 = vxpose.xlu0.b32.cont [3/16] 0.0, 128
        %1920 = vxpose.xlu0.b32.cont [4/16] 0.0, 128
        %1921 = vxpose.xlu0.b32.cont [5/16] 0.0, 128
        %1922 = vxpose.xlu0.b32.cont [6/16] 0.0, 128
        %1923 = vxpose.xlu0.b32.cont [7/16] 0.0, 128
        %1924 = vxpose.xlu0.b32.cont [8/16] 0.0, 128
        %1925 = vxpose.xlu0.b32.cont [9/16] 0.0, 128
        %1926 = vxpose.xlu0.b32.cont [10/16] 0.0, 128
        %1927 = vxpose.xlu0.b32.cont [11/16] 0.0, 128
        %1928 = vxpose.xlu0.b32.cont [12/16] 0.0, 128
        %1929 = vxpose.xlu0.b32.cont [13/16] 0.0, 128
        %1930 = vxpose.xlu0.b32.cont [14/16] 0.0, 128
        %1931 = vxpose.xlu0.b32.cont [15/16] 0.0, 128
        %1932 = vxpose.xlu0.b32.end [16/16] 0.0, 128
        %v1933 = vpop.trf.xlu0
        %v1934 = vpop.trf.xlu0
        %v1935 = vpop.trf.xlu0
        %v1936 = vpop.trf.xlu0
        %v1937 = vpop.trf.xlu0
        %v1938 = vpop.trf.xlu0
        %v1939 = vpop.trf.xlu0
        %v1940 = vpop.trf.xlu0
        %v1941 = vpop.trf.xlu0
        %v1942 = vpop.trf.xlu0
        %v1943 = vpop.trf.xlu0
        %v1944 = vpop.trf.xlu0
        %v1945 = vpop.trf.xlu0
        %v1946 = vpop.trf.xlu0
        %v1947 = vpop.trf.xlu0
        %v1948 = vpop.trf.xlu0
        %v1949 = vpack.c.bf16 %v1837, %v1837
        %v1950 = vpack.c.bf16 %v1869, %v1869
        %v1951 = vpack.c.bf16 %v1901, %v1901
        %v1952 = vpack.c.bf16 %v1933, %v1933
        %v1954 = vsel %vm1005, %v1745, 0
        %v1957 = vsel %vm1009, %v1785, 0
        %1959 = vmatprep.subr.bf16.mxu0 0
        %1960 = vmatpush1.bf16.msra.mxu0 %v1957
        %1961 = vmatprep.subr.bf16.mxu0 0
        %1962 = vmatpush1.bf16.msra.mxu0 0
        %1963 = vmatprep.subr.bf16.mxu0 0
        %1964 = vmatpush1.bf16.msra.mxu0 0
        %1965 = vmatprep.subr.bf16.mxu0 0
        %1966 = vmatpush1.bf16.msra.mxu0 0
        %1967 = vmatprep.subr.bf16.mxu0 0
        %1968 = vmatpush1.bf16.msra.mxu0 0
        %1969 = vmatprep.subr.bf16.mxu0 0
        %1970 = vmatpush1.bf16.msra.mxu0 0
        %1971 = vmatprep.subr.bf16.mxu0 0
        %1972 = vmatpush1.bf16.msra.mxu0 0
        %1973 = vmatprep.subr.bf16.mxu0 0
        %1974 = vmatpush1.bf16.msra.mxu0 0
        %1975 = vmatprep.subr.bf16.mxu0 0
        %1976 = vmatpush1.bf16.msra.mxu0 0
        %1977 = vmatprep.subr.bf16.mxu0 0
        %1978 = vmatpush1.bf16.msra.mxu0 0
        %1979 = vmatprep.subr.bf16.mxu0 0
        %1980 = vmatpush1.bf16.msra.mxu0 0
        %1981 = vmatprep.subr.bf16.mxu0 0
        %1982 = vmatpush1.bf16.msra.mxu0 0
        %1983 = vmatprep.subr.bf16.mxu0 0
        %1984 = vmatpush1.bf16.msra.mxu0 0
        %1985 = vmatprep.subr.bf16.mxu0 0
        %1986 = vmatpush1.bf16.msra.mxu0 0
        %1987 = vmatprep.subr.bf16.mxu0 0
        %1988 = vmatpush1.bf16.msra.mxu0 0
        %1989 = vmatprep.subr.bf16.mxu0 0
        %1990 = vmatpush1.bf16.msra.mxu0 0
        %1991 = vmatprep.mubr.bf16.mxu0 0
        %1992 = vmatmul.mubr.bf16.gmra.mrb[0].mxu0 %v1954
        %v1993 = vpop.f32.mrb[0].mxu0
        %v1994 = vadd.f32 0.0, %v1993
        %v1995 = vpop.f32.mrb[0].mxu0
        %v1996 = vpop.f32.mrb[0].mxu0
        %v1997 = vpop.f32.mrb[0].mxu0
        %1998 = vdwg.mxu0
        %v2000 = vsel %vm1005, %v1746, 0
        %v2003 = vsel %vm1009, %v1786, 0
        %2005 = vmatprep.subr.bf16.mxu0 0
        %2006 = vmatpush1.bf16.msra.mxu0 %v2003
        %2007 = vmatprep.subr.bf16.mxu0 0
        %2008 = vmatpush1.bf16.msra.mxu0 0
        %2009 = vmatprep.subr.bf16.mxu0 0
        %2010 = vmatpush1.bf16.msra.mxu0 0
        %2011 = vmatprep.subr.bf16.mxu0 0
        %2012 = vmatpush1.bf16.msra.mxu0 0
        %2013 = vmatprep.subr.bf16.mxu0 0
        %2014 = vmatpush1.bf16.msra.mxu0 0
        %2015 = vmatprep.subr.bf16.mxu0 0
        %2016 = vmatpush1.bf16.msra.mxu0 0
        %2017 = vmatprep.subr.bf16.mxu0 0
        %2018 = vmatpush1.bf16.msra.mxu0 0
        %2019 = vmatprep.subr.bf16.mxu0 0
        %2020 = vmatpush1.bf16.msra.mxu0 0
        %2021 = vmatprep.subr.bf16.mxu0 0
        %2022 = vmatpush1.bf16.msra.mxu0 0
        %2023 = vmatprep.subr.bf16.mxu0 0
        %2024 = vmatpush1.bf16.msra.mxu0 0
        %2025 = vmatprep.subr.bf16.mxu0 0
        %2026 = vmatpush1.bf16.msra.mxu0 0
        %2027 = vmatprep.subr.bf16.mxu0 0
        %2028 = vmatpush1.bf16.msra.mxu0 0
        %2029 = vmatprep.subr.bf16.mxu0 0
        %2030 = vmatpush1.bf16.msra.mxu0 0
        %2031 = vmatprep.subr.bf16.mxu0 0
        %2032 = vmatpush1.bf16.msra.mxu0 0
        %2033 = vmatprep.subr.bf16.mxu0 0
        %2034 = vmatpush1.bf16.msra.mxu0 0
        %2035 = vmatprep.subr.bf16.mxu0 0
        %2036 = vmatpush1.bf16.msra.mxu0 0
        %2037 = vmatprep.mubr.bf16.mxu0 0
        %2038 = vmatmul.mubr.bf16.gmra.mrb[0].mxu0 %v2000
        %v2039 = vpop.f32.mrb[0].mxu0
        %v2040 = vadd.f32 0.0, %v2039
        %v2041 = vpop.f32.mrb[0].mxu0
        %v2042 = vpop.f32.mrb[0].mxu0
        %v2043 = vpop.f32.mrb[0].mxu0
        %2044 = vdwg.mxu0
        %v2046 = vsel %vm1005, %v1747, 0
        %v2049 = vsel %vm1009, %v1787, 0
        %2051 = vmatprep.subr.bf16.mxu0 0
        %2052 = vmatpush1.bf16.msra.mxu0 %v2049
        %2053 = vmatprep.subr.bf16.mxu0 0
        %2054 = vmatpush1.bf16.msra.mxu0 0
        %2055 = vmatprep.subr.bf16.mxu0 0
        %2056 = vmatpush1.bf16.msra.mxu0 0
        %2057 = vmatprep.subr.bf16.mxu0 0
        %2058 = vmatpush1.bf16.msra.mxu0 0
        %2059 = vmatprep.subr.bf16.mxu0 0
        %2060 = vmatpush1.bf16.msra.mxu0 0
        %2061 = vmatprep.subr.bf16.mxu0 0
        %2062 = vmatpush1.bf16.msra.mxu0 0
        %2063 = vmatprep.subr.bf16.mxu0 0
        %2064 = vmatpush1.bf16.msra.mxu0 0
        %2065 = vmatprep.subr.bf16.mxu0 0
        %2066 = vmatpush1.bf16.msra.mxu0 0
        %2067 = vmatprep.subr.bf16.mxu0 0
        %2068 = vmatpush1.bf16.msra.mxu0 0
        %2069 = vmatprep.subr.bf16.mxu0 0
        %2070 = vmatpush1.bf16.msra.mxu0 0
        %2071 = vmatprep.subr.bf16.mxu0 0
        %2072 = vmatpush1.bf16.msra.mxu0 0
        %2073 = vmatprep.subr.bf16.mxu0 0
        %2074 = vmatpush1.bf16.msra.mxu0 0
        %2075 = vmatprep.subr.bf16.mxu0 0
        %2076 = vmatpush1.bf16.msra.mxu0 0
        %2077 = vmatprep.subr.bf16.mxu0 0
        %2078 = vmatpush1.bf16.msra.mxu0 0
        %2079 = vmatprep.subr.bf16.mxu0 0
        %2080 = vmatpush1.bf16.msra.mxu0 0
        %2081 = vmatprep.subr.bf16.mxu0 0
        %2082 = vmatpush1.bf16.msra.mxu0 0
        %2083 = vmatprep.mubr.bf16.mxu0 0
        %2084 = vmatmul.mubr.bf16.gmra.mrb[0].mxu0 %v2046
        %v2085 = vpop.f32.mrb[0].mxu0
        %v2086 = vadd.f32 0.0, %v2085
        %v2087 = vpop.f32.mrb[0].mxu0
        %v2088 = vpop.f32.mrb[0].mxu0
        %v2089 = vpop.f32.mrb[0].mxu0
        %2090 = vdwg.mxu0
        %v2092 = vsel %vm1005, %v1748, 0
        %v2095 = vsel %vm1009, %v1788, 0
        %2097 = vmatprep.subr.bf16.mxu0 0
        %2098 = vmatpush1.bf16.msra.mxu0 %v2095
        %2099 = vmatprep.subr.bf16.mxu0 0
        %2100 = vmatpush1.bf16.msra.mxu0 0
        %2101 = vmatprep.subr.bf16.mxu0 0
        %2102 = vmatpush1.bf16.msra.mxu0 0
        %2103 = vmatprep.subr.bf16.mxu0 0
        %2104 = vmatpush1.bf16.msra.mxu0 0
        %2105 = vmatprep.subr.bf16.mxu0 0
        %2106 = vmatpush1.bf16.msra.mxu0 0
        %2107 = vmatprep.subr.bf16.mxu0 0
        %2108 = vmatpush1.bf16.msra.mxu0 0
        %2109 = vmatprep.subr.bf16.mxu0 0
        %2110 = vmatpush1.bf16.msra.mxu0 0
        %2111 = vmatprep.subr.bf16.mxu0 0
        %2112 = vmatpush1.bf16.msra.mxu0 0
        %2113 = vmatprep.subr.bf16.mxu0 0
        %2114 = vmatpush1.bf16.msra.mxu0 0
        %2115 = vmatprep.subr.bf16.mxu0 0
        %2116 = vmatpush1.bf16.msra.mxu0 0
        %2117 = vmatprep.subr.bf16.mxu0 0
        %2118 = vmatpush1.bf16.msra.mxu0 0
        %2119 = vmatprep.subr.bf16.mxu0 0
        %2120 = vmatpush1.bf16.msra.mxu0 0
        %2121 = vmatprep.subr.bf16.mxu0 0
        %2122 = vmatpush1.bf16.msra.mxu0 0
        %2123 = vmatprep.subr.bf16.mxu0 0
        %2124 = vmatpush1.bf16.msra.mxu0 0
        %2125 = vmatprep.subr.bf16.mxu0 0
        %2126 = vmatpush1.bf16.msra.mxu0 0
        %2127 = vmatprep.subr.bf16.mxu0 0
        %2128 = vmatpush1.bf16.msra.mxu0 0
        %2129 = vmatprep.mubr.bf16.mxu0 0
        %2130 = vmatmul.mubr.bf16.gmra.mrb[0].mxu0 %v2092
        %v2131 = vpop.f32.mrb[0].mxu0
        %v2132 = vadd.f32 0.0, %v2131
        %v2133 = vpop.f32.mrb[0].mxu0
        %v2134 = vpop.f32.mrb[0].mxu0
        %v2135 = vpop.f32.mrb[0].mxu0
        %2136 = vdwg.mxu0
        %v2137 = vsel %vm1005, %v1994, -inf
        %2138 = vmax.xlane.f32.xlu0 %v2137
        %v2139 = vpop.xlane.xlu0 %2138
        %v2140 = vsel %vm1005, %v2040, -inf
        %2141 = vmax.xlane.f32.xlu0 %v2140
        %v2142 = vpop.xlane.xlu0 %2141
        %v2143 = vsel %vm1005, %v2086, -inf
        %2144 = vmax.xlane.f32.xlu0 %v2143
        %v2145 = vpop.xlane.xlu0 %2144
        %v2146 = vsel %vm1005, %v2132, -inf
        %2147 = vmax.xlane.f32.xlu0 %v2146
        %v2148 = vpop.xlane.xlu0 %2147
        %v2149 = vsub.f32 %v1994, %v2139
        %v2150 = vsub.f32 %v2040, %v2142
        %v2151 = vsub.f32 %v2086, %v2145
        %v2152 = vsub.f32 %v2132, %v2148
        %v2153 = vmul.f32 %v2149, 1.442695
        %v2154 = vpow.pop %v2153
        %v2155 = vmul.f32 %v2150, 1.442695
        %v2156 = vpow.pop %v2155
        %v2157 = vmul.f32 %v2151, 1.442695
        %v2158 = vpow.pop %v2157
        %v2159 = vmul.f32 %v2152, 1.442695
        %v2160 = vpow.pop %v2159
        %v2161 = vsel %vm1005, %v2154, 0.0
        %2162 = vadd.xlane.f32.xlu0 %v2161
        %v2163 = vpop.xlane.xlu0 %2162
        %v2164 = vsel %vm1005, %v2156, 0.0
        %2165 = vadd.xlane.f32.xlu0 %v2164
        %v2166 = vpop.xlane.xlu0 %2165
        %v2167 = vsel %vm1005, %v2158, 0.0
        %2168 = vadd.xlane.f32.xlu0 %v2167
        %v2169 = vpop.xlane.xlu0 %2168
        %v2170 = vsel %vm1005, %v2160, 0.0
        %2171 = vadd.xlane.f32.xlu0 %v2170
        %v2172 = vpop.xlane.xlu0 %2171
        %v2173 = vrcp.pop %v2163
        %v2174 = vrcp.pop %v2166
        %v2175 = vrcp.pop %v2169
        %v2176 = vrcp.pop %v2172
        %v2177 = vmul.f32 %v2154, %v2173
        %v2178 = vmul.f32 %v2156, %v2174
        %v2179 = vmul.f32 %v2158, %v2175
        %v2180 = vmul.f32 %v2160, %v2176
        %v2181 = vpack.c.bf16 %v2177, %v2177
        %v2182 = vpack.c.bf16 %v2178, %v2178
        %v2183 = vpack.c.bf16 %v2179, %v2179
        %v2184 = vpack.c.bf16 %v2180, %v2180
        %v2186 = vsel %vm1005, %v2181, 0
        %v2189 = vsel %vm1009, %v1949, 0
        %2191 = vmatprep.subr.bf16.mxu0 0
        %2192 = vmatpush1.bf16.msra.mxu0 %v2189
        %2193 = vmatprep.subr.bf16.mxu0 0
        %2194 = vmatpush1.bf16.msra.mxu0 0
        %2195 = vmatprep.subr.bf16.mxu0 0
        %2196 = vmatpush1.bf16.msra.mxu0 0
        %2197 = vmatprep.subr.bf16.mxu0 0
        %2198 = vmatpush1.bf16.msra.mxu0 0
        %2199 = vmatprep.subr.bf16.mxu0 0
        %2200 = vmatpush1.bf16.msra.mxu0 0
        %2201 = vmatprep.subr.bf16.mxu0 0
        %2202 = vmatpush1.bf16.msra.mxu0 0
        %2203 = vmatprep.subr.bf16.mxu0 0
        %2204 = vmatpush1.bf16.msra.mxu0 0
        %2205 = vmatprep.subr.bf16.mxu0 0
        %2206 = vmatpush1.bf16.msra.mxu0 0
        %2207 = vmatprep.subr.bf16.mxu0 0
        %2208 = vmatpush1.bf16.msra.mxu0 0
        %2209 = vmatprep.subr.bf16.mxu0 0
        %2210 = vmatpush1.bf16.msra.mxu0 0
        %2211 = vmatprep.subr.bf16.mxu0 0
        %2212 = vmatpush1.bf16.msra.mxu0 0
        %2213 = vmatprep.subr.bf16.mxu0 0
        %2214 = vmatpush1.bf16.msra.mxu0 0
        %2215 = vmatprep.subr.bf16.mxu0 0
        %2216 = vmatpush1.bf16.msra.mxu0 0
        %2217 = vmatprep.subr.bf16.mxu0 0
        %2218 = vmatpush1.bf16.msra.mxu0 0
        %2219 = vmatprep.subr.bf16.mxu0 0
        %2220 = vmatpush1.bf16.msra.mxu0 0
        %2221 = vmatprep.subr.bf16.mxu0 0
        %2222 = vmatpush1.bf16.msra.mxu0 0
        %2223 = vmatprep.mubr.bf16.mxu0 0
        %2224 = vmatmul.mubr.bf16.gmra.mrb[0].mxu0 %v2186
        %v2225 = vpop.f32.mrb[0].mxu0
        %v2226 = vadd.f32 0.0, %v2225
        %v2227 = vpop.f32.mrb[0].mxu0
        %v2228 = vpop.f32.mrb[0].mxu0
        %v2229 = vpop.f32.mrb[0].mxu0
        %2230 = vdwg.mxu0
        %v2232 = vsel %vm1005, %v2182, 0
        %v2235 = vsel %vm1009, %v1950, 0
        %2237 = vmatprep.subr.bf16.mxu0 0
        %2238 = vmatpush1.bf16.msra.mxu0 %v2235
        %2239 = vmatprep.subr.bf16.mxu0 0
        %2240 = vmatpush1.bf16.msra.mxu0 0
        %2241 = vmatprep.subr.bf16.mxu0 0
        %2242 = vmatpush1.bf16.msra.mxu0 0
        %2243 = vmatprep.subr.bf16.mxu0 0
        %2244 = vmatpush1.bf16.msra.mxu0 0
        %2245 = vmatprep.subr.bf16.mxu0 0
        %2246 = vmatpush1.bf16.msra.mxu0 0
        %2247 = vmatprep.subr.bf16.mxu0 0
        %2248 = vmatpush1.bf16.msra.mxu0 0
        %2249 = vmatprep.subr.bf16.mxu0 0
        %2250 = vmatpush1.bf16.msra.mxu0 0
        %2251 = vmatprep.subr.bf16.mxu0 0
        %2252 = vmatpush1.bf16.msra.mxu0 0
        %2253 = vmatprep.subr.bf16.mxu0 0
        %2254 = vmatpush1.bf16.msra.mxu0 0
        %2255 = vmatprep.subr.bf16.mxu0 0
        %2256 = vmatpush1.bf16.msra.mxu0 0
        %2257 = vmatprep.subr.bf16.mxu0 0
        %2258 = vmatpush1.bf16.msra.mxu0 0
        %2259 = vmatprep.subr.bf16.mxu0 0
        %2260 = vmatpush1.bf16.msra.mxu0 0
        %2261 = vmatprep.subr.bf16.mxu0 0
        %2262 = vmatpush1.bf16.msra.mxu0 0
        %2263 = vmatprep.subr.bf16.mxu0 0
        %2264 = vmatpush1.bf16.msra.mxu0 0
        %2265 = vmatprep.subr.bf16.mxu0 0
        %2266 = vmatpush1.bf16.msra.mxu0 0
        %2267 = vmatprep.subr.bf16.mxu0 0
        %2268 = vmatpush1.bf16.msra.mxu0 0
        %2269 = vmatprep.mubr.bf16.mxu0 0
        %2270 = vmatmul.mubr.bf16.gmra.mrb[0].mxu0 %v2232
        %v2271 = vpop.f32.mrb[0].mxu0
        %v2272 = vadd.f32 0.0, %v2271
        %v2273 = vpop.f32.mrb[0].mxu0
        %v2274 = vpop.f32.mrb[0].mxu0
        %v2275 = vpop.f32.mrb[0].mxu0
        %2276 = vdwg.mxu0
        %v2278 = vsel %vm1005, %v2183, 0
        %v2281 = vsel %vm1009, %v1951, 0
        %2283 = vmatprep.subr.bf16.mxu0 0
        %2284 = vmatpush1.bf16.msra.mxu0 %v2281
        %2285 = vmatprep.subr.bf16.mxu0 0
        %2286 = vmatpush1.bf16.msra.mxu0 0
        %2287 = vmatprep.subr.bf16.mxu0 0
        %2288 = vmatpush1.bf16.msra.mxu0 0
        %2289 = vmatprep.subr.bf16.mxu0 0
        %2290 = vmatpush1.bf16.msra.mxu0 0
        %2291 = vmatprep.subr.bf16.mxu0 0
        %2292 = vmatpush1.bf16.msra.mxu0 0
        %2293 = vmatprep.subr.bf16.mxu0 0
        %2294 = vmatpush1.bf16.msra.mxu0 0
        %2295 = vmatprep.subr.bf16.mxu0 0
        %2296 = vmatpush1.bf16.msra.mxu0 0
        %2297 = vmatprep.subr.bf16.mxu0 0
        %2298 = vmatpush1.bf16.msra.mxu0 0
        %2299 = vmatprep.subr.bf16.mxu0 0
        %2300 = vmatpush1.bf16.msra.mxu0 0
        %2301 = vmatprep.subr.bf16.mxu0 0
        %2302 = vmatpush1.bf16.msra.mxu0 0
        %2303 = vmatprep.subr.bf16.mxu0 0
        %2304 = vmatpush1.bf16.msra.mxu0 0
        %2305 = vmatprep.subr.bf16.mxu0 0
        %2306 = vmatpush1.bf16.msra.mxu0 0
        %2307 = vmatprep.subr.bf16.mxu0 0
        %2308 = vmatpush1.bf16.msra.mxu0 0
        %2309 = vmatprep.subr.bf16.mxu0 0
        %2310 = vmatpush1.bf16.msra.mxu0 0
        %2311 = vmatprep.subr.bf16.mxu0 0
        %2312 = vmatpush1.bf16.msra.mxu0 0
        %2313 = vmatprep.subr.bf16.mxu0 0
        %2314 = vmatpush1.bf16.msra.mxu0 0
        %2315 = vmatprep.mubr.bf16.mxu0 0
        %2316 = vmatmul.mubr.bf16.gmra.mrb[0].mxu0 %v2278
        %v2317 = vpop.f32.mrb[0].mxu0
        %v2318 = vadd.f32 0.0, %v2317
        %v2319 = vpop.f32.mrb[0].mxu0
        %v2320 = vpop.f32.mrb[0].mxu0
        %v2321 = vpop.f32.mrb[0].mxu0
        %2322 = vdwg.mxu0
        %v2324 = vsel %vm1005, %v2184, 0
        %v2327 = vsel %vm1009, %v1952, 0
        %2329 = vmatprep.subr.bf16.mxu0 0
        %2330 = vmatpush1.bf16.msra.mxu0 %v2327
        %2331 = vmatprep.subr.bf16.mxu0 0
        %2332 = vmatpush1.bf16.msra.mxu0 0
        %2333 = vmatprep.subr.bf16.mxu0 0
        %2334 = vmatpush1.bf16.msra.mxu0 0
        %2335 = vmatprep.subr.bf16.mxu0 0
        %2336 = vmatpush1.bf16.msra.mxu0 0
        %2337 = vmatprep.subr.bf16.mxu0 0
        %2338 = vmatpush1.bf16.msra.mxu0 0
        %2339 = vmatprep.subr.bf16.mxu0 0
        %2340 = vmatpush1.bf16.msra.mxu0 0
        %2341 = vmatprep.subr.bf16.mxu0 0
        %2342 = vmatpush1.bf16.msra.mxu0 0
        %2343 = vmatprep.subr.bf16.mxu0 0
        %2344 = vmatpush1.bf16.msra.mxu0 0
        %2345 = vmatprep.subr.bf16.mxu0 0
        %2346 = vmatpush1.bf16.msra.mxu0 0
        %2347 = vmatprep.subr.bf16.mxu0 0
        %2348 = vmatpush1.bf16.msra.mxu0 0
        %2349 = vmatprep.subr.bf16.mxu0 0
        %2350 = vmatpush1.bf16.msra.mxu0 0
        %2351 = vmatprep.subr.bf16.mxu0 0
        %2352 = vmatpush1.bf16.msra.mxu0 0
        %2353 = vmatprep.subr.bf16.mxu0 0
        %2354 = vmatpush1.bf16.msra.mxu0 0
        %2355 = vmatprep.subr.bf16.mxu0 0
        %2356 = vmatpush1.bf16.msra.mxu0 0
        %2357 = vmatprep.subr.bf16.mxu0 0
        %2358 = vmatpush1.bf16.msra.mxu0 0
        %2359 = vmatprep.subr.bf16.mxu0 0
        %2360 = vmatpush1.bf16.msra.mxu0 0
        %2361 = vmatprep.mubr.bf16.mxu0 0
        %2362 = vmatmul.mubr.bf16.gmra.mrb[0].mxu0 %v2324
        %v2363 = vpop.f32.mrb[0].mxu0
        %v2364 = vadd.f32 0.0, %v2363
        %v2365 = vpop.f32.mrb[0].mxu0
        %v2366 = vpop.f32.mrb[0].mxu0
        %v2367 = vpop.f32.mrb[0].mxu0
        %2368 = vdwg.mxu0
        %2369 = vxpose.xlu0.b32.start [1/16] %v2226, 128
        %2370 = vxpose.xlu0.b32.cont [2/16] 0.0, 128
        %2371 = vxpose.xlu0.b32.cont [3/16] 0.0, 128
        %2372 = vxpose.xlu0.b32.cont [4/16] 0.0, 128
        %2373 = vxpose.xlu0.b32.cont [5/16] 0.0, 128
        %2374 = vxpose.xlu0.b32.cont [6/16] 0.0, 128
        %2375 = vxpose.xlu0.b32.cont [7/16] 0.0, 128
        %2376 = vxpose.xlu0.b32.cont [8/16] 0.0, 128
        %2377 = vxpose.xlu0.b32.cont [9/16] 0.0, 128
        %2378 = vxpose.xlu0.b32.cont [10/16] 0.0, 128
        %2379 = vxpose.xlu0.b32.cont [11/16] 0.0, 128
        %2380 = vxpose.xlu0.b32.cont [12/16] 0.0, 128
        %2381 = vxpose.xlu0.b32.cont [13/16] 0.0, 128
        %2382 = vxpose.xlu0.b32.cont [14/16] 0.0, 128
        %2383 = vxpose.xlu0.b32.cont [15/16] 0.0, 128
        %2384 = vxpose.xlu0.b32.end [16/16] 0.0, 128
        %v2385 = vpop.trf.xlu0
        %v2386 = vpop.trf.xlu0
        %v2387 = vpop.trf.xlu0
        %v2388 = vpop.trf.xlu0
        %v2389 = vpop.trf.xlu0
        %v2390 = vpop.trf.xlu0
        %v2391 = vpop.trf.xlu0
        %v2392 = vpop.trf.xlu0
        %v2393 = vpop.trf.xlu0
        %v2394 = vpop.trf.xlu0
        %v2395 = vpop.trf.xlu0
        %v2396 = vpop.trf.xlu0
        %v2397 = vpop.trf.xlu0
        %v2398 = vpop.trf.xlu0
        %v2399 = vpop.trf.xlu0
        %v2400 = vpop.trf.xlu0
        %2401 = vxpose.xlu0.b32.start [1/16] %v2272, 128
        %2402 = vxpose.xlu0.b32.cont [2/16] 0.0, 128
        %2403 = vxpose.xlu0.b32.cont [3/16] 0.0, 128
        %2404 = vxpose.xlu0.b32.cont [4/16] 0.0, 128
        %2405 = vxpose.xlu0.b32.cont [5/16] 0.0, 128
        %2406 = vxpose.xlu0.b32.cont [6/16] 0.0, 128
        %2407 = vxpose.xlu0.b32.cont [7/16] 0.0, 128
        %2408 = vxpose.xlu0.b32.cont [8/16] 0.0, 128
        %2409 = vxpose.xlu0.b32.cont [9/16] 0.0, 128
        %2410 = vxpose.xlu0.b32.cont [10/16] 0.0, 128
        %2411 = vxpose.xlu0.b32.cont [11/16] 0.0, 128
        %2412 = vxpose.xlu0.b32.cont [12/16] 0.0, 128
        %2413 = vxpose.xlu0.b32.cont [13/16] 0.0, 128
        %2414 = vxpose.xlu0.b32.cont [14/16] 0.0, 128
        %2415 = vxpose.xlu0.b32.cont [15/16] 0.0, 128
        %2416 = vxpose.xlu0.b32.end [16/16] 0.0, 128
        %v2417 = vpop.trf.xlu0
        %v2418 = vpop.trf.xlu0
        %v2419 = vpop.trf.xlu0
        %v2420 = vpop.trf.xlu0
        %v2421 = vpop.trf.xlu0
        %v2422 = vpop.trf.xlu0
        %v2423 = vpop.trf.xlu0
        %v2424 = vpop.trf.xlu0
        %v2425 = vpop.trf.xlu0
        %v2426 = vpop.trf.xlu0
        %v2427 = vpop.trf.xlu0
        %v2428 = vpop.trf.xlu0
        %v2429 = vpop.trf.xlu0
        %v2430 = vpop.trf.xlu0
        %v2431 = vpop.trf.xlu0
        %v2432 = vpop.trf.xlu0
        %2433 = vxpose.xlu0.b32.start [1/16] %v2318, 128
        %2434 = vxpose.xlu0.b32.cont [2/16] 0.0, 128
        %2435 = vxpose.xlu0.b32.cont [3/16] 0.0, 128
        %2436 = vxpose.xlu0.b32.cont [4/16] 0.0, 128
        %2437 = vxpose.xlu0.b32.cont [5/16] 0.0, 128
        %2438 = vxpose.xlu0.b32.cont [6/16] 0.0, 128
        %2439 = vxpose.xlu0.b32.cont [7/16] 0.0, 128
        %2440 = vxpose.xlu0.b32.cont [8/16] 0.0, 128
        %2441 = vxpose.xlu0.b32.cont [9/16] 0.0, 128
        %2442 = vxpose.xlu0.b32.cont [10/16] 0.0, 128
        %2443 = vxpose.xlu0.b32.cont [11/16] 0.0, 128
        %2444 = vxpose.xlu0.b32.cont [12/16] 0.0, 128
        %2445 = vxpose.xlu0.b32.cont [13/16] 0.0, 128
        %2446 = vxpose.xlu0.b32.cont [14/16] 0.0, 128
        %2447 = vxpose.xlu0.b32.cont [15/16] 0.0, 128
        %2448 = vxpose.xlu0.b32.end [16/16] 0.0, 128
        %v2449 = vpop.trf.xlu0
        %v2450 = vpop.trf.xlu0
        %v2451 = vpop.trf.xlu0
        %v2452 = vpop.trf.xlu0
        %v2453 = vpop.trf.xlu0
        %v2454 = vpop.trf.xlu0
        %v2455 = vpop.trf.xlu0
        %v2456 = vpop.trf.xlu0
        %v2457 = vpop.trf.xlu0
        %v2458 = vpop.trf.xlu0
        %v2459 = vpop.trf.xlu0
        %v2460 = vpop.trf.xlu0
        %v2461 = vpop.trf.xlu0
        %v2462 = vpop.trf.xlu0
        %v2463 = vpop.trf.xlu0
        %v2464 = vpop.trf.xlu0
        %2465 = vxpose.xlu0.b32.start [1/16] %v2364, 128
        %2466 = vxpose.xlu0.b32.cont [2/16] 0.0, 128
        %2467 = vxpose.xlu0.b32.cont [3/16] 0.0, 128
        %2468 = vxpose.xlu0.b32.cont [4/16] 0.0, 128
        %2469 = vxpose.xlu0.b32.cont [5/16] 0.0, 128
        %2470 = vxpose.xlu0.b32.cont [6/16] 0.0, 128
        %2471 = vxpose.xlu0.b32.cont [7/16] 0.0, 128
        %2472 = vxpose.xlu0.b32.cont [8/16] 0.0, 128
        %2473 = vxpose.xlu0.b32.cont [9/16] 0.0, 128
        %2474 = vxpose.xlu0.b32.cont [10/16] 0.0, 128
        %2475 = vxpose.xlu0.b32.cont [11/16] 0.0, 128
        %2476 = vxpose.xlu0.b32.cont [12/16] 0.0, 128
        %2477 = vxpose.xlu0.b32.cont [13/16] 0.0, 128
        %2478 = vxpose.xlu0.b32.cont [14/16] 0.0, 128
        %2479 = vxpose.xlu0.b32.cont [15/16] 0.0, 128
        %2480 = vxpose.xlu0.b32.end [16/16] 0.0, 128
        %v2481 = vpop.trf.xlu0
        %v2482 = vpop.trf.xlu0
        %v2483 = vpop.trf.xlu0
        %v2484 = vpop.trf.xlu0
        %v2485 = vpop.trf.xlu0
        %v2486 = vpop.trf.xlu0
        %v2487 = vpop.trf.xlu0
        %v2488 = vpop.trf.xlu0
        %v2489 = vpop.trf.xlu0
        %v2490 = vpop.trf.xlu0
        %v2491 = vpop.trf.xlu0
        %v2492 = vpop.trf.xlu0
        %v2493 = vpop.trf.xlu0
        %v2494 = vpop.trf.xlu0
        %v2495 = vpop.trf.xlu0
        %v2496 = vpop.trf.xlu0
        %2497 = vxpose.xlu0.b32.start [1/16] %v2385, 128
        %2498 = vxpose.xlu0.b32.cont [2/16] %v2417, 128
        %2499 = vxpose.xlu0.b32.cont [3/16] %v2449, 128
        %2500 = vxpose.xlu0.b32.cont [4/16] %v2481, 128
        %2501 = vxpose.xlu0.b32.cont [5/16] 0.0, 128
        %2502 = vxpose.xlu0.b32.cont [6/16] 0.0, 128
        %2503 = vxpose.xlu0.b32.cont [7/16] 0.0, 128
        %2504 = vxpose.xlu0.b32.cont [8/16] 0.0, 128
        %2505 = vxpose.xlu0.b32.cont [9/16] 0.0, 128
        %2506 = vxpose.xlu0.b32.cont [10/16] 0.0, 128
        %2507 = vxpose.xlu0.b32.cont [11/16] 0.0, 128
        %2508 = vxpose.xlu0.b32.cont [12/16] 0.0, 128
        %2509 = vxpose.xlu0.b32.cont [13/16] 0.0, 128
        %2510 = vxpose.xlu0.b32.cont [14/16] 0.0, 128
        %2511 = vxpose.xlu0.b32.cont [15/16] 0.0, 128
        %2512 = vxpose.xlu0.b32.end [16/16] 0.0, 128
        %v2513 = vpop.trf.xlu0
        %v2514 = vpop.trf.xlu0
        %v2515 = vpop.trf.xlu0
        %v2516 = vpop.trf.xlu0
        %v2517 = vpop.trf.xlu0
        %v2518 = vpop.trf.xlu0
        %v2519 = vpop.trf.xlu0
        %v2520 = vpop.trf.xlu0
        %v2521 = vpop.trf.xlu0
        %v2522 = vpop.trf.xlu0
        %v2523 = vpop.trf.xlu0
        %v2524 = vpop.trf.xlu0
        %v2525 = vpop.trf.xlu0
        %v2526 = vpop.trf.xlu0
        %v2527 = vpop.trf.xlu0
        %v2528 = vpop.trf.xlu0
        %2529 = vst.msk [vmem:[#allocation2 + $0x8] sm:$0xff] %vm510, %v2513
        %v2530 = vld [vmem:[#allocation2] sm:$0xff]
        %v2531 = vld [vmem:[#allocation2 + $0x8] sm:$0xff]
        %v2532 = vpack.c.bf16 %v2531, %v2530
        %s2533 = scalar_lea.vmem %s405, 16 [#allocation11]
        %v2534 = vld [vmem:[%s2533] sm:$0xf]
        %v2535 = vld [vmem:[%s2533 + $0x4] sm:$0xf]
        %v2536 = vld [vmem:[%s2533 + $0x8] sm:$0xf]
        %v2537 = vld [vmem:[%s2533 + $0xc] sm:$0xf]
        %v2538 = vlaneseq
        %v2539 = vshrl.u32 %v2538, 7
        %v2540 = vsub.s32 3, %v2539
        %v2541 = vrot.slane %v489, %v2540
        %v2546 = vunpack.c.l.b16 %v2534
        %v2547 = vunpack.c.l.b16 %v2535
        %v2548 = vunpack.c.l.b16 %v2536
        %v2549 = vunpack.c.l.b16 %v2537
        %v2550 = vpack.c.b16 %v2547, %v2546
        %v2551 = vpack.c.b16 %v2549, %v2548
        %v2555 = vsel %vm510, %v2532, 0
        %2557 = vmatprep.subr.bf16.mxu0 0
        %2558 = vmatpush1.bf16.msra.mxu0 %v2550
        %2559 = vmatprep.subr.bf16.mxu0 0
        %2560 = vmatpush1.bf16.msra.mxu0 %v2551
        %2561 = vmatprep.subr.bf16.mxu0 0
        %2562 = vmatpush1.bf16.msra.mxu0 0
        %2563 = vmatprep.subr.bf16.mxu0 0
        %2564 = vmatpush1.bf16.msra.mxu0 0
        %2565 = vmatprep.subr.bf16.mxu0 0
        %2566 = vmatpush1.bf16.msra.mxu0 0
        %2567 = vmatprep.subr.bf16.mxu0 0
        %2568 = vmatpush1.bf16.msra.mxu0 0
        %2569 = vmatprep.subr.bf16.mxu0 0
        %2570 = vmatpush1.bf16.msra.mxu0 0
        %2571 = vmatprep.subr.bf16.mxu0 0
        %2572 = vmatpush1.bf16.msra.mxu0 0
        %2573 = vmatprep.subr.bf16.mxu0 0
        %2574 = vmatpush1.bf16.msra.mxu0 0
        %2575 = vmatprep.subr.bf16.mxu0 0
        %2576 = vmatpush1.bf16.msra.mxu0 0
        %2577 = vmatprep.subr.bf16.mxu0 0
        %2578 = vmatpush1.bf16.msra.mxu0 0
        %2579 = vmatprep.subr.bf16.mxu0 0
        %2580 = vmatpush1.bf16.msra.mxu0 0
        %2581 = vmatprep.subr.bf16.mxu0 0
        %2582 = vmatpush1.bf16.msra.mxu0 0
        %2583 = vmatprep.subr.bf16.mxu0 0
        %2584 = vmatpush1.bf16.msra.mxu0 0
        %2585 = vmatprep.subr.bf16.mxu0 0
        %2586 = vmatpush1.bf16.msra.mxu0 0
        %2587 = vmatprep.subr.bf16.mxu0 0
        %2588 = vmatpush1.bf16.msra.mxu0 0
        %2589 = vmatprep.mubr.bf16.mxu0 0
        %2590 = vmatmul.mubr.bf16.gmra.mrb[0].mxu0 %v2555
        %v2591 = vpop.f32.mrb[0].mxu0
        %v2592 = vadd.f32 %v2541, %v2591
        %v2593 = vpop.f32.mrb[0].mxu0
        %v2594 = vpop.f32.mrb[0].mxu0
        %v2595 = vadd.f32 %v2541, %v2594
        %v2596 = vpop.f32.mrb[0].mxu0
        %2597 = vdwg.mxu0
        %v2598 = vadd.f32 %v485, %v2592
        %v2599 = vadd.f32 %v486, %v2595
        %v2600 = vsel %vm510, %v2598, 0.0
        %2601 = vadd.xlane.f32.xlu0 %v2600
        %v2602 = vpop.xlane.xlu0 %2601
        %v2603 = vsel %vm510, %v2599, 0.0
        %2604 = vadd.xlane.f32.xlu0 %v2603
        %v2605 = vpop.xlane.xlu0 %2604
        %v2606 = vrcp.pop 32.0
        %v2607 = vmul.f32 %v2602, %v2606
        %v2608 = vmul.f32 %v2605, %v2606
        %v2609 = vsub.f32 %v2598, %v2607
        %v2610 = vsub.f32 %v2599, %v2608
        %v2611 = vmul.f32 %v2609, %v2609
        %v2612 = vmul.f32 %v2610, %v2610
        %v2613 = vsel %vm510, %v2611, 0.0
        %2614 = vadd.xlane.f32.xlu0 %v2613
        %v2615 = vpop.xlane.xlu0 %2614
        %v2616 = vsel %vm510, %v2612, 0.0
        %2617 = vadd.xlane.f32.xlu0 %v2616
        %v2618 = vpop.xlane.xlu0 %2617
        %v2619 = vmul.f32 %v2615, %v2606
        %v2620 = vmul.f32 %v2618, %v2606
        %v2621 = vadd.f32 %v2619, 1e-05
        %v2622 = vadd.f32 %v2620, 1e-05
        %v2623 = vrsqrt.pop %v2621
        %v2624 = vrsqrt.pop %v2622
        %v2625 = vmul.f32 %v2609, %v2623
        %v2626 = vmul.f32 %v2610, %v2624
        %v2627 = vlaneseq
        %v2628 = vshrl.u32 %v2627, 7
        %v2629 = vsub.s32 2, %v2628
        %v2630 = vrot.slane %v490, %v2629
        %v2631 = vmul.f32 %v2625, %v2630
        %v2632 = vmul.f32 %v2626, %v2630
        %v2633 = vlaneseq
        %v2634 = vshrl.u32 %v2633, 7
        %v2635 = vsub.s32 3, %v2634
        %v2636 = vrot.slane %v490, %v2635
        %v2637 = vadd.f32 %v2631, %v2636
        %v2638 = vadd.f32 %v2632, %v2636
        %v2639 = vadd.f32 %v2637, %v487
        %v2640 = vadd.f32 %v2638, %v488
        %v2641 = vpack.c.bf16 %v2640, %v2639
        %s2642 = scalar_lea.vmem %s405, 32 [#allocation11]
        %v2643 = vld [vmem:[%s2642] sm:$0xf]
        %v2644 = vld [vmem:[%s2642 + $0x4] sm:$0xf]
        %v2645 = vld [vmem:[%s2642 + $0x8] sm:$0xf]
        %v2646 = vld [vmem:[%s2642 + $0xc] sm:$0xf]
        %v2647 = vlaneseq
        %v2648 = vshrl.u32 %v2647, 7
        %v2649 = vsub.s32 4, %v2648
        %v2650 = vrot.slane %v489, %v2649
        %v2655 = vunpack.c.l.b16 %v2643
        %v2656 = vunpack.c.l.b16 %v2644
        %v2657 = vunpack.c.l.b16 %v2645
        %v2658 = vunpack.c.l.b16 %v2646
        %v2659 = vpack.c.b16 %v2656, %v2655
        %v2660 = vpack.c.b16 %v2658, %v2657
        %v2664 = vsel %vm510, %v2641, 0
        %2666 = vmatprep.subr.bf16.mxu0 0
        %2667 = vmatpush1.bf16.msra.mxu0 %v2659
        %2668 = vmatprep.subr.bf16.mxu0 0
        %2669 = vmatpush1.bf16.msra.mxu0 %v2660
        %2670 = vmatprep.subr.bf16.mxu0 0
        %2671 = vmatpush1.bf16.msra.mxu0 0
        %2672 = vmatprep.subr.bf16.mxu0 0
        %2673 = vmatpush1.bf16.msra.mxu0 0
        %2674 = vmatprep.subr.bf16.mxu0 0
        %2675 = vmatpush1.bf16.msra.mxu0 0
        %2676 = vmatprep.subr.bf16.mxu0 0
        %2677 = vmatpush1.bf16.msra.mxu0 0
        %2678 = vmatprep.subr.bf16.mxu0 0
        %2679 = vmatpush1.bf16.msra.mxu0 0
        %2680 = vmatprep.subr.bf16.mxu0 0
        %2681 = vmatpush1.bf16.msra.mxu0 0
        %2682 = vmatprep.subr.bf16.mxu0 0
        %2683 = vmatpush1.bf16.msra.mxu0 0
        %2684 = vmatprep.subr.bf16.mxu0 0
        %2685 = vmatpush1.bf16.msra.mxu0 0
        %2686 = vmatprep.subr.bf16.mxu0 0
        %2687 = vmatpush1.bf16.msra.mxu0 0
        %2688 = vmatprep.subr.bf16.mxu0 0
        %2689 = vmatpush1.bf16.msra.mxu0 0
        %2690 = vmatprep.subr.bf16.mxu0 0
        %2691 = vmatpush1.bf16.msra.mxu0 0
        %2692 = vmatprep.subr.bf16.mxu0 0
        %2693 = vmatpush1.bf16.msra.mxu0 0
        %2694 = vmatprep.subr.bf16.mxu0 0
        %2695 = vmatpush1.bf16.msra.mxu0 0
        %2696 = vmatprep.subr.bf16.mxu0 0
        %2697 = vmatpush1.bf16.msra.mxu0 0
        %2698 = vmatprep.mubr.bf16.mxu0 0
        %2699 = vmatmul.mubr.bf16.gmra.mrb[0].mxu0 %v2664
        %v2700 = vpop.f32.mrb[0].mxu0
        %v2701 = vadd.f32 %v2650, %v2700
        %v2702 = vpop.f32.mrb[0].mxu0
        %v2703 = vpop.f32.mrb[0].mxu0
        %v2704 = vadd.f32 %v2650, %v2703
        %v2705 = vpop.f32.mrb[0].mxu0
        %2706 = vdwg.mxu0
        %v2707 = vld [vmem:[#allocation8] sm:$0xf]
        %v2708 = vld [vmem:[#allocation8 + $0x4] sm:$0xf]
        %v2709 = vld [vmem:[#allocation8 + $0x8] sm:$0xf]
        %v2710 = vld [vmem:[#allocation8 + $0xc] sm:$0xf]
        %s2711 = scalar_lea.vmem %s405, 48 [#allocation11]
        %v2712 = vld [vmem:[%s2711] sm:$0xf]
        %v2713 = vld [vmem:[%s2711 + $0x4] sm:$0xf]
        %v2714 = vld [vmem:[%s2711 + $0x8] sm:$0xf]
        %v2715 = vld [vmem:[%s2711 + $0xc] sm:$0xf]
        %v2716 = vlaneseq
        %v2717 = vshrl.u32 %v2716, 7
        %v2718 = vsub.s32 5, %v2717
        %v2719 = vrot.slane %v489, %v2718
        %v2724 = vunpack.c.l.b16 %v2707
        %v2725 = vunpack.c.l.b16 %v2708
        %v2726 = vunpack.c.l.b16 %v2709
        %v2727 = vunpack.c.l.b16 %v2710
        %v2728 = vpack.c.b16 %v2725, %v2724
        %v2729 = vpack.c.b16 %v2727, %v2726
        %v2734 = vunpack.c.l.b16 %v2712
        %v2735 = vunpack.c.l.b16 %v2713
        %v2736 = vunpack.c.l.b16 %v2714
        %v2737 = vunpack.c.l.b16 %v2715
        %v2738 = vpack.c.b16 %v2735, %v2734
        %v2739 = vpack.c.b16 %v2737, %v2736
        %v2743 = vsel %vm510, %v2728, 0
        %v2746 = vsel %vm510, %v2729, 0
        %2748 = vmatprep.subr.bf16.mxu0 0
        %2749 = vmatpush1.bf16.msra.mxu0 %v2738
        %2750 = vmatprep.subr.bf16.mxu0 0
        %2751 = vmatpush1.bf16.msra.mxu0 %v2739
        %2752 = vmatprep.subr.bf16.mxu0 0
        %2753 = vmatpush1.bf16.msra.mxu0 0
        %2754 = vmatprep.subr.bf16.mxu0 0
        %2755 = vmatpush1.bf16.msra.mxu0 0
        %2756 = vmatprep.subr.bf16.mxu0 0
        %2757 = vmatpush1.bf16.msra.mxu0 0
        %2758 = vmatprep.subr.bf16.mxu0 0
        %2759 = vmatpush1.bf16.msra.mxu0 0
        %2760 = vmatprep.subr.bf16.mxu0 0
        %2761 = vmatpush1.bf16.msra.mxu0 0
        %2762 = vmatprep.subr.bf16.mxu0 0
        %2763 = vmatpush1.bf16.msra.mxu0 0
        %2764 = vmatprep.subr.bf16.mxu0 0
        %2765 = vmatpush1.bf16.msra.mxu0 0
        %2766 = vmatprep.subr.bf16.mxu0 0
        %2767 = vmatpush1.bf16.msra.mxu0 0
        %2768 = vmatprep.subr.bf16.mxu0 0
        %2769 = vmatpush1.bf16.msra.mxu0 0
        %2770 = vmatprep.subr.bf16.mxu0 0
        %2771 = vmatpush1.bf16.msra.mxu0 0
        %2772 = vmatprep.subr.bf16.mxu0 0
        %2773 = vmatpush1.bf16.msra.mxu0 0
        %2774 = vmatprep.subr.bf16.mxu0 0
        %2775 = vmatpush1.bf16.msra.mxu0 0
        %2776 = vmatprep.subr.bf16.mxu0 0
        %2777 = vmatpush1.bf16.msra.mxu0 0
        %2778 = vmatprep.subr.bf16.mxu0 0
        %2779 = vmatpush1.bf16.msra.mxu0 0
        %2780 = vmatprep.mubr.bf16.mxu0 0
        %2781 = vmatmul.mubr.bf16.gmra.mrb[0].mxu0 %v2743
        %v2782 = vpop.f32.mrb[0].mxu0
        %v2783 = vadd.f32 %v2719, %v2782
        %v2784 = vpop.f32.mrb[0].mxu0
        %v2785 = vpop.f32.mrb[0].mxu0
        %v2786 = vadd.f32 %v2719, %v2785
        %v2787 = vpop.f32.mrb[0].mxu0
        %2788 = vmatprep.mubr.bf16.mxu0 0
        %2789 = vmatmul.mubr.bf16.gmra.mrb[0].mxu0 %v2746
        %v2790 = vpop.f32.mrb[0].mxu0
        %v2791 = vadd.f32 %v2719, %v2790
        %v2792 = vpop.f32.mrb[0].mxu0
        %v2793 = vpop.f32.mrb[0].mxu0
        %v2794 = vadd.f32 %v2719, %v2793
        %v2795 = vpop.f32.mrb[0].mxu0
        %2796 = vdwg.mxu0
        %v2797 = vld [vmem:[#allocation9] sm:$0xf]
        %v2798 = vld [vmem:[#allocation9 + $0x4] sm:$0xf]
        %v2799 = vld [vmem:[#allocation9 + $0x8] sm:$0xf]
        %v2800 = vld [vmem:[#allocation9 + $0xc] sm:$0xf]
        %s2801 = scalar_lea.vmem %s405, 64 [#allocation11]
        %v2802 = vld [vmem:[%s2801] sm:$0xf]
        %v2803 = vld [vmem:[%s2801 + $0x4] sm:$0xf]
        %v2804 = vld [vmem:[%s2801 + $0x8] sm:$0xf]
        %v2805 = vld [vmem:[%s2801 + $0xc] sm:$0xf]
        %v2806 = vlaneseq
        %v2807 = vshrl.u32 %v2806, 7
        %v2808 = vsub.s32 6, %v2807
        %v2809 = vrot.slane %v489, %v2808
        %v2814 = vunpack.c.l.b16 %v2797
        %v2815 = vunpack.c.l.b16 %v2798
        %v2816 = vunpack.c.l.b16 %v2799
        %v2817 = vunpack.c.l.b16 %v2800
        %v2818 = vpack.c.b16 %v2815, %v2814
        %v2819 = vpack.c.b16 %v2817, %v2816
        %v2824 = vunpack.c.l.b16 %v2802
        %v2825 = vunpack.c.l.b16 %v2803
        %v2826 = vunpack.c.l.b16 %v2804
        %v2827 = vunpack.c.l.b16 %v2805
        %v2828 = vpack.c.b16 %v2825, %v2824
        %v2829 = vpack.c.b16 %v2827, %v2826
        %v2833 = vsel %vm510, %v2818, 0
        %v2836 = vsel %vm510, %v2819, 0
        %2838 = vmatprep.subr.bf16.mxu0 0
        %2839 = vmatpush1.bf16.msra.mxu0 %v2828
        %2840 = vmatprep.subr.bf16.mxu0 0
        %2841 = vmatpush1.bf16.msra.mxu0 %v2829
        %2842 = vmatprep.subr.bf16.mxu0 0
        %2843 = vmatpush1.bf16.msra.mxu0 0
        %2844 = vmatprep.subr.bf16.mxu0 0
        %2845 = vmatpush1.bf16.msra.mxu0 0
        %2846 = vmatprep.subr.bf16.mxu0 0
        %2847 = vmatpush1.bf16.msra.mxu0 0
        %2848 = vmatprep.subr.bf16.mxu0 0
        %2849 = vmatpush1.bf16.msra.mxu0 0
        %2850 = vmatprep.subr.bf16.mxu0 0
        %2851 = vmatpush1.bf16.msra.mxu0 0
        %2852 = vmatprep.subr.bf16.mxu0 0
        %2853 = vmatpush1.bf16.msra.mxu0 0
        %2854 = vmatprep.subr.bf16.mxu0 0
        %2855 = vmatpush1.bf16.msra.mxu0 0
        %2856 = vmatprep.subr.bf16.mxu0 0
        %2857 = vmatpush1.bf16.msra.mxu0 0
        %2858 = vmatprep.subr.bf16.mxu0 0
        %2859 = vmatpush1.bf16.msra.mxu0 0
        %2860 = vmatprep.subr.bf16.mxu0 0
        %2861 = vmatpush1.bf16.msra.mxu0 0
        %2862 = vmatprep.subr.bf16.mxu0 0
        %2863 = vmatpush1.bf16.msra.mxu0 0
        %2864 = vmatprep.subr.bf16.mxu0 0
        %2865 = vmatpush1.bf16.msra.mxu0 0
        %2866 = vmatprep.subr.bf16.mxu0 0
        %2867 = vmatpush1.bf16.msra.mxu0 0
        %2868 = vmatprep.subr.bf16.mxu0 0
        %2869 = vmatpush1.bf16.msra.mxu0 0
        %2870 = vmatprep.mubr.bf16.mxu0 0
        %2871 = vmatmul.mubr.bf16.gmra.mrb[0].mxu0 %v2833
        %v2872 = vpop.f32.mrb[0].mxu0
        %v2873 = vadd.f32 %v2809, %v2872
        %v2874 = vpop.f32.mrb[0].mxu0
        %v2875 = vpop.f32.mrb[0].mxu0
        %v2876 = vadd.f32 %v2809, %v2875
        %v2877 = vpop.f32.mrb[0].mxu0
        %2878 = vmatprep.mubr.bf16.mxu0 0
        %2879 = vmatmul.mubr.bf16.gmra.mrb[0].mxu0 %v2836
        %v2880 = vpop.f32.mrb[0].mxu0
        %v2881 = vadd.f32 %v2809, %v2880
        %v2882 = vpop.f32.mrb[0].mxu0
        %v2883 = vpop.f32.mrb[0].mxu0
        %v2884 = vadd.f32 %v2809, %v2883
        %v2885 = vpop.f32.mrb[0].mxu0
        %2886 = vdwg.mxu0
        %v2887 = vmul.f32 %v2701, 0.35355338
        %2888 = vxpose.xlu0.b32.start [1/16] %v2887, 128
        %2889 = vxpose.xlu0.b32.cont [2/16] 0.0, 128
        %2890 = vxpose.xlu0.b32.cont [3/16] 0.0, 128
        %2891 = vxpose.xlu0.b32.cont [4/16] 0.0, 128
        %2892 = vxpose.xlu0.b32.cont [5/16] 0.0, 128
        %2893 = vxpose.xlu0.b32.cont [6/16] 0.0, 128
        %2894 = vxpose.xlu0.b32.cont [7/16] 0.0, 128
        %2895 = vxpose.xlu0.b32.cont [8/16] 0.0, 128
        %2896 = vxpose.xlu0.b32.cont [9/16] 0.0, 128
        %2897 = vxpose.xlu0.b32.cont [10/16] 0.0, 128
        %2898 = vxpose.xlu0.b32.cont [11/16] 0.0, 128
        %2899 = vxpose.xlu0.b32.cont [12/16] 0.0, 128
        %2900 = vxpose.xlu0.b32.cont [13/16] 0.0, 128
        %2901 = vxpose.xlu0.b32.cont [14/16] 0.0, 128
        %2902 = vxpose.xlu0.b32.cont [15/16] 0.0, 128
        %2903 = vxpose.xlu0.b32.end [16/16] 0.0, 128
        %v2904 = vpop.trf.xlu0
        %v2905 = vpop.trf.xlu0
        %v2906 = vpop.trf.xlu0
        %v2907 = vpop.trf.xlu0
        %v2908 = vpop.trf.xlu0
        %v2909 = vpop.trf.xlu0
        %v2910 = vpop.trf.xlu0
        %v2911 = vpop.trf.xlu0
        %v2912 = vpop.trf.xlu0
        %v2913 = vpop.trf.xlu0
        %v2914 = vpop.trf.xlu0
        %v2915 = vpop.trf.xlu0
        %v2916 = vpop.trf.xlu0
        %v2917 = vpop.trf.xlu0
        %v2918 = vpop.trf.xlu0
        %v2919 = vpop.trf.xlu0
        %2920 = vxpose.xlu0.b32.start [1/16] %v2904, 128
        %2921 = vxpose.xlu0.b32.cont [2/16] 0.0, 128
        %2922 = vxpose.xlu0.b32.cont [3/16] 0.0, 128
        %2923 = vxpose.xlu0.b32.cont [4/16] 0.0, 128
        %2924 = vxpose.xlu0.b32.cont [5/16] 0.0, 128
        %2925 = vxpose.xlu0.b32.cont [6/16] 0.0, 128
        %2926 = vxpose.xlu0.b32.cont [7/16] 0.0, 128
        %2927 = vxpose.xlu0.b32.cont [8/16] 0.0, 128
        %2928 = vxpose.xlu0.b32.cont [9/16] 0.0, 128
        %2929 = vxpose.xlu0.b32.cont [10/16] 0.0, 128
        %2930 = vxpose.xlu0.b32.cont [11/16] 0.0, 128
        %2931 = vxpose.xlu0.b32.cont [12/16] 0.0, 128
        %2932 = vxpose.xlu0.b32.cont [13/16] 0.0, 128
        %2933 = vxpose.xlu0.b32.cont [14/16] 0.0, 128
        %2934 = vxpose.xlu0.b32.cont [15/16] 0.0, 128
        %2935 = vxpose.xlu0.b32.end [16/16] 0.0, 128
        %v2936 = vpop.trf.xlu0
        %v2937 = vpop.trf.xlu0
        %v2938 = vpop.trf.xlu0
        %v2939 = vpop.trf.xlu0
        %v2940 = vpop.trf.xlu0
        %v2941 = vpop.trf.xlu0
        %v2942 = vpop.trf.xlu0
        %v2943 = vpop.trf.xlu0
        %v2944 = vpop.trf.xlu0
        %v2945 = vpop.trf.xlu0
        %v2946 = vpop.trf.xlu0
        %v2947 = vpop.trf.xlu0
        %v2948 = vpop.trf.xlu0
        %v2949 = vpop.trf.xlu0
        %v2950 = vpop.trf.xlu0
        %v2951 = vpop.trf.xlu0
        %2952 = vxpose.xlu0.b32.start [1/16] %v2905, 128
        %2953 = vxpose.xlu0.b32.cont [2/16] 0.0, 128
        %2954 = vxpose.xlu0.b32.cont [3/16] 0.0, 128
        %2955 = vxpose.xlu0.b32.cont [4/16] 0.0, 128
        %2956 = vxpose.xlu0.b32.cont [5/16] 0.0, 128
        %2957 = vxpose.xlu0.b32.cont [6/16] 0.0, 128
        %2958 = vxpose.xlu0.b32.cont [7/16] 0.0, 128
        %2959 = vxpose.xlu0.b32.cont [8/16] 0.0, 128
        %2960 = vxpose.xlu0.b32.cont [9/16] 0.0, 128
        %2961 = vxpose.xlu0.b32.cont [10/16] 0.0, 128
        %2962 = vxpose.xlu0.b32.cont [11/16] 0.0, 128
        %2963 = vxpose.xlu0.b32.cont [12/16] 0.0, 128
        %2964 = vxpose.xlu0.b32.cont [13/16] 0.0, 128
        %2965 = vxpose.xlu0.b32.cont [14/16] 0.0, 128
        %2966 = vxpose.xlu0.b32.cont [15/16] 0.0, 128
        %2967 = vxpose.xlu0.b32.end [16/16] 0.0, 128
        %v2968 = vpop.trf.xlu0
        %v2969 = vpop.trf.xlu0
        %v2970 = vpop.trf.xlu0
        %v2971 = vpop.trf.xlu0
        %v2972 = vpop.trf.xlu0
        %v2973 = vpop.trf.xlu0
        %v2974 = vpop.trf.xlu0
        %v2975 = vpop.trf.xlu0
        %v2976 = vpop.trf.xlu0
        %v2977 = vpop.trf.xlu0
        %v2978 = vpop.trf.xlu0
        %v2979 = vpop.trf.xlu0
        %v2980 = vpop.trf.xlu0
        %v2981 = vpop.trf.xlu0
        %v2982 = vpop.trf.xlu0
        %v2983 = vpop.trf.xlu0
        %2984 = vxpose.xlu0.b32.start [1/16] %v2906, 128
        %2985 = vxpose.xlu0.b32.cont [2/16] 0.0, 128
        %2986 = vxpose.xlu0.b32.cont [3/16] 0.0, 128
        %2987 = vxpose.xlu0.b32.cont [4/16] 0.0, 128
        %2988 = vxpose.xlu0.b32.cont [5/16] 0.0, 128
        %2989 = vxpose.xlu0.b32.cont [6/16] 0.0, 128
        %2990 = vxpose.xlu0.b32.cont [7/16] 0.0, 128
        %2991 = vxpose.xlu0.b32.cont [8/16] 0.0, 128
        %2992 = vxpose.xlu0.b32.cont [9/16] 0.0, 128
        %2993 = vxpose.xlu0.b32.cont [10/16] 0.0, 128
        %2994 = vxpose.xlu0.b32.cont [11/16] 0.0, 128
        %2995 = vxpose.xlu0.b32.cont [12/16] 0.0, 128
        %2996 = vxpose.xlu0.b32.cont [13/16] 0.0, 128
        %2997 = vxpose.xlu0.b32.cont [14/16] 0.0, 128
        %2998 = vxpose.xlu0.b32.cont [15/16] 0.0, 128
        %2999 = vxpose.xlu0.b32.end [16/16] 0.0, 128
        %v3000 = vpop.trf.xlu0
        %v3001 = vpop.trf.xlu0
        %v3002 = vpop.trf.xlu0
        %v3003 = vpop.trf.xlu0
        %v3004 = vpop.trf.xlu0
        %v3005 = vpop.trf.xlu0
        %v3006 = vpop.trf.xlu0
        %v3007 = vpop.trf.xlu0
        %v3008 = vpop.trf.xlu0
        %v3009 = vpop.trf.xlu0
        %v3010 = vpop.trf.xlu0
        %v3011 = vpop.trf.xlu0
        %v3012 = vpop.trf.xlu0
        %v3013 = vpop.trf.xlu0
        %v3014 = vpop.trf.xlu0
        %v3015 = vpop.trf.xlu0
        %3016 = vxpose.xlu0.b32.start [1/16] %v2907, 128
        %3017 = vxpose.xlu0.b32.cont [2/16] 0.0, 128
        %3018 = vxpose.xlu0.b32.cont [3/16] 0.0, 128
        %3019 = vxpose.xlu0.b32.cont [4/16] 0.0, 128
        %3020 = vxpose.xlu0.b32.cont [5/16] 0.0, 128
        %3021 = vxpose.xlu0.b32.cont [6/16] 0.0, 128
        %3022 = vxpose.xlu0.b32.cont [7/16] 0.0, 128
        %3023 = vxpose.xlu0.b32.cont [8/16] 0.0, 128
        %3024 = vxpose.xlu0.b32.cont [9/16] 0.0, 128
        %3025 = vxpose.xlu0.b32.cont [10/16] 0.0, 128
        %3026 = vxpose.xlu0.b32.cont [11/16] 0.0, 128
        %3027 = vxpose.xlu0.b32.cont [12/16] 0.0, 128
        %3028 = vxpose.xlu0.b32.cont [13/16] 0.0, 128
        %3029 = vxpose.xlu0.b32.cont [14/16] 0.0, 128
        %3030 = vxpose.xlu0.b32.cont [15/16] 0.0, 128
        %3031 = vxpose.xlu0.b32.end [16/16] 0.0, 128
        %v3032 = vpop.trf.xlu0
        %v3033 = vpop.trf.xlu0
        %v3034 = vpop.trf.xlu0
        %v3035 = vpop.trf.xlu0
        %v3036 = vpop.trf.xlu0
        %v3037 = vpop.trf.xlu0
        %v3038 = vpop.trf.xlu0
        %v3039 = vpop.trf.xlu0
        %v3040 = vpop.trf.xlu0
        %v3041 = vpop.trf.xlu0
        %v3042 = vpop.trf.xlu0
        %v3043 = vpop.trf.xlu0
        %v3044 = vpop.trf.xlu0
        %v3045 = vpop.trf.xlu0
        %v3046 = vpop.trf.xlu0
        %v3047 = vpop.trf.xlu0
        %v3048 = vpack.c.bf16 %v2936, %v2936
        %v3049 = vpack.c.bf16 %v2968, %v2968
        %v3050 = vpack.c.bf16 %v3000, %v3000
        %v3051 = vpack.c.bf16 %v3032, %v3032
        %3052 = vxpose.xlu0.b32.start [1/16] %v2783, 128
        %3053 = vxpose.xlu0.b32.cont [2/16] %v2786, 128
        %3054 = vxpose.xlu0.b32.cont [3/16] 0.0, 128
        %3055 = vxpose.xlu0.b32.cont [4/16] 0.0, 128
        %3056 = vxpose.xlu0.b32.cont [5/16] 0.0, 128
        %3057 = vxpose.xlu0.b32.cont [6/16] 0.0, 128
        %3058 = vxpose.xlu0.b32.cont [7/16] 0.0, 128
        %3059 = vxpose.xlu0.b32.cont [8/16] 0.0, 128
        %3060 = vxpose.xlu0.b32.cont [9/16] 0.0, 128
        %3061 = vxpose.xlu0.b32.cont [10/16] 0.0, 128
        %3062 = vxpose.xlu0.b32.cont [11/16] 0.0, 128
        %3063 = vxpose.xlu0.b32.cont [12/16] 0.0, 128
        %3064 = vxpose.xlu0.b32.cont [13/16] 0.0, 128
        %3065 = vxpose.xlu0.b32.cont [14/16] 0.0, 128
        %3066 = vxpose.xlu0.b32.cont [15/16] 0.0, 128
        %3067 = vxpose.xlu0.b32.end [16/16] 0.0, 128
        %v3068 = vpop.trf.xlu0
        %v3069 = vpop.trf.xlu0
        %v3070 = vpop.trf.xlu0
        %v3071 = vpop.trf.xlu0
        %v3072 = vpop.trf.xlu0
        %v3073 = vpop.trf.xlu0
        %v3074 = vpop.trf.xlu0
        %v3075 = vpop.trf.xlu0
        %v3076 = vpop.trf.xlu0
        %v3077 = vpop.trf.xlu0
        %v3078 = vpop.trf.xlu0
        %v3079 = vpop.trf.xlu0
        %v3080 = vpop.trf.xlu0
        %v3081 = vpop.trf.xlu0
        %v3082 = vpop.trf.xlu0
        %v3083 = vpop.trf.xlu0
        %v3084 = vpack.c.bf16 %v3068, %v3068
        %v3085 = vpack.c.bf16 %v3069, %v3069
        %v3086 = vpack.c.bf16 %v3070, %v3070
        %v3087 = vpack.c.bf16 %v3071, %v3071
        %3088 = vxpose.xlu0.b32.start [1/16] %v2873, 128
        %3089 = vxpose.xlu0.b32.cont [2/16] %v2876, 128
        %3090 = vxpose.xlu0.b32.cont [3/16] 0.0, 128
        %3091 = vxpose.xlu0.b32.cont [4/16] 0.0, 128
        %3092 = vxpose.xlu0.b32.cont [5/16] 0.0, 128
        %3093 = vxpose.xlu0.b32.cont [6/16] 0.0, 128
        %3094 = vxpose.xlu0.b32.cont [7/16] 0.0, 128
        %3095 = vxpose.xlu0.b32.cont [8/16] 0.0, 128
        %3096 = vxpose.xlu0.b32.cont [9/16] 0.0, 128
        %3097 = vxpose.xlu0.b32.cont [10/16] 0.0, 128
        %3098 = vxpose.xlu0.b32.cont [11/16] 0.0, 128
        %3099 = vxpose.xlu0.b32.cont [12/16] 0.0, 128
        %3100 = vxpose.xlu0.b32.cont [13/16] 0.0, 128
        %3101 = vxpose.xlu0.b32.cont [14/16] 0.0, 128
        %3102 = vxpose.xlu0.b32.cont [15/16] 0.0, 128
        %3103 = vxpose.xlu0.b32.end [16/16] 0.0, 128
        %v3104 = vpop.trf.xlu0
        %v3105 = vpop.trf.xlu0
        %v3106 = vpop.trf.xlu0
        %v3107 = vpop.trf.xlu0
        %v3108 = vpop.trf.xlu0
        %v3109 = vpop.trf.xlu0
        %v3110 = vpop.trf.xlu0
        %v3111 = vpop.trf.xlu0
        %v3112 = vpop.trf.xlu0
        %v3113 = vpop.trf.xlu0
        %v3114 = vpop.trf.xlu0
        %v3115 = vpop.trf.xlu0
        %v3116 = vpop.trf.xlu0
        %v3117 = vpop.trf.xlu0
        %v3118 = vpop.trf.xlu0
        %v3119 = vpop.trf.xlu0
        %3120 = vxpose.xlu0.b32.start [1/16] %v3104, 128
        %3121 = vxpose.xlu0.b32.cont [2/16] 0.0, 128
        %3122 = vxpose.xlu0.b32.cont [3/16] 0.0, 128
        %3123 = vxpose.xlu0.b32.cont [4/16] 0.0, 128
        %3124 = vxpose.xlu0.b32.cont [5/16] 0.0, 128
        %3125 = vxpose.xlu0.b32.cont [6/16] 0.0, 128
        %3126 = vxpose.xlu0.b32.cont [7/16] 0.0, 128
        %3127 = vxpose.xlu0.b32.cont [8/16] 0.0, 128
        %3128 = vxpose.xlu0.b32.cont [9/16] 0.0, 128
        %3129 = vxpose.xlu0.b32.cont [10/16] 0.0, 128
        %3130 = vxpose.xlu0.b32.cont [11/16] 0.0, 128
        %3131 = vxpose.xlu0.b32.cont [12/16] 0.0, 128
        %3132 = vxpose.xlu0.b32.cont [13/16] 0.0, 128
        %3133 = vxpose.xlu0.b32.cont [14/16] 0.0, 128
        %3134 = vxpose.xlu0.b32.cont [15/16] 0.0, 128
        %3135 = vxpose.xlu0.b32.end [16/16] 0.0, 128
        %v3136 = vpop.trf.xlu0
        %v3137 = vpop.trf.xlu0
        %v3138 = vpop.trf.xlu0
        %v3139 = vpop.trf.xlu0
        %v3140 = vpop.trf.xlu0
        %v3141 = vpop.trf.xlu0
        %v3142 = vpop.trf.xlu0
        %v3143 = vpop.trf.xlu0
        %v3144 = vpop.trf.xlu0
        %v3145 = vpop.trf.xlu0
        %v3146 = vpop.trf.xlu0
        %v3147 = vpop.trf.xlu0
        %v3148 = vpop.trf.xlu0
        %v3149 = vpop.trf.xlu0
        %v3150 = vpop.trf.xlu0
        %v3151 = vpop.trf.xlu0
        %3152 = vxpose.xlu0.b32.start [1/16] %v3105, 128
        %3153 = vxpose.xlu0.b32.cont [2/16] 0.0, 128
        %3154 = vxpose.xlu0.b32.cont [3/16] 0.0, 128
        %3155 = vxpose.xlu0.b32.cont [4/16] 0.0, 128
        %3156 = vxpose.xlu0.b32.cont [5/16] 0.0, 128
        %3157 = vxpose.xlu0.b32.cont [6/16] 0.0, 128
        %3158 = vxpose.xlu0.b32.cont [7/16] 0.0, 128
        %3159 = vxpose.xlu0.b32.cont [8/16] 0.0, 128
        %3160 = vxpose.xlu0.b32.cont [9/16] 0.0, 128
        %3161 = vxpose.xlu0.b32.cont [10/16] 0.0, 128
        %3162 = vxpose.xlu0.b32.cont [11/16] 0.0, 128
        %3163 = vxpose.xlu0.b32.cont [12/16] 0.0, 128
        %3164 = vxpose.xlu0.b32.cont [13/16] 0.0, 128
        %3165 = vxpose.xlu0.b32.cont [14/16] 0.0, 128
        %3166 = vxpose.xlu0.b32.cont [15/16] 0.0, 128
        %3167 = vxpose.xlu0.b32.end [16/16] 0.0, 128
        %v3168 = vpop.trf.xlu0
        %v3169 = vpop.trf.xlu0
        %v3170 = vpop.trf.xlu0
        %v3171 = vpop.trf.xlu0
        %v3172 = vpop.trf.xlu0
        %v3173 = vpop.trf.xlu0
        %v3174 = vpop.trf.xlu0
        %v3175 = vpop.trf.xlu0
        %v3176 = vpop.trf.xlu0
        %v3177 = vpop.trf.xlu0
        %v3178 = vpop.trf.xlu0
        %v3179 = vpop.trf.xlu0
        %v3180 = vpop.trf.xlu0
        %v3181 = vpop.trf.xlu0
        %v3182 = vpop.trf.xlu0
        %v3183 = vpop.trf.xlu0
        %3184 = vxpose.xlu0.b32.start [1/16] %v3106, 128
        %3185 = vxpose.xlu0.b32.cont [2/16] 0.0, 128
        %3186 = vxpose.xlu0.b32.cont [3/16] 0.0, 128
        %3187 = vxpose.xlu0.b32.cont [4/16] 0.0, 128
        %3188 = vxpose.xlu0.b32.cont [5/16] 0.0, 128
        %3189 = vxpose.xlu0.b32.cont [6/16] 0.0, 128
        %3190 = vxpose.xlu0.b32.cont [7/16] 0.0, 128
        %3191 = vxpose.xlu0.b32.cont [8/16] 0.0, 128
        %3192 = vxpose.xlu0.b32.cont [9/16] 0.0, 128
        %3193 = vxpose.xlu0.b32.cont [10/16] 0.0, 128
        %3194 = vxpose.xlu0.b32.cont [11/16] 0.0, 128
        %3195 = vxpose.xlu0.b32.cont [12/16] 0.0, 128
        %3196 = vxpose.xlu0.b32.cont [13/16] 0.0, 128
        %3197 = vxpose.xlu0.b32.cont [14/16] 0.0, 128
        %3198 = vxpose.xlu0.b32.cont [15/16] 0.0, 128
        %3199 = vxpose.xlu0.b32.end [16/16] 0.0, 128
        %v3200 = vpop.trf.xlu0
        %v3201 = vpop.trf.xlu0
        %v3202 = vpop.trf.xlu0
        %v3203 = vpop.trf.xlu0
        %v3204 = vpop.trf.xlu0
        %v3205 = vpop.trf.xlu0
        %v3206 = vpop.trf.xlu0
        %v3207 = vpop.trf.xlu0
        %v3208 = vpop.trf.xlu0
        %v3209 = vpop.trf.xlu0
        %v3210 = vpop.trf.xlu0
        %v3211 = vpop.trf.xlu0
        %v3212 = vpop.trf.xlu0
        %v3213 = vpop.trf.xlu0
        %v3214 = vpop.trf.xlu0
        %v3215 = vpop.trf.xlu0
        %3216 = vxpose.xlu0.b32.start [1/16] %v3107, 128
        %3217 = vxpose.xlu0.b32.cont [2/16] 0.0, 128
        %3218 = vxpose.xlu0.b32.cont [3/16] 0.0, 128
        %3219 = vxpose.xlu0.b32.cont [4/16] 0.0, 128
        %3220 = vxpose.xlu0.b32.cont [5/16] 0.0, 128
        %3221 = vxpose.xlu0.b32.cont [6/16] 0.0, 128
        %3222 = vxpose.xlu0.b32.cont [7/16] 0.0, 128
        %3223 = vxpose.xlu0.b32.cont [8/16] 0.0, 128
        %3224 = vxpose.xlu0.b32.cont [9/16] 0.0, 128
        %3225 = vxpose.xlu0.b32.cont [10/16] 0.0, 128
        %3226 = vxpose.xlu0.b32.cont [11/16] 0.0, 128
        %3227 = vxpose.xlu0.b32.cont [12/16] 0.0, 128
        %3228 = vxpose.xlu0.b32.cont [13/16] 0.0, 128
        %3229 = vxpose.xlu0.b32.cont [14/16] 0.0, 128
        %3230 = vxpose.xlu0.b32.cont [15/16] 0.0, 128
        %3231 = vxpose.xlu0.b32.end [16/16] 0.0, 128
        %v3232 = vpop.trf.xlu0
        %v3233 = vpop.trf.xlu0
        %v3234 = vpop.trf.xlu0
        %v3235 = vpop.trf.xlu0
        %v3236 = vpop.trf.xlu0
        %v3237 = vpop.trf.xlu0
        %v3238 = vpop.trf.xlu0
        %v3239 = vpop.trf.xlu0
        %v3240 = vpop.trf.xlu0
        %v3241 = vpop.trf.xlu0
        %v3242 = vpop.trf.xlu0
        %v3243 = vpop.trf.xlu0
        %v3244 = vpop.trf.xlu0
        %v3245 = vpop.trf.xlu0
        %v3246 = vpop.trf.xlu0
        %v3247 = vpop.trf.xlu0
        %v3248 = vpack.c.bf16 %v3137, %v3136
        %v3249 = vpack.c.bf16 %v3169, %v3168
        %v3250 = vpack.c.bf16 %v3201, %v3200
        %v3251 = vpack.c.bf16 %v3233, %v3232
        %v3253 = vsel %vm1005, %v3048, 0
        %v3256 = vsel %vm1009, %v3084, 0
        %3258 = vmatprep.subr.bf16.mxu0 0
        %3259 = vmatpush1.bf16.msra.mxu0 %v3256
        %3260 = vmatprep.subr.bf16.mxu0 0
        %3261 = vmatpush1.bf16.msra.mxu0 0
        %3262 = vmatprep.subr.bf16.mxu0 0
        %3263 = vmatpush1.bf16.msra.mxu0 0
        %3264 = vmatprep.subr.bf16.mxu0 0
        %3265 = vmatpush1.bf16.msra.mxu0 0
        %3266 = vmatprep.subr.bf16.mxu0 0
        %3267 = vmatpush1.bf16.msra.mxu0 0
        %3268 = vmatprep.subr.bf16.mxu0 0
        %3269 = vmatpush1.bf16.msra.mxu0 0
        %3270 = vmatprep.subr.bf16.mxu0 0
        %3271 = vmatpush1.bf16.msra.mxu0 0
        %3272 = vmatprep.subr.bf16.mxu0 0
        %3273 = vmatpush1.bf16.msra.mxu0 0
        %3274 = vmatprep.subr.bf16.mxu0 0
        %3275 = vmatpush1.bf16.msra.mxu0 0
        %3276 = vmatprep.subr.bf16.mxu0 0
        %3277 = vmatpush1.bf16.msra.mxu0 0
        %3278 = vmatprep.subr.bf16.mxu0 0
        %3279 = vmatpush1.bf16.msra.mxu0 0
        %3280 = vmatprep.subr.bf16.mxu0 0
        %3281 = vmatpush1.bf16.msra.mxu0 0
        %3282 = vmatprep.subr.bf16.mxu0 0
        %3283 = vmatpush1.bf16.msra.mxu0 0
        %3284 = vmatprep.subr.bf16.mxu0 0
        %3285 = vmatpush1.bf16.msra.mxu0 0
        %3286 = vmatprep.subr.bf16.mxu0 0
        %3287 = vmatpush1.bf16.msra.mxu0 0
        %3288 = vmatprep.subr.bf16.mxu0 0
        %3289 = vmatpush1.bf16.msra.mxu0 0
        %3290 = vmatprep.mubr.bf16.mxu0 0
        %3291 = vmatmul.mubr.bf16.gmra.mrb[0].mxu0 %v3253
        %v3292 = vpop.f32.mrb[0].mxu0
        %v3293 = vadd.f32 0.0, %v3292
        %v3294 = vpop.f32.mrb[0].mxu0
        %v3295 = vpop.f32.mrb[0].mxu0
        %v3296 = vpop.f32.mrb[0].mxu0
        %3297 = vdwg.mxu0
        %v3299 = vsel %vm1005, %v3049, 0
        %v3302 = vsel %vm1009, %v3085, 0
        %3304 = vmatprep.subr.bf16.mxu0 0
        %3305 = vmatpush1.bf16.msra.mxu0 %v3302
        %3306 = vmatprep.subr.bf16.mxu0 0
        %3307 = vmatpush1.bf16.msra.mxu0 0
        %3308 = vmatprep.subr.bf16.mxu0 0
        %3309 = vmatpush1.bf16.msra.mxu0 0
        %3310 = vmatprep.subr.bf16.mxu0 0
        %3311 = vmatpush1.bf16.msra.mxu0 0
        %3312 = vmatprep.subr.bf16.mxu0 0
        %3313 = vmatpush1.bf16.msra.mxu0 0
        %3314 = vmatprep.subr.bf16.mxu0 0
        %3315 = vmatpush1.bf16.msra.mxu0 0
        %3316 = vmatprep.subr.bf16.mxu0 0
        %3317 = vmatpush1.bf16.msra.mxu0 0
        %3318 = vmatprep.subr.bf16.mxu0 0
        %3319 = vmatpush1.bf16.msra.mxu0 0
        %3320 = vmatprep.subr.bf16.mxu0 0
        %3321 = vmatpush1.bf16.msra.mxu0 0
        %3322 = vmatprep.subr.bf16.mxu0 0
        %3323 = vmatpush1.bf16.msra.mxu0 0
        %3324 = vmatprep.subr.bf16.mxu0 0
        %3325 = vmatpush1.bf16.msra.mxu0 0
        %3326 = vmatprep.subr.bf16.mxu0 0
        %3327 = vmatpush1.bf16.msra.mxu0 0
        %3328 = vmatprep.subr.bf16.mxu0 0
        %3329 = vmatpush1.bf16.msra.mxu0 0
        %3330 = vmatprep.subr.bf16.mxu0 0
        %3331 = vmatpush1.bf16.msra.mxu0 0
        %3332 = vmatprep.subr.bf16.mxu0 0
        %3333 = vmatpush1.bf16.msra.mxu0 0
        %3334 = vmatprep.subr.bf16.mxu0 0
        %3335 = vmatpush1.bf16.msra.mxu0 0
        %3336 = vmatprep.mubr.bf16.mxu0 0
        %3337 = vmatmul.mubr.bf16.gmra.mrb[0].mxu0 %v3299
        %v3338 = vpop.f32.mrb[0].mxu0
        %v3339 = vadd.f32 0.0, %v3338
        %v3340 = vpop.f32.mrb[0].mxu0
        %v3341 = vpop.f32.mrb[0].mxu0
        %v3342 = vpop.f32.mrb[0].mxu0
        %3343 = vdwg.mxu0
        %v3345 = vsel %vm1005, %v3050, 0
        %v3348 = vsel %vm1009, %v3086, 0
        %3350 = vmatprep.subr.bf16.mxu0 0
        %3351 = vmatpush1.bf16.msra.mxu0 %v3348
        %3352 = vmatprep.subr.bf16.mxu0 0
        %3353 = vmatpush1.bf16.msra.mxu0 0
        %3354 = vmatprep.subr.bf16.mxu0 0
        %3355 = vmatpush1.bf16.msra.mxu0 0
        %3356 = vmatprep.subr.bf16.mxu0 0
        %3357 = vmatpush1.bf16.msra.mxu0 0
        %3358 = vmatprep.subr.bf16.mxu0 0
        %3359 = vmatpush1.bf16.msra.mxu0 0
        %3360 = vmatprep.subr.bf16.mxu0 0
        %3361 = vmatpush1.bf16.msra.mxu0 0
        %3362 = vmatprep.subr.bf16.mxu0 0
        %3363 = vmatpush1.bf16.msra.mxu0 0
        %3364 = vmatprep.subr.bf16.mxu0 0
        %3365 = vmatpush1.bf16.msra.mxu0 0
        %3366 = vmatprep.subr.bf16.mxu0 0
        %3367 = vmatpush1.bf16.msra.mxu0 0
        %3368 = vmatprep.subr.bf16.mxu0 0
        %3369 = vmatpush1.bf16.msra.mxu0 0
        %3370 = vmatprep.subr.bf16.mxu0 0
        %3371 = vmatpush1.bf16.msra.mxu0 0
        %3372 = vmatprep.subr.bf16.mxu0 0
        %3373 = vmatpush1.bf16.msra.mxu0 0
        %3374 = vmatprep.subr.bf16.mxu0 0
        %3375 = vmatpush1.bf16.msra.mxu0 0
        %3376 = vmatprep.subr.bf16.mxu0 0
        %3377 = vmatpush1.bf16.msra.mxu0 0
        %3378 = vmatprep.subr.bf16.mxu0 0
        %3379 = vmatpush1.bf16.msra.mxu0 0
        %3380 = vmatprep.subr.bf16.mxu0 0
        %3381 = vmatpush1.bf16.msra.mxu0 0
        %3382 = vmatprep.mubr.bf16.mxu0 0
        %3383 = vmatmul.mubr.bf16.gmra.mrb[0].mxu0 %v3345
        %v3384 = vpop.f32.mrb[0].mxu0
        %v3385 = vadd.f32 0.0, %v3384
        %v3386 = vpop.f32.mrb[0].mxu0
        %v3387 = vpop.f32.mrb[0].mxu0
        %v3388 = vpop.f32.mrb[0].mxu0
        %3389 = vdwg.mxu0
        %v3391 = vsel %vm1005, %v3051, 0
        %v3394 = vsel %vm1009, %v3087, 0
        %3396 = vmatprep.subr.bf16.mxu0 0
        %3397 = vmatpush1.bf16.msra.mxu0 %v3394
        %3398 = vmatprep.subr.bf16.mxu0 0
        %3399 = vmatpush1.bf16.msra.mxu0 0
        %3400 = vmatprep.subr.bf16.mxu0 0
        %3401 = vmatpush1.bf16.msra.mxu0 0
        %3402 = vmatprep.subr.bf16.mxu0 0
        %3403 = vmatpush1.bf16.msra.mxu0 0
        %3404 = vmatprep.subr.bf16.mxu0 0
        %3405 = vmatpush1.bf16.msra.mxu0 0
        %3406 = vmatprep.subr.bf16.mxu0 0
        %3407 = vmatpush1.bf16.msra.mxu0 0
        %3408 = vmatprep.subr.bf16.mxu0 0
        %3409 = vmatpush1.bf16.msra.mxu0 0
        %3410 = vmatprep.subr.bf16.mxu0 0
        %3411 = vmatpush1.bf16.msra.mxu0 0
        %3412 = vmatprep.subr.bf16.mxu0 0
        %3413 = vmatpush1.bf16.msra.mxu0 0
        %3414 = vmatprep.subr.bf16.mxu0 0
        %3415 = vmatpush1.bf16.msra.mxu0 0
        %3416 = vmatprep.subr.bf16.mxu0 0
        %3417 = vmatpush1.bf16.msra.mxu0 0
        %3418 = vmatprep.subr.bf16.mxu0 0
        %3419 = vmatpush1.bf16.msra.mxu0 0
        %3420 = vmatprep.subr.bf16.mxu0 0
        %3421 = vmatpush1.bf16.msra.mxu0 0
        %3422 = vmatprep.subr.bf16.mxu0 0
        %3423 = vmatpush1.bf16.msra.mxu0 0
        %3424 = vmatprep.subr.bf16.mxu0 0
        %3425 = vmatpush1.bf16.msra.mxu0 0
        %3426 = vmatprep.subr.bf16.mxu0 0
        %3427 = vmatpush1.bf16.msra.mxu0 0
        %3428 = vmatprep.mubr.bf16.mxu0 0
        %3429 = vmatmul.mubr.bf16.gmra.mrb[0].mxu0 %v3391
        %v3430 = vpop.f32.mrb[0].mxu0
        %v3431 = vadd.f32 0.0, %v3430
        %v3432 = vpop.f32.mrb[0].mxu0
        %v3433 = vpop.f32.mrb[0].mxu0
        %v3434 = vpop.f32.mrb[0].mxu0
        %3435 = vdwg.mxu0
        %vm3436 = vcmask 130048
        %v3437 = vsel %vm3436, %v3293, -inf
        %3438 = vmax.xlane.f32.xlu0 %v3437
        %v3439 = vpop.xlane.xlu0 %3438
        %v3440 = vsel %vm3436, %v3339, -inf
        %3441 = vmax.xlane.f32.xlu0 %v3440
        %v3442 = vpop.xlane.xlu0 %3441
        %v3443 = vsel %vm3436, %v3385, -inf
        %3444 = vmax.xlane.f32.xlu0 %v3443
        %v3445 = vpop.xlane.xlu0 %3444
        %v3446 = vsel %vm3436, %v3431, -inf
        %3447 = vmax.xlane.f32.xlu0 %v3446
        %v3448 = vpop.xlane.xlu0 %3447
        %v3449 = vsub.f32 %v3293, %v3439
        %v3450 = vsub.f32 %v3339, %v3442
        %v3451 = vsub.f32 %v3385, %v3445
        %v3452 = vsub.f32 %v3431, %v3448
        %v3453 = vmul.f32 %v3449, 1.442695
        %v3454 = vpow.pop %v3453
        %v3455 = vmul.f32 %v3450, 1.442695
        %v3456 = vpow.pop %v3455
        %v3457 = vmul.f32 %v3451, 1.442695
        %v3458 = vpow.pop %v3457
        %v3459 = vmul.f32 %v3452, 1.442695
        %v3460 = vpow.pop %v3459
        %v3461 = vsel %vm3436, %v3454, 0.0
        %3462 = vadd.xlane.f32.xlu0 %v3461
        %v3463 = vpop.xlane.xlu0 %3462
        %v3464 = vsel %vm3436, %v3456, 0.0
        %3465 = vadd.xlane.f32.xlu0 %v3464
        %v3466 = vpop.xlane.xlu0 %3465
        %v3467 = vsel %vm3436, %v3458, 0.0
        %3468 = vadd.xlane.f32.xlu0 %v3467
        %v3469 = vpop.xlane.xlu0 %3468
        %v3470 = vsel %vm3436, %v3460, 0.0
        %3471 = vadd.xlane.f32.xlu0 %v3470
        %v3472 = vpop.xlane.xlu0 %3471
        %v3473 = vrcp.pop %v3463
        %v3474 = vrcp.pop %v3466
        %v3475 = vrcp.pop %v3469
        %v3476 = vrcp.pop %v3472
        %v3477 = vmul.f32 %v3454, %v3473
        %v3478 = vmul.f32 %v3456, %v3474
        %v3479 = vmul.f32 %v3458, %v3475
        %v3480 = vmul.f32 %v3460, %v3476
        %v3481 = vpack.c.bf16 %v3477, %v3477
        %v3482 = vpack.c.bf16 %v3478, %v3478
        %v3483 = vpack.c.bf16 %v3479, %v3479
        %v3484 = vpack.c.bf16 %v3480, %v3480
        %v3486 = vsel %vm3436, %v3481, 0
        %3488 = vmatprep.subr.bf16.mxu0 0
        %3489 = vmatpush1.bf16.msra.mxu0 %v3248
        %3490 = vmatprep.subr.bf16.mxu0 0
        %3491 = vmatpush1.bf16.msra.mxu0 0
        %3492 = vmatprep.subr.bf16.mxu0 0
        %3493 = vmatpush1.bf16.msra.mxu0 0
        %3494 = vmatprep.subr.bf16.mxu0 0
        %3495 = vmatpush1.bf16.msra.mxu0 0
        %3496 = vmatprep.subr.bf16.mxu0 0
        %3497 = vmatpush1.bf16.msra.mxu0 0
        %3498 = vmatprep.subr.bf16.mxu0 0
        %3499 = vmatpush1.bf16.msra.mxu0 0
        %3500 = vmatprep.subr.bf16.mxu0 0
        %3501 = vmatpush1.bf16.msra.mxu0 0
        %3502 = vmatprep.subr.bf16.mxu0 0
        %3503 = vmatpush1.bf16.msra.mxu0 0
        %3504 = vmatprep.subr.bf16.mxu0 0
        %3505 = vmatpush1.bf16.msra.mxu0 0
        %3506 = vmatprep.subr.bf16.mxu0 0
        %3507 = vmatpush1.bf16.msra.mxu0 0
        %3508 = vmatprep.subr.bf16.mxu0 0
        %3509 = vmatpush1.bf16.msra.mxu0 0
        %3510 = vmatprep.subr.bf16.mxu0 0
        %3511 = vmatpush1.bf16.msra.mxu0 0
        %3512 = vmatprep.subr.bf16.mxu0 0
        %3513 = vmatpush1.bf16.msra.mxu0 0
        %3514 = vmatprep.subr.bf16.mxu0 0
        %3515 = vmatpush1.bf16.msra.mxu0 0
        %3516 = vmatprep.subr.bf16.mxu0 0
        %3517 = vmatpush1.bf16.msra.mxu0 0
        %3518 = vmatprep.subr.bf16.mxu0 0
        %3519 = vmatpush1.bf16.msra.mxu0 0
        %3520 = vmatprep.mubr.bf16.mxu0 0
        %3521 = vmatmul.mubr.bf16.gmra.mrb[0].mxu0 %v3486
        %v3522 = vpop.f32.mrb[0].mxu0
        %v3523 = vadd.f32 0.0, %v3522
        %v3524 = vpop.f32.mrb[0].mxu0
        %v3525 = vpop.f32.mrb[0].mxu0
        %v3526 = vpop.f32.mrb[0].mxu0
        %3527 = vdwg.mxu0
        %v3529 = vsel %vm3436, %v3482, 0
        %3531 = vmatprep.subr.bf16.mxu0 0
        %3532 = vmatpush1.bf16.msra.mxu0 %v3249
        %3533 = vmatprep.subr.bf16.mxu0 0
        %3534 = vmatpush1.bf16.msra.mxu0 0
        %3535 = vmatprep.subr.bf16.mxu0 0
        %3536 = vmatpush1.bf16.msra.mxu0 0
        %3537 = vmatprep.subr.bf16.mxu0 0
        %3538 = vmatpush1.bf16.msra.mxu0 0
        %3539 = vmatprep.subr.bf16.mxu0 0
        %3540 = vmatpush1.bf16.msra.mxu0 0
        %3541 = vmatprep.subr.bf16.mxu0 0
        %3542 = vmatpush1.bf16.msra.mxu0 0
        %3543 = vmatprep.subr.bf16.mxu0 0
        %3544 = vmatpush1.bf16.msra.mxu0 0
        %3545 = vmatprep.subr.bf16.mxu0 0
        %3546 = vmatpush1.bf16.msra.mxu0 0
        %3547 = vmatprep.subr.bf16.mxu0 0
        %3548 = vmatpush1.bf16.msra.mxu0 0
        %3549 = vmatprep.subr.bf16.mxu0 0
        %3550 = vmatpush1.bf16.msra.mxu0 0
        %3551 = vmatprep.subr.bf16.mxu0 0
        %3552 = vmatpush1.bf16.msra.mxu0 0
        %3553 = vmatprep.subr.bf16.mxu0 0
        %3554 = vmatpush1.bf16.msra.mxu0 0
        %3555 = vmatprep.subr.bf16.mxu0 0
        %3556 = vmatpush1.bf16.msra.mxu0 0
        %3557 = vmatprep.subr.bf16.mxu0 0
        %3558 = vmatpush1.bf16.msra.mxu0 0
        %3559 = vmatprep.subr.bf16.mxu0 0
        %3560 = vmatpush1.bf16.msra.mxu0 0
        %3561 = vmatprep.subr.bf16.mxu0 0
        %3562 = vmatpush1.bf16.msra.mxu0 0
        %3563 = vmatprep.mubr.bf16.mxu0 0
        %3564 = vmatmul.mubr.bf16.gmra.mrb[0].mxu0 %v3529
        %v3565 = vpop.f32.mrb[0].mxu0
        %v3566 = vadd.f32 0.0, %v3565
        %v3567 = vpop.f32.mrb[0].mxu0
        %v3568 = vpop.f32.mrb[0].mxu0
        %v3569 = vpop.f32.mrb[0].mxu0
        %3570 = vdwg.mxu0
        %v3572 = vsel %vm3436, %v3483, 0
        %3574 = vmatprep.subr.bf16.mxu0 0
        %3575 = vmatpush1.bf16.msra.mxu0 %v3250
        %3576 = vmatprep.subr.bf16.mxu0 0
        %3577 = vmatpush1.bf16.msra.mxu0 0
        %3578 = vmatprep.subr.bf16.mxu0 0
        %3579 = vmatpush1.bf16.msra.mxu0 0
        %3580 = vmatprep.subr.bf16.mxu0 0
        %3581 = vmatpush1.bf16.msra.mxu0 0
        %3582 = vmatprep.subr.bf16.mxu0 0
        %3583 = vmatpush1.bf16.msra.mxu0 0
        %3584 = vmatprep.subr.bf16.mxu0 0
        %3585 = vmatpush1.bf16.msra.mxu0 0
        %3586 = vmatprep.subr.bf16.mxu0 0
        %3587 = vmatpush1.bf16.msra.mxu0 0
        %3588 = vmatprep.subr.bf16.mxu0 0
        %3589 = vmatpush1.bf16.msra.mxu0 0
        %3590 = vmatprep.subr.bf16.mxu0 0
        %3591 = vmatpush1.bf16.msra.mxu0 0
        %3592 = vmatprep.subr.bf16.mxu0 0
        %3593 = vmatpush1.bf16.msra.mxu0 0
        %3594 = vmatprep.subr.bf16.mxu0 0
        %3595 = vmatpush1.bf16.msra.mxu0 0
        %3596 = vmatprep.subr.bf16.mxu0 0
        %3597 = vmatpush1.bf16.msra.mxu0 0
        %3598 = vmatprep.subr.bf16.mxu0 0
        %3599 = vmatpush1.bf16.msra.mxu0 0
        %3600 = vmatprep.subr.bf16.mxu0 0
        %3601 = vmatpush1.bf16.msra.mxu0 0
        %3602 = vmatprep.subr.bf16.mxu0 0
        %3603 = vmatpush1.bf16.msra.mxu0 0
        %3604 = vmatprep.subr.bf16.mxu0 0
        %3605 = vmatpush1.bf16.msra.mxu0 0
        %3606 = vmatprep.mubr.bf16.mxu0 0
        %3607 = vmatmul.mubr.bf16.gmra.mrb[0].mxu0 %v3572
        %v3608 = vpop.f32.mrb[0].mxu0
        %v3609 = vadd.f32 0.0, %v3608
        %v3610 = vpop.f32.mrb[0].mxu0
        %v3611 = vpop.f32.mrb[0].mxu0
        %v3612 = vpop.f32.mrb[0].mxu0
        %3613 = vdwg.mxu0
        %v3615 = vsel %vm3436, %v3484, 0
        %3617 = vmatprep.subr.bf16.mxu0 0
        %3618 = vmatpush1.bf16.msra.mxu0 %v3251
        %3619 = vmatprep.subr.bf16.mxu0 0
        %3620 = vmatpush1.bf16.msra.mxu0 0
        %3621 = vmatprep.subr.bf16.mxu0 0
        %3622 = vmatpush1.bf16.msra.mxu0 0
        %3623 = vmatprep.subr.bf16.mxu0 0
        %3624 = vmatpush1.bf16.msra.mxu0 0
        %3625 = vmatprep.subr.bf16.mxu0 0
        %3626 = vmatpush1.bf16.msra.mxu0 0
        %3627 = vmatprep.subr.bf16.mxu0 0
        %3628 = vmatpush1.bf16.msra.mxu0 0
        %3629 = vmatprep.subr.bf16.mxu0 0
        %3630 = vmatpush1.bf16.msra.mxu0 0
        %3631 = vmatprep.subr.bf16.mxu0 0
        %3632 = vmatpush1.bf16.msra.mxu0 0
        %3633 = vmatprep.subr.bf16.mxu0 0
        %3634 = vmatpush1.bf16.msra.mxu0 0
        %3635 = vmatprep.subr.bf16.mxu0 0
        %3636 = vmatpush1.bf16.msra.mxu0 0
        %3637 = vmatprep.subr.bf16.mxu0 0
        %3638 = vmatpush1.bf16.msra.mxu0 0
        %3639 = vmatprep.subr.bf16.mxu0 0
        %3640 = vmatpush1.bf16.msra.mxu0 0
        %3641 = vmatprep.subr.bf16.mxu0 0
        %3642 = vmatpush1.bf16.msra.mxu0 0
        %3643 = vmatprep.subr.bf16.mxu0 0
        %3644 = vmatpush1.bf16.msra.mxu0 0
        %3645 = vmatprep.subr.bf16.mxu0 0
        %3646 = vmatpush1.bf16.msra.mxu0 0
        %3647 = vmatprep.subr.bf16.mxu0 0
        %3648 = vmatpush1.bf16.msra.mxu0 0
        %3649 = vmatprep.mubr.bf16.mxu0 0
        %3650 = vmatmul.mubr.bf16.gmra.mrb[0].mxu0 %v3615
        %v3651 = vpop.f32.mrb[0].mxu0
        %v3652 = vadd.f32 0.0, %v3651
        %v3653 = vpop.f32.mrb[0].mxu0
        %v3654 = vpop.f32.mrb[0].mxu0
        %v3655 = vpop.f32.mrb[0].mxu0
        %3656 = vdwg.mxu0
        %3657 = vxpose.xlu0.b32.start [1/16] %v3523, 128
        %3658 = vxpose.xlu0.b32.cont [2/16] 0.0, 128
        %3659 = vxpose.xlu0.b32.cont [3/16] 0.0, 128
        %3660 = vxpose.xlu0.b32.cont [4/16] 0.0, 128
        %3661 = vxpose.xlu0.b32.cont [5/16] 0.0, 128
        %3662 = vxpose.xlu0.b32.cont [6/16] 0.0, 128
        %3663 = vxpose.xlu0.b32.cont [7/16] 0.0, 128
        %3664 = vxpose.xlu0.b32.cont [8/16] 0.0, 128
        %3665 = vxpose.xlu0.b32.cont [9/16] 0.0, 128
        %3666 = vxpose.xlu0.b32.cont [10/16] 0.0, 128
        %3667 = vxpose.xlu0.b32.cont [11/16] 0.0, 128
        %3668 = vxpose.xlu0.b32.cont [12/16] 0.0, 128
        %3669 = vxpose.xlu0.b32.cont [13/16] 0.0, 128
        %3670 = vxpose.xlu0.b32.cont [14/16] 0.0, 128
        %3671 = vxpose.xlu0.b32.cont [15/16] 0.0, 128
        %3672 = vxpose.xlu0.b32.end [16/16] 0.0, 128
        %v3673 = vpop.trf.xlu0
        %v3674 = vpop.trf.xlu0
        %v3675 = vpop.trf.xlu0
        %v3676 = vpop.trf.xlu0
        %v3677 = vpop.trf.xlu0
        %v3678 = vpop.trf.xlu0
        %v3679 = vpop.trf.xlu0
        %v3680 = vpop.trf.xlu0
        %v3681 = vpop.trf.xlu0
        %v3682 = vpop.trf.xlu0
        %v3683 = vpop.trf.xlu0
        %v3684 = vpop.trf.xlu0
        %v3685 = vpop.trf.xlu0
        %v3686 = vpop.trf.xlu0
        %v3687 = vpop.trf.xlu0
        %v3688 = vpop.trf.xlu0
        %3689 = vxpose.xlu0.b32.start [1/16] %v3566, 128
        %3690 = vxpose.xlu0.b32.cont [2/16] 0.0, 128
        %3691 = vxpose.xlu0.b32.cont [3/16] 0.0, 128
        %3692 = vxpose.xlu0.b32.cont [4/16] 0.0, 128
        %3693 = vxpose.xlu0.b32.cont [5/16] 0.0, 128
        %3694 = vxpose.xlu0.b32.cont [6/16] 0.0, 128
        %3695 = vxpose.xlu0.b32.cont [7/16] 0.0, 128
        %3696 = vxpose.xlu0.b32.cont [8/16] 0.0, 128
        %3697 = vxpose.xlu0.b32.cont [9/16] 0.0, 128
        %3698 = vxpose.xlu0.b32.cont [10/16] 0.0, 128
        %3699 = vxpose.xlu0.b32.cont [11/16] 0.0, 128
        %3700 = vxpose.xlu0.b32.cont [12/16] 0.0, 128
        %3701 = vxpose.xlu0.b32.cont [13/16] 0.0, 128
        %3702 = vxpose.xlu0.b32.cont [14/16] 0.0, 128
        %3703 = vxpose.xlu0.b32.cont [15/16] 0.0, 128
        %3704 = vxpose.xlu0.b32.end [16/16] 0.0, 128
        %v3705 = vpop.trf.xlu0
        %v3706 = vpop.trf.xlu0
        %v3707 = vpop.trf.xlu0
        %v3708 = vpop.trf.xlu0
        %v3709 = vpop.trf.xlu0
        %v3710 = vpop.trf.xlu0
        %v3711 = vpop.trf.xlu0
        %v3712 = vpop.trf.xlu0
        %v3713 = vpop.trf.xlu0
        %v3714 = vpop.trf.xlu0
        %v3715 = vpop.trf.xlu0
        %v3716 = vpop.trf.xlu0
        %v3717 = vpop.trf.xlu0
        %v3718 = vpop.trf.xlu0
        %v3719 = vpop.trf.xlu0
        %v3720 = vpop.trf.xlu0
        %3721 = vxpose.xlu0.b32.start [1/16] %v3609, 128
        %3722 = vxpose.xlu0.b32.cont [2/16] 0.0, 128
        %3723 = vxpose.xlu0.b32.cont [3/16] 0.0, 128
        %3724 = vxpose.xlu0.b32.cont [4/16] 0.0, 128
        %3725 = vxpose.xlu0.b32.cont [5/16] 0.0, 128
        %3726 = vxpose.xlu0.b32.cont [6/16] 0.0, 128
        %3727 = vxpose.xlu0.b32.cont [7/16] 0.0, 128
        %3728 = vxpose.xlu0.b32.cont [8/16] 0.0, 128
        %3729 = vxpose.xlu0.b32.cont [9/16] 0.0, 128
        %3730 = vxpose.xlu0.b32.cont [10/16] 0.0, 128
        %3731 = vxpose.xlu0.b32.cont [11/16] 0.0, 128
        %3732 = vxpose.xlu0.b32.cont [12/16] 0.0, 128
        %3733 = vxpose.xlu0.b32.cont [13/16] 0.0, 128
        %3734 = vxpose.xlu0.b32.cont [14/16] 0.0, 128
        %3735 = vxpose.xlu0.b32.cont [15/16] 0.0, 128
        %3736 = vxpose.xlu0.b32.end [16/16] 0.0, 128
        %v3737 = vpop.trf.xlu0
        %v3738 = vpop.trf.xlu0
        %v3739 = vpop.trf.xlu0
        %v3740 = vpop.trf.xlu0
        %v3741 = vpop.trf.xlu0
        %v3742 = vpop.trf.xlu0
        %v3743 = vpop.trf.xlu0
        %v3744 = vpop.trf.xlu0
        %v3745 = vpop.trf.xlu0
        %v3746 = vpop.trf.xlu0
        %v3747 = vpop.trf.xlu0
        %v3748 = vpop.trf.xlu0
        %v3749 = vpop.trf.xlu0
        %v3750 = vpop.trf.xlu0
        %v3751 = vpop.trf.xlu0
        %v3752 = vpop.trf.xlu0
        %3753 = vxpose.xlu0.b32.start [1/16] %v3652, 128
        %3754 = vxpose.xlu0.b32.cont [2/16] 0.0, 128
        %3755 = vxpose.xlu0.b32.cont [3/16] 0.0, 128
        %3756 = vxpose.xlu0.b32.cont [4/16] 0.0, 128
        %3757 = vxpose.xlu0.b32.cont [5/16] 0.0, 128
        %3758 = vxpose.xlu0.b32.cont [6/16] 0.0, 128
        %3759 = vxpose.xlu0.b32.cont [7/16] 0.0, 128
        %3760 = vxpose.xlu0.b32.cont [8/16] 0.0, 128
        %3761 = vxpose.xlu0.b32.cont [9/16] 0.0, 128
        %3762 = vxpose.xlu0.b32.cont [10/16] 0.0, 128
        %3763 = vxpose.xlu0.b32.cont [11/16] 0.0, 128
        %3764 = vxpose.xlu0.b32.cont [12/16] 0.0, 128
        %3765 = vxpose.xlu0.b32.cont [13/16] 0.0, 128
        %3766 = vxpose.xlu0.b32.cont [14/16] 0.0, 128
        %3767 = vxpose.xlu0.b32.cont [15/16] 0.0, 128
        %3768 = vxpose.xlu0.b32.end [16/16] 0.0, 128
        %v3769 = vpop.trf.xlu0
        %v3770 = vpop.trf.xlu0
        %v3771 = vpop.trf.xlu0
        %v3772 = vpop.trf.xlu0
        %v3773 = vpop.trf.xlu0
        %v3774 = vpop.trf.xlu0
        %v3775 = vpop.trf.xlu0
        %v3776 = vpop.trf.xlu0
        %v3777 = vpop.trf.xlu0
        %v3778 = vpop.trf.xlu0
        %v3779 = vpop.trf.xlu0
        %v3780 = vpop.trf.xlu0
        %v3781 = vpop.trf.xlu0
        %v3782 = vpop.trf.xlu0
        %v3783 = vpop.trf.xlu0
        %v3784 = vpop.trf.xlu0
        %3785 = vxpose.xlu0.b32.start [1/16] %v3673, 128
        %3786 = vxpose.xlu0.b32.cont [2/16] %v3705, 128
        %3787 = vxpose.xlu0.b32.cont [3/16] %v3737, 128
        %3788 = vxpose.xlu0.b32.cont [4/16] %v3769, 128
        %3789 = vxpose.xlu0.b32.cont [5/16] 0.0, 128
        %3790 = vxpose.xlu0.b32.cont [6/16] 0.0, 128
        %3791 = vxpose.xlu0.b32.cont [7/16] 0.0, 128
        %3792 = vxpose.xlu0.b32.cont [8/16] 0.0, 128
        %3793 = vxpose.xlu0.b32.cont [9/16] 0.0, 128
        %3794 = vxpose.xlu0.b32.cont [10/16] 0.0, 128
        %3795 = vxpose.xlu0.b32.cont [11/16] 0.0, 128
        %3796 = vxpose.xlu0.b32.cont [12/16] 0.0, 128
        %3797 = vxpose.xlu0.b32.cont [13/16] 0.0, 128
        %3798 = vxpose.xlu0.b32.cont [14/16] 0.0, 128
        %3799 = vxpose.xlu0.b32.cont [15/16] 0.0, 128
        %3800 = vxpose.xlu0.b32.end [16/16] 0.0, 128
        %v3801 = vpop.trf.xlu0
        %v3802 = vpop.trf.xlu0
        %v3803 = vpop.trf.xlu0
        %v3804 = vpop.trf.xlu0
        %v3805 = vpop.trf.xlu0
        %v3806 = vpop.trf.xlu0
        %v3807 = vpop.trf.xlu0
        %v3808 = vpop.trf.xlu0
        %v3809 = vpop.trf.xlu0
        %v3810 = vpop.trf.xlu0
        %v3811 = vpop.trf.xlu0
        %v3812 = vpop.trf.xlu0
        %v3813 = vpop.trf.xlu0
        %v3814 = vpop.trf.xlu0
        %v3815 = vpop.trf.xlu0
        %v3816 = vpop.trf.xlu0
        %3817 = vst.msk [vmem:[#allocation2] sm:$0xff] %vm510, %v3801
        %v3818 = vmul.f32 %v2704, 0.35355338
        %3819 = vxpose.xlu0.b32.start [1/16] %v3818, 128
        %3820 = vxpose.xlu0.b32.cont [2/16] 0.0, 128
        %3821 = vxpose.xlu0.b32.cont [3/16] 0.0, 128
        %3822 = vxpose.xlu0.b32.cont [4/16] 0.0, 128
        %3823 = vxpose.xlu0.b32.cont [5/16] 0.0, 128
        %3824 = vxpose.xlu0.b32.cont [6/16] 0.0, 128
        %3825 = vxpose.xlu0.b32.cont [7/16] 0.0, 128
        %3826 = vxpose.xlu0.b32.cont [8/16] 0.0, 128
        %3827 = vxpose.xlu0.b32.cont [9/16] 0.0, 128
        %3828 = vxpose.xlu0.b32.cont [10/16] 0.0, 128
        %3829 = vxpose.xlu0.b32.cont [11/16] 0.0, 128
        %3830 = vxpose.xlu0.b32.cont [12/16] 0.0, 128
        %3831 = vxpose.xlu0.b32.cont [13/16] 0.0, 128
        %3832 = vxpose.xlu0.b32.cont [14/16] 0.0, 128
        %3833 = vxpose.xlu0.b32.cont [15/16] 0.0, 128
        %3834 = vxpose.xlu0.b32.end [16/16] 0.0, 128
        %v3835 = vpop.trf.xlu0
        %v3836 = vpop.trf.xlu0
        %v3837 = vpop.trf.xlu0
        %v3838 = vpop.trf.xlu0
        %v3839 = vpop.trf.xlu0
        %v3840 = vpop.trf.xlu0
        %v3841 = vpop.trf.xlu0
        %v3842 = vpop.trf.xlu0
        %v3843 = vpop.trf.xlu0
        %v3844 = vpop.trf.xlu0
        %v3845 = vpop.trf.xlu0
        %v3846 = vpop.trf.xlu0
        %v3847 = vpop.trf.xlu0
        %v3848 = vpop.trf.xlu0
        %v3849 = vpop.trf.xlu0
        %v3850 = vpop.trf.xlu0
        %3851 = vxpose.xlu0.b32.start [1/16] %v3835, 128
        %3852 = vxpose.xlu0.b32.cont [2/16] 0.0, 128
        %3853 = vxpose.xlu0.b32.cont [3/16] 0.0, 128
        %3854 = vxpose.xlu0.b32.cont [4/16] 0.0, 128
        %3855 = vxpose.xlu0.b32.cont [5/16] 0.0, 128
        %3856 = vxpose.xlu0.b32.cont [6/16] 0.0, 128
        %3857 = vxpose.xlu0.b32.cont [7/16] 0.0, 128
        %3858 = vxpose.xlu0.b32.cont [8/16] 0.0, 128
        %3859 = vxpose.xlu0.b32.cont [9/16] 0.0, 128
        %3860 = vxpose.xlu0.b32.cont [10/16] 0.0, 128
        %3861 = vxpose.xlu0.b32.cont [11/16] 0.0, 128
        %3862 = vxpose.xlu0.b32.cont [12/16] 0.0, 128
        %3863 = vxpose.xlu0.b32.cont [13/16] 0.0, 128
        %3864 = vxpose.xlu0.b32.cont [14/16] 0.0, 128
        %3865 = vxpose.xlu0.b32.cont [15/16] 0.0, 128
        %3866 = vxpose.xlu0.b32.end [16/16] 0.0, 128
        %v3867 = vpop.trf.xlu0
        %v3868 = vpop.trf.xlu0
        %v3869 = vpop.trf.xlu0
        %v3870 = vpop.trf.xlu0
        %v3871 = vpop.trf.xlu0
        %v3872 = vpop.trf.xlu0
        %v3873 = vpop.trf.xlu0
        %v3874 = vpop.trf.xlu0
        %v3875 = vpop.trf.xlu0
        %v3876 = vpop.trf.xlu0
        %v3877 = vpop.trf.xlu0
        %v3878 = vpop.trf.xlu0
        %v3879 = vpop.trf.xlu0
        %v3880 = vpop.trf.xlu0
        %v3881 = vpop.trf.xlu0
        %v3882 = vpop.trf.xlu0
        %3883 = vxpose.xlu0.b32.start [1/16] %v3836, 128
        %3884 = vxpose.xlu0.b32.cont [2/16] 0.0, 128
        %3885 = vxpose.xlu0.b32.cont [3/16] 0.0, 128
        %3886 = vxpose.xlu0.b32.cont [4/16] 0.0, 128
        %3887 = vxpose.xlu0.b32.cont [5/16] 0.0, 128
        %3888 = vxpose.xlu0.b32.cont [6/16] 0.0, 128
        %3889 = vxpose.xlu0.b32.cont [7/16] 0.0, 128
        %3890 = vxpose.xlu0.b32.cont [8/16] 0.0, 128
        %3891 = vxpose.xlu0.b32.cont [9/16] 0.0, 128
        %3892 = vxpose.xlu0.b32.cont [10/16] 0.0, 128
        %3893 = vxpose.xlu0.b32.cont [11/16] 0.0, 128
        %3894 = vxpose.xlu0.b32.cont [12/16] 0.0, 128
        %3895 = vxpose.xlu0.b32.cont [13/16] 0.0, 128
        %3896 = vxpose.xlu0.b32.cont [14/16] 0.0, 128
        %3897 = vxpose.xlu0.b32.cont [15/16] 0.0, 128
        %3898 = vxpose.xlu0.b32.end [16/16] 0.0, 128
        %v3899 = vpop.trf.xlu0
        %v3900 = vpop.trf.xlu0
        %v3901 = vpop.trf.xlu0
        %v3902 = vpop.trf.xlu0
        %v3903 = vpop.trf.xlu0
        %v3904 = vpop.trf.xlu0
        %v3905 = vpop.trf.xlu0
        %v3906 = vpop.trf.xlu0
        %v3907 = vpop.trf.xlu0
        %v3908 = vpop.trf.xlu0
        %v3909 = vpop.trf.xlu0
        %v3910 = vpop.trf.xlu0
        %v3911 = vpop.trf.xlu0
        %v3912 = vpop.trf.xlu0
        %v3913 = vpop.trf.xlu0
        %v3914 = vpop.trf.xlu0
        %3915 = vxpose.xlu0.b32.start [1/16] %v3837, 128
        %3916 = vxpose.xlu0.b32.cont [2/16] 0.0, 128
        %3917 = vxpose.xlu0.b32.cont [3/16] 0.0, 128
        %3918 = vxpose.xlu0.b32.cont [4/16] 0.0, 128
        %3919 = vxpose.xlu0.b32.cont [5/16] 0.0, 128
        %3920 = vxpose.xlu0.b32.cont [6/16] 0.0, 128
        %3921 = vxpose.xlu0.b32.cont [7/16] 0.0, 128
        %3922 = vxpose.xlu0.b32.cont [8/16] 0.0, 128
        %3923 = vxpose.xlu0.b32.cont [9/16] 0.0, 128
        %3924 = vxpose.xlu0.b32.cont [10/16] 0.0, 128
        %3925 = vxpose.xlu0.b32.cont [11/16] 0.0, 128
        %3926 = vxpose.xlu0.b32.cont [12/16] 0.0, 128
        %3927 = vxpose.xlu0.b32.cont [13/16] 0.0, 128
        %3928 = vxpose.xlu0.b32.cont [14/16] 0.0, 128
        %3929 = vxpose.xlu0.b32.cont [15/16] 0.0, 128
        %3930 = vxpose.xlu0.b32.end [16/16] 0.0, 128
        %v3931 = vpop.trf.xlu0
        %v3932 = vpop.trf.xlu0
        %v3933 = vpop.trf.xlu0
        %v3934 = vpop.trf.xlu0
        %v3935 = vpop.trf.xlu0
        %v3936 = vpop.trf.xlu0
        %v3937 = vpop.trf.xlu0
        %v3938 = vpop.trf.xlu0
        %v3939 = vpop.trf.xlu0
        %v3940 = vpop.trf.xlu0
        %v3941 = vpop.trf.xlu0
        %v3942 = vpop.trf.xlu0
        %v3943 = vpop.trf.xlu0
        %v3944 = vpop.trf.xlu0
        %v3945 = vpop.trf.xlu0
        %v3946 = vpop.trf.xlu0
        %3947 = vxpose.xlu0.b32.start [1/16] %v3838, 128
        %3948 = vxpose.xlu0.b32.cont [2/16] 0.0, 128
        %3949 = vxpose.xlu0.b32.cont [3/16] 0.0, 128
        %3950 = vxpose.xlu0.b32.cont [4/16] 0.0, 128
        %3951 = vxpose.xlu0.b32.cont [5/16] 0.0, 128
        %3952 = vxpose.xlu0.b32.cont [6/16] 0.0, 128
        %3953 = vxpose.xlu0.b32.cont [7/16] 0.0, 128
        %3954 = vxpose.xlu0.b32.cont [8/16] 0.0, 128
        %3955 = vxpose.xlu0.b32.cont [9/16] 0.0, 128
        %3956 = vxpose.xlu0.b32.cont [10/16] 0.0, 128
        %3957 = vxpose.xlu0.b32.cont [11/16] 0.0, 128
        %3958 = vxpose.xlu0.b32.cont [12/16] 0.0, 128
        %3959 = vxpose.xlu0.b32.cont [13/16] 0.0, 128
        %3960 = vxpose.xlu0.b32.cont [14/16] 0.0, 128
        %3961 = vxpose.xlu0.b32.cont [15/16] 0.0, 128
        %3962 = vxpose.xlu0.b32.end [16/16] 0.0, 128
        %v3963 = vpop.trf.xlu0
        %v3964 = vpop.trf.xlu0
        %v3965 = vpop.trf.xlu0
        %v3966 = vpop.trf.xlu0
        %v3967 = vpop.trf.xlu0
        %v3968 = vpop.trf.xlu0
        %v3969 = vpop.trf.xlu0
        %v3970 = vpop.trf.xlu0
        %v3971 = vpop.trf.xlu0
        %v3972 = vpop.trf.xlu0
        %v3973 = vpop.trf.xlu0
        %v3974 = vpop.trf.xlu0
        %v3975 = vpop.trf.xlu0
        %v3976 = vpop.trf.xlu0
        %v3977 = vpop.trf.xlu0
        %v3978 = vpop.trf.xlu0
        %v3979 = vpack.c.bf16 %v3867, %v3867
        %v3980 = vpack.c.bf16 %v3899, %v3899
        %v3981 = vpack.c.bf16 %v3931, %v3931
        %v3982 = vpack.c.bf16 %v3963, %v3963
        %3983 = vxpose.xlu0.b32.start [1/16] %v2791, 128
        %3984 = vxpose.xlu0.b32.cont [2/16] %v2794, 128
        %3985 = vxpose.xlu0.b32.cont [3/16] 0.0, 128
        %3986 = vxpose.xlu0.b32.cont [4/16] 0.0, 128
        %3987 = vxpose.xlu0.b32.cont [5/16] 0.0, 128
        %3988 = vxpose.xlu0.b32.cont [6/16] 0.0, 128
        %3989 = vxpose.xlu0.b32.cont [7/16] 0.0, 128
        %3990 = vxpose.xlu0.b32.cont [8/16] 0.0, 128
        %3991 = vxpose.xlu0.b32.cont [9/16] 0.0, 128
        %3992 = vxpose.xlu0.b32.cont [10/16] 0.0, 128
        %3993 = vxpose.xlu0.b32.cont [11/16] 0.0, 128
        %3994 = vxpose.xlu0.b32.cont [12/16] 0.0, 128
        %3995 = vxpose.xlu0.b32.cont [13/16] 0.0, 128
        %3996 = vxpose.xlu0.b32.cont [14/16] 0.0, 128
        %3997 = vxpose.xlu0.b32.cont [15/16] 0.0, 128
        %3998 = vxpose.xlu0.b32.end [16/16] 0.0, 128
        %v3999 = vpop.trf.xlu0
        %v4000 = vpop.trf.xlu0
        %v4001 = vpop.trf.xlu0
        %v4002 = vpop.trf.xlu0
        %v4003 = vpop.trf.xlu0
        %v4004 = vpop.trf.xlu0
        %v4005 = vpop.trf.xlu0
        %v4006 = vpop.trf.xlu0
        %v4007 = vpop.trf.xlu0
        %v4008 = vpop.trf.xlu0
        %v4009 = vpop.trf.xlu0
        %v4010 = vpop.trf.xlu0
        %v4011 = vpop.trf.xlu0
        %v4012 = vpop.trf.xlu0
        %v4013 = vpop.trf.xlu0
        %v4014 = vpop.trf.xlu0
        %v4015 = vpack.c.bf16 %v3999, %v3999
        %v4016 = vpack.c.bf16 %v4000, %v4000
        %v4017 = vpack.c.bf16 %v4001, %v4001
        %v4018 = vpack.c.bf16 %v4002, %v4002
        %4019 = vxpose.xlu0.b32.start [1/16] %v2881, 128
        %4020 = vxpose.xlu0.b32.cont [2/16] %v2884, 128
        %4021 = vxpose.xlu0.b32.cont [3/16] 0.0, 128
        %4022 = vxpose.xlu0.b32.cont [4/16] 0.0, 128
        %4023 = vxpose.xlu0.b32.cont [5/16] 0.0, 128
        %4024 = vxpose.xlu0.b32.cont [6/16] 0.0, 128
        %4025 = vxpose.xlu0.b32.cont [7/16] 0.0, 128
        %4026 = vxpose.xlu0.b32.cont [8/16] 0.0, 128
        %4027 = vxpose.xlu0.b32.cont [9/16] 0.0, 128
        %4028 = vxpose.xlu0.b32.cont [10/16] 0.0, 128
        %4029 = vxpose.xlu0.b32.cont [11/16] 0.0, 128
        %4030 = vxpose.xlu0.b32.cont [12/16] 0.0, 128
        %4031 = vxpose.xlu0.b32.cont [13/16] 0.0, 128
        %4032 = vxpose.xlu0.b32.cont [14/16] 0.0, 128
        %4033 = vxpose.xlu0.b32.cont [15/16] 0.0, 128
        %4034 = vxpose.xlu0.b32.end [16/16] 0.0, 128
        %v4035 = vpop.trf.xlu0
        %v4036 = vpop.trf.xlu0
        %v4037 = vpop.trf.xlu0
        %v4038 = vpop.trf.xlu0
        %v4039 = vpop.trf.xlu0
        %v4040 = vpop.trf.xlu0
        %v4041 = vpop.trf.xlu0
        %v4042 = vpop.trf.xlu0
        %v4043 = vpop.trf.xlu0
        %v4044 = vpop.trf.xlu0
        %v4045 = vpop.trf.xlu0
        %v4046 = vpop.trf.xlu0
        %v4047 = vpop.trf.xlu0
        %v4048 = vpop.trf.xlu0
        %v4049 = vpop.trf.xlu0
        %v4050 = vpop.trf.xlu0
        %4051 = vxpose.xlu0.b32.start [1/16] %v4035, 128
        %4052 = vxpose.xlu0.b32.cont [2/16] 0.0, 128
        %4053 = vxpose.xlu0.b32.cont [3/16] 0.0, 128
        %4054 = vxpose.xlu0.b32.cont [4/16] 0.0, 128
        %4055 = vxpose.xlu0.b32.cont [5/16] 0.0, 128
        %4056 = vxpose.xlu0.b32.cont [6/16] 0.0, 128
        %4057 = vxpose.xlu0.b32.cont [7/16] 0.0, 128
        %4058 = vxpose.xlu0.b32.cont [8/16] 0.0, 128
        %4059 = vxpose.xlu0.b32.cont [9/16] 0.0, 128
        %4060 = vxpose.xlu0.b32.cont [10/16] 0.0, 128
        %4061 = vxpose.xlu0.b32.cont [11/16] 0.0, 128
        %4062 = vxpose.xlu0.b32.cont [12/16] 0.0, 128
        %4063 = vxpose.xlu0.b32.cont [13/16] 0.0, 128
        %4064 = vxpose.xlu0.b32.cont [14/16] 0.0, 128
        %4065 = vxpose.xlu0.b32.cont [15/16] 0.0, 128
        %4066 = vxpose.xlu0.b32.end [16/16] 0.0, 128
        %v4067 = vpop.trf.xlu0
        %v4068 = vpop.trf.xlu0
        %v4069 = vpop.trf.xlu0
        %v4070 = vpop.trf.xlu0
        %v4071 = vpop.trf.xlu0
        %v4072 = vpop.trf.xlu0
        %v4073 = vpop.trf.xlu0
        %v4074 = vpop.trf.xlu0
        %v4075 = vpop.trf.xlu0
        %v4076 = vpop.trf.xlu0
        %v4077 = vpop.trf.xlu0
        %v4078 = vpop.trf.xlu0
        %v4079 = vpop.trf.xlu0
        %v4080 = vpop.trf.xlu0
        %v4081 = vpop.trf.xlu0
        %v4082 = vpop.trf.xlu0
        %4083 = vxpose.xlu0.b32.start [1/16] %v4036, 128
        %4084 = vxpose.xlu0.b32.cont [2/16] 0.0, 128
        %4085 = vxpose.xlu0.b32.cont [3/16] 0.0, 128
        %4086 = vxpose.xlu0.b32.cont [4/16] 0.0, 128
        %4087 = vxpose.xlu0.b32.cont [5/16] 0.0, 128
        %4088 = vxpose.xlu0.b32.cont [6/16] 0.0, 128
        %4089 = vxpose.xlu0.b32.cont [7/16] 0.0, 128
        %4090 = vxpose.xlu0.b32.cont [8/16] 0.0, 128
        %4091 = vxpose.xlu0.b32.cont [9/16] 0.0, 128
        %4092 = vxpose.xlu0.b32.cont [10/16] 0.0, 128
        %4093 = vxpose.xlu0.b32.cont [11/16] 0.0, 128
        %4094 = vxpose.xlu0.b32.cont [12/16] 0.0, 128
        %4095 = vxpose.xlu0.b32.cont [13/16] 0.0, 128
        %4096 = vxpose.xlu0.b32.cont [14/16] 0.0, 128
        %4097 = vxpose.xlu0.b32.cont [15/16] 0.0, 128
        %4098 = vxpose.xlu0.b32.end [16/16] 0.0, 128
        %v4099 = vpop.trf.xlu0
        %v4100 = vpop.trf.xlu0
        %v4101 = vpop.trf.xlu0
        %v4102 = vpop.trf.xlu0
        %v4103 = vpop.trf.xlu0
        %v4104 = vpop.trf.xlu0
        %v4105 = vpop.trf.xlu0
        %v4106 = vpop.trf.xlu0
        %v4107 = vpop.trf.xlu0
        %v4108 = vpop.trf.xlu0
        %v4109 = vpop.trf.xlu0
        %v4110 = vpop.trf.xlu0
        %v4111 = vpop.trf.xlu0
        %v4112 = vpop.trf.xlu0
        %v4113 = vpop.trf.xlu0
        %v4114 = vpop.trf.xlu0
        %4115 = vxpose.xlu0.b32.start [1/16] %v4037, 128
        %4116 = vxpose.xlu0.b32.cont [2/16] 0.0, 128
        %4117 = vxpose.xlu0.b32.cont [3/16] 0.0, 128
        %4118 = vxpose.xlu0.b32.cont [4/16] 0.0, 128
        %4119 = vxpose.xlu0.b32.cont [5/16] 0.0, 128
        %4120 = vxpose.xlu0.b32.cont [6/16] 0.0, 128
        %4121 = vxpose.xlu0.b32.cont [7/16] 0.0, 128
        %4122 = vxpose.xlu0.b32.cont [8/16] 0.0, 128
        %4123 = vxpose.xlu0.b32.cont [9/16] 0.0, 128
        %4124 = vxpose.xlu0.b32.cont [10/16] 0.0, 128
        %4125 = vxpose.xlu0.b32.cont [11/16] 0.0, 128
        %4126 = vxpose.xlu0.b32.cont [12/16] 0.0, 128
        %4127 = vxpose.xlu0.b32.cont [13/16] 0.0, 128
        %4128 = vxpose.xlu0.b32.cont [14/16] 0.0, 128
        %4129 = vxpose.xlu0.b32.cont [15/16] 0.0, 128
        %4130 = vxpose.xlu0.b32.end [16/16] 0.0, 128
        %v4131 = vpop.trf.xlu0
        %v4132 = vpop.trf.xlu0
        %v4133 = vpop.trf.xlu0
        %v4134 = vpop.trf.xlu0
        %v4135 = vpop.trf.xlu0
        %v4136 = vpop.trf.xlu0
        %v4137 = vpop.trf.xlu0
        %v4138 = vpop.trf.xlu0
        %v4139 = vpop.trf.xlu0
        %v4140 = vpop.trf.xlu0
        %v4141 = vpop.trf.xlu0
        %v4142 = vpop.trf.xlu0
        %v4143 = vpop.trf.xlu0
        %v4144 = vpop.trf.xlu0
        %v4145 = vpop.trf.xlu0
        %v4146 = vpop.trf.xlu0
        %4147 = vxpose.xlu0.b32.start [1/16] %v4038, 128
        %4148 = vxpose.xlu0.b32.cont [2/16] 0.0, 128
        %4149 = vxpose.xlu0.b32.cont [3/16] 0.0, 128
        %4150 = vxpose.xlu0.b32.cont [4/16] 0.0, 128
        %4151 = vxpose.xlu0.b32.cont [5/16] 0.0, 128
        %4152 = vxpose.xlu0.b32.cont [6/16] 0.0, 128
        %4153 = vxpose.xlu0.b32.cont [7/16] 0.0, 128
        %4154 = vxpose.xlu0.b32.cont [8/16] 0.0, 128
        %4155 = vxpose.xlu0.b32.cont [9/16] 0.0, 128
        %4156 = vxpose.xlu0.b32.cont [10/16] 0.0, 128
        %4157 = vxpose.xlu0.b32.cont [11/16] 0.0, 128
        %4158 = vxpose.xlu0.b32.cont [12/16] 0.0, 128
        %4159 = vxpose.xlu0.b32.cont [13/16] 0.0, 128
        %4160 = vxpose.xlu0.b32.cont [14/16] 0.0, 128
        %4161 = vxpose.xlu0.b32.cont [15/16] 0.0, 128
        %4162 = vxpose.xlu0.b32.end [16/16] 0.0, 128
        %v4163 = vpop.trf.xlu0
        %v4164 = vpop.trf.xlu0
        %v4165 = vpop.trf.xlu0
        %v4166 = vpop.trf.xlu0
        %v4167 = vpop.trf.xlu0
        %v4168 = vpop.trf.xlu0
        %v4169 = vpop.trf.xlu0
        %v4170 = vpop.trf.xlu0
        %v4171 = vpop.trf.xlu0
        %v4172 = vpop.trf.xlu0
        %v4173 = vpop.trf.xlu0
        %v4174 = vpop.trf.xlu0
        %v4175 = vpop.trf.xlu0
        %v4176 = vpop.trf.xlu0
        %v4177 = vpop.trf.xlu0
        %v4178 = vpop.trf.xlu0
        %v4179 = vpack.c.bf16 %v4068, %v4067
        %v4180 = vpack.c.bf16 %v4100, %v4099
        %v4181 = vpack.c.bf16 %v4132, %v4131
        %v4182 = vpack.c.bf16 %v4164, %v4163
        %v4184 = vsel %vm1005, %v3979, 0
        %v4187 = vsel %vm1009, %v4015, 0
        %4189 = vmatprep.subr.bf16.mxu0 0
        %4190 = vmatpush1.bf16.msra.mxu0 %v4187
        %4191 = vmatprep.subr.bf16.mxu0 0
        %4192 = vmatpush1.bf16.msra.mxu0 0
        %4193 = vmatprep.subr.bf16.mxu0 0
        %4194 = vmatpush1.bf16.msra.mxu0 0
        %4195 = vmatprep.subr.bf16.mxu0 0
        %4196 = vmatpush1.bf16.msra.mxu0 0
        %4197 = vmatprep.subr.bf16.mxu0 0
        %4198 = vmatpush1.bf16.msra.mxu0 0
        %4199 = vmatprep.subr.bf16.mxu0 0
        %4200 = vmatpush1.bf16.msra.mxu0 0
        %4201 = vmatprep.subr.bf16.mxu0 0
        %4202 = vmatpush1.bf16.msra.mxu0 0
        %4203 = vmatprep.subr.bf16.mxu0 0
        %4204 = vmatpush1.bf16.msra.mxu0 0
        %4205 = vmatprep.subr.bf16.mxu0 0
        %4206 = vmatpush1.bf16.msra.mxu0 0
        %4207 = vmatprep.subr.bf16.mxu0 0
        %4208 = vmatpush1.bf16.msra.mxu0 0
        %4209 = vmatprep.subr.bf16.mxu0 0
        %4210 = vmatpush1.bf16.msra.mxu0 0
        %4211 = vmatprep.subr.bf16.mxu0 0
        %4212 = vmatpush1.bf16.msra.mxu0 0
        %4213 = vmatprep.subr.bf16.mxu0 0
        %4214 = vmatpush1.bf16.msra.mxu0 0
        %4215 = vmatprep.subr.bf16.mxu0 0
        %4216 = vmatpush1.bf16.msra.mxu0 0
        %4217 = vmatprep.subr.bf16.mxu0 0
        %4218 = vmatpush1.bf16.msra.mxu0 0
        %4219 = vmatprep.subr.bf16.mxu0 0
        %4220 = vmatpush1.bf16.msra.mxu0 0
        %4221 = vmatprep.mubr.bf16.mxu0 0
        %4222 = vmatmul.mubr.bf16.gmra.mrb[0].mxu0 %v4184
        %v4223 = vpop.f32.mrb[0].mxu0
        %v4224 = vadd.f32 0.0, %v4223
        %v4225 = vpop.f32.mrb[0].mxu0
        %v4226 = vpop.f32.mrb[0].mxu0
        %v4227 = vpop.f32.mrb[0].mxu0
        %4228 = vdwg.mxu0
        %v4230 = vsel %vm1005, %v3980, 0
        %v4233 = vsel %vm1009, %v4016, 0
        %4235 = vmatprep.subr.bf16.mxu0 0
        %4236 = vmatpush1.bf16.msra.mxu0 %v4233
        %4237 = vmatprep.subr.bf16.mxu0 0
        %4238 = vmatpush1.bf16.msra.mxu0 0
        %4239 = vmatprep.subr.bf16.mxu0 0
        %4240 = vmatpush1.bf16.msra.mxu0 0
        %4241 = vmatprep.subr.bf16.mxu0 0
        %4242 = vmatpush1.bf16.msra.mxu0 0
        %4243 = vmatprep.subr.bf16.mxu0 0
        %4244 = vmatpush1.bf16.msra.mxu0 0
        %4245 = vmatprep.subr.bf16.mxu0 0
        %4246 = vmatpush1.bf16.msra.mxu0 0
        %4247 = vmatprep.subr.bf16.mxu0 0
        %4248 = vmatpush1.bf16.msra.mxu0 0
        %4249 = vmatprep.subr.bf16.mxu0 0
        %4250 = vmatpush1.bf16.msra.mxu0 0
        %4251 = vmatprep.subr.bf16.mxu0 0
        %4252 = vmatpush1.bf16.msra.mxu0 0
        %4253 = vmatprep.subr.bf16.mxu0 0
        %4254 = vmatpush1.bf16.msra.mxu0 0
        %4255 = vmatprep.subr.bf16.mxu0 0
        %4256 = vmatpush1.bf16.msra.mxu0 0
        %4257 = vmatprep.subr.bf16.mxu0 0
        %4258 = vmatpush1.bf16.msra.mxu0 0
        %4259 = vmatprep.subr.bf16.mxu0 0
        %4260 = vmatpush1.bf16.msra.mxu0 0
        %4261 = vmatprep.subr.bf16.mxu0 0
        %4262 = vmatpush1.bf16.msra.mxu0 0
        %4263 = vmatprep.subr.bf16.mxu0 0
        %4264 = vmatpush1.bf16.msra.mxu0 0
        %4265 = vmatprep.subr.bf16.mxu0 0
        %4266 = vmatpush1.bf16.msra.mxu0 0
        %4267 = vmatprep.mubr.bf16.mxu0 0
        %4268 = vmatmul.mubr.bf16.gmra.mrb[0].mxu0 %v4230
        %v4269 = vpop.f32.mrb[0].mxu0
        %v4270 = vadd.f32 0.0, %v4269
        %v4271 = vpop.f32.mrb[0].mxu0
        %v4272 = vpop.f32.mrb[0].mxu0
        %v4273 = vpop.f32.mrb[0].mxu0
        %4274 = vdwg.mxu0
        %v4276 = vsel %vm1005, %v3981, 0
        %v4279 = vsel %vm1009, %v4017, 0
        %4281 = vmatprep.subr.bf16.mxu0 0
        %4282 = vmatpush1.bf16.msra.mxu0 %v4279
        %4283 = vmatprep.subr.bf16.mxu0 0
        %4284 = vmatpush1.bf16.msra.mxu0 0
        %4285 = vmatprep.subr.bf16.mxu0 0
        %4286 = vmatpush1.bf16.msra.mxu0 0
        %4287 = vmatprep.subr.bf16.mxu0 0
        %4288 = vmatpush1.bf16.msra.mxu0 0
        %4289 = vmatprep.subr.bf16.mxu0 0
        %4290 = vmatpush1.bf16.msra.mxu0 0
        %4291 = vmatprep.subr.bf16.mxu0 0
        %4292 = vmatpush1.bf16.msra.mxu0 0
        %4293 = vmatprep.subr.bf16.mxu0 0
        %4294 = vmatpush1.bf16.msra.mxu0 0
        %4295 = vmatprep.subr.bf16.mxu0 0
        %4296 = vmatpush1.bf16.msra.mxu0 0
        %4297 = vmatprep.subr.bf16.mxu0 0
        %4298 = vmatpush1.bf16.msra.mxu0 0
        %4299 = vmatprep.subr.bf16.mxu0 0
        %4300 = vmatpush1.bf16.msra.mxu0 0
        %4301 = vmatprep.subr.bf16.mxu0 0
        %4302 = vmatpush1.bf16.msra.mxu0 0
        %4303 = vmatprep.subr.bf16.mxu0 0
        %4304 = vmatpush1.bf16.msra.mxu0 0
        %4305 = vmatprep.subr.bf16.mxu0 0
        %4306 = vmatpush1.bf16.msra.mxu0 0
        %4307 = vmatprep.subr.bf16.mxu0 0
        %4308 = vmatpush1.bf16.msra.mxu0 0
        %4309 = vmatprep.subr.bf16.mxu0 0
        %4310 = vmatpush1.bf16.msra.mxu0 0
        %4311 = vmatprep.subr.bf16.mxu0 0
        %4312 = vmatpush1.bf16.msra.mxu0 0
        %4313 = vmatprep.mubr.bf16.mxu0 0
        %4314 = vmatmul.mubr.bf16.gmra.mrb[0].mxu0 %v4276
        %v4315 = vpop.f32.mrb[0].mxu0
        %v4316 = vadd.f32 0.0, %v4315
        %v4317 = vpop.f32.mrb[0].mxu0
        %v4318 = vpop.f32.mrb[0].mxu0
        %v4319 = vpop.f32.mrb[0].mxu0
        %4320 = vdwg.mxu0
        %v4322 = vsel %vm1005, %v3982, 0
        %v4325 = vsel %vm1009, %v4018, 0
        %4327 = vmatprep.subr.bf16.mxu0 0
        %4328 = vmatpush1.bf16.msra.mxu0 %v4325
        %4329 = vmatprep.subr.bf16.mxu0 0
        %4330 = vmatpush1.bf16.msra.mxu0 0
        %4331 = vmatprep.subr.bf16.mxu0 0
        %4332 = vmatpush1.bf16.msra.mxu0 0
        %4333 = vmatprep.subr.bf16.mxu0 0
        %4334 = vmatpush1.bf16.msra.mxu0 0
        %4335 = vmatprep.subr.bf16.mxu0 0
        %4336 = vmatpush1.bf16.msra.mxu0 0
        %4337 = vmatprep.subr.bf16.mxu0 0
        %4338 = vmatpush1.bf16.msra.mxu0 0
        %4339 = vmatprep.subr.bf16.mxu0 0
        %4340 = vmatpush1.bf16.msra.mxu0 0
        %4341 = vmatprep.subr.bf16.mxu0 0
        %4342 = vmatpush1.bf16.msra.mxu0 0
        %4343 = vmatprep.subr.bf16.mxu0 0
        %4344 = vmatpush1.bf16.msra.mxu0 0
        %4345 = vmatprep.subr.bf16.mxu0 0
        %4346 = vmatpush1.bf16.msra.mxu0 0
        %4347 = vmatprep.subr.bf16.mxu0 0
        %4348 = vmatpush1.bf16.msra.mxu0 0
        %4349 = vmatprep.subr.bf16.mxu0 0
        %4350 = vmatpush1.bf16.msra.mxu0 0
        %4351 = vmatprep.subr.bf16.mxu0 0
        %4352 = vmatpush1.bf16.msra.mxu0 0
        %4353 = vmatprep.subr.bf16.mxu0 0
        %4354 = vmatpush1.bf16.msra.mxu0 0
        %4355 = vmatprep.subr.bf16.mxu0 0
        %4356 = vmatpush1.bf16.msra.mxu0 0
        %4357 = vmatprep.subr.bf16.mxu0 0
        %4358 = vmatpush1.bf16.msra.mxu0 0
        %4359 = vmatprep.mubr.bf16.mxu0 0
        %4360 = vmatmul.mubr.bf16.gmra.mrb[0].mxu0 %v4322
        %v4361 = vpop.f32.mrb[0].mxu0
        %v4362 = vadd.f32 0.0, %v4361
        %v4363 = vpop.f32.mrb[0].mxu0
        %v4364 = vpop.f32.mrb[0].mxu0
        %v4365 = vpop.f32.mrb[0].mxu0
        %4366 = vdwg.mxu0
        %v4367 = vsel %vm3436, %v4224, -inf
        %4368 = vmax.xlane.f32.xlu0 %v4367
        %v4369 = vpop.xlane.xlu0 %4368
        %v4370 = vsel %vm3436, %v4270, -inf
        %4371 = vmax.xlane.f32.xlu0 %v4370
        %v4372 = vpop.xlane.xlu0 %4371
        %v4373 = vsel %vm3436, %v4316, -inf
        %4374 = vmax.xlane.f32.xlu0 %v4373
        %v4375 = vpop.xlane.xlu0 %4374
        %v4376 = vsel %vm3436, %v4362, -inf
        %4377 = vmax.xlane.f32.xlu0 %v4376
        %v4378 = vpop.xlane.xlu0 %4377
        %v4379 = vsub.f32 %v4224, %v4369
        %v4380 = vsub.f32 %v4270, %v4372
        %v4381 = vsub.f32 %v4316, %v4375
        %v4382 = vsub.f32 %v4362, %v4378
        %v4383 = vmul.f32 %v4379, 1.442695
        %v4384 = vpow.pop %v4383
        %v4385 = vmul.f32 %v4380, 1.442695
        %v4386 = vpow.pop %v4385
        %v4387 = vmul.f32 %v4381, 1.442695
        %v4388 = vpow.pop %v4387
        %v4389 = vmul.f32 %v4382, 1.442695
        %v4390 = vpow.pop %v4389
        %v4391 = vsel %vm3436, %v4384, 0.0
        %4392 = vadd.xlane.f32.xlu0 %v4391
        %v4393 = vpop.xlane.xlu0 %4392
        %v4394 = vsel %vm3436, %v4386, 0.0
        %4395 = vadd.xlane.f32.xlu0 %v4394
        %v4396 = vpop.xlane.xlu0 %4395
        %v4397 = vsel %vm3436, %v4388, 0.0
        %4398 = vadd.xlane.f32.xlu0 %v4397
        %v4399 = vpop.xlane.xlu0 %4398
        %v4400 = vsel %vm3436, %v4390, 0.0
        %4401 = vadd.xlane.f32.xlu0 %v4400
        %v4402 = vpop.xlane.xlu0 %4401
        %v4403 = vrcp.pop %v4393
        %v4404 = vrcp.pop %v4396
        %v4405 = vrcp.pop %v4399
        %v4406 = vrcp.pop %v4402
        %v4407 = vmul.f32 %v4384, %v4403
        %v4408 = vmul.f32 %v4386, %v4404
        %v4409 = vmul.f32 %v4388, %v4405
        %v4410 = vmul.f32 %v4390, %v4406
        %v4411 = vpack.c.bf16 %v4407, %v4407
        %v4412 = vpack.c.bf16 %v4408, %v4408
        %v4413 = vpack.c.bf16 %v4409, %v4409
        %v4414 = vpack.c.bf16 %v4410, %v4410
        %v4416 = vsel %vm3436, %v4411, 0
        %4418 = vmatprep.subr.bf16.mxu0 0
        %4419 = vmatpush1.bf16.msra.mxu0 %v4179
        %4420 = vmatprep.subr.bf16.mxu0 0
        %4421 = vmatpush1.bf16.msra.mxu0 0
        %4422 = vmatprep.subr.bf16.mxu0 0
        %4423 = vmatpush1.bf16.msra.mxu0 0
        %4424 = vmatprep.subr.bf16.mxu0 0
        %4425 = vmatpush1.bf16.msra.mxu0 0
        %4426 = vmatprep.subr.bf16.mxu0 0
        %4427 = vmatpush1.bf16.msra.mxu0 0
        %4428 = vmatprep.subr.bf16.mxu0 0
        %4429 = vmatpush1.bf16.msra.mxu0 0
        %4430 = vmatprep.subr.bf16.mxu0 0
        %4431 = vmatpush1.bf16.msra.mxu0 0
        %4432 = vmatprep.subr.bf16.mxu0 0
        %4433 = vmatpush1.bf16.msra.mxu0 0
        %4434 = vmatprep.subr.bf16.mxu0 0
        %4435 = vmatpush1.bf16.msra.mxu0 0
        %4436 = vmatprep.subr.bf16.mxu0 0
        %4437 = vmatpush1.bf16.msra.mxu0 0
        %4438 = vmatprep.subr.bf16.mxu0 0
        %4439 = vmatpush1.bf16.msra.mxu0 0
        %4440 = vmatprep.subr.bf16.mxu0 0
        %4441 = vmatpush1.bf16.msra.mxu0 0
        %4442 = vmatprep.subr.bf16.mxu0 0
        %4443 = vmatpush1.bf16.msra.mxu0 0
        %4444 = vmatprep.subr.bf16.mxu0 0
        %4445 = vmatpush1.bf16.msra.mxu0 0
        %4446 = vmatprep.subr.bf16.mxu0 0
        %4447 = vmatpush1.bf16.msra.mxu0 0
        %4448 = vmatprep.subr.bf16.mxu0 0
        %4449 = vmatpush1.bf16.msra.mxu0 0
        %4450 = vmatprep.mubr.bf16.mxu0 0
        %4451 = vmatmul.mubr.bf16.gmra.mrb[0].mxu0 %v4416
        %v4452 = vpop.f32.mrb[0].mxu0
        %v4453 = vadd.f32 0.0, %v4452
        %v4454 = vpop.f32.mrb[0].mxu0
        %v4455 = vpop.f32.mrb[0].mxu0
        %v4456 = vpop.f32.mrb[0].mxu0
        %4457 = vdwg.mxu0
        %v4459 = vsel %vm3436, %v4412, 0
        %4461 = vmatprep.subr.bf16.mxu0 0
        %4462 = vmatpush1.bf16.msra.mxu0 %v4180
        %4463 = vmatprep.subr.bf16.mxu0 0
        %4464 = vmatpush1.bf16.msra.mxu0 0
        %4465 = vmatprep.subr.bf16.mxu0 0
        %4466 = vmatpush1.bf16.msra.mxu0 0
        %4467 = vmatprep.subr.bf16.mxu0 0
        %4468 = vmatpush1.bf16.msra.mxu0 0
        %4469 = vmatprep.subr.bf16.mxu0 0
        %4470 = vmatpush1.bf16.msra.mxu0 0
        %4471 = vmatprep.subr.bf16.mxu0 0
        %4472 = vmatpush1.bf16.msra.mxu0 0
        %4473 = vmatprep.subr.bf16.mxu0 0
        %4474 = vmatpush1.bf16.msra.mxu0 0
        %4475 = vmatprep.subr.bf16.mxu0 0
        %4476 = vmatpush1.bf16.msra.mxu0 0
        %4477 = vmatprep.subr.bf16.mxu0 0
        %4478 = vmatpush1.bf16.msra.mxu0 0
        %4479 = vmatprep.subr.bf16.mxu0 0
        %4480 = vmatpush1.bf16.msra.mxu0 0
        %4481 = vmatprep.subr.bf16.mxu0 0
        %4482 = vmatpush1.bf16.msra.mxu0 0
        %4483 = vmatprep.subr.bf16.mxu0 0
        %4484 = vmatpush1.bf16.msra.mxu0 0
        %4485 = vmatprep.subr.bf16.mxu0 0
        %4486 = vmatpush1.bf16.msra.mxu0 0
        %4487 = vmatprep.subr.bf16.mxu0 0
        %4488 = vmatpush1.bf16.msra.mxu0 0
        %4489 = vmatprep.subr.bf16.mxu0 0
        %4490 = vmatpush1.bf16.msra.mxu0 0
        %4491 = vmatprep.subr.bf16.mxu0 0
        %4492 = vmatpush1.bf16.msra.mxu0 0
        %4493 = vmatprep.mubr.bf16.mxu0 0
        %4494 = vmatmul.mubr.bf16.gmra.mrb[0].mxu0 %v4459
        %v4495 = vpop.f32.mrb[0].mxu0
        %v4496 = vadd.f32 0.0, %v4495
        %v4497 = vpop.f32.mrb[0].mxu0
        %v4498 = vpop.f32.mrb[0].mxu0
        %v4499 = vpop.f32.mrb[0].mxu0
        %4500 = vdwg.mxu0
        %v4502 = vsel %vm3436, %v4413, 0
        %4504 = vmatprep.subr.bf16.mxu0 0
        %4505 = vmatpush1.bf16.msra.mxu0 %v4181
        %4506 = vmatprep.subr.bf16.mxu0 0
        %4507 = vmatpush1.bf16.msra.mxu0 0
        %4508 = vmatprep.subr.bf16.mxu0 0
        %4509 = vmatpush1.bf16.msra.mxu0 0
        %4510 = vmatprep.subr.bf16.mxu0 0
        %4511 = vmatpush1.bf16.msra.mxu0 0
        %4512 = vmatprep.subr.bf16.mxu0 0
        %4513 = vmatpush1.bf16.msra.mxu0 0
        %4514 = vmatprep.subr.bf16.mxu0 0
        %4515 = vmatpush1.bf16.msra.mxu0 0
        %4516 = vmatprep.subr.bf16.mxu0 0
        %4517 = vmatpush1.bf16.msra.mxu0 0
        %4518 = vmatprep.subr.bf16.mxu0 0
        %4519 = vmatpush1.bf16.msra.mxu0 0
        %4520 = vmatprep.subr.bf16.mxu0 0
        %4521 = vmatpush1.bf16.msra.mxu0 0
        %4522 = vmatprep.subr.bf16.mxu0 0
        %4523 = vmatpush1.bf16.msra.mxu0 0
        %4524 = vmatprep.subr.bf16.mxu0 0
        %4525 = vmatpush1.bf16.msra.mxu0 0
        %4526 = vmatprep.subr.bf16.mxu0 0
        %4527 = vmatpush1.bf16.msra.mxu0 0
        %4528 = vmatprep.subr.bf16.mxu0 0
        %4529 = vmatpush1.bf16.msra.mxu0 0
        %4530 = vmatprep.subr.bf16.mxu0 0
        %4531 = vmatpush1.bf16.msra.mxu0 0
        %4532 = vmatprep.subr.bf16.mxu0 0
        %4533 = vmatpush1.bf16.msra.mxu0 0
        %4534 = vmatprep.subr.bf16.mxu0 0
        %4535 = vmatpush1.bf16.msra.mxu0 0
        %4536 = vmatprep.mubr.bf16.mxu0 0
        %4537 = vmatmul.mubr.bf16.gmra.mrb[0].mxu0 %v4502
        %v4538 = vpop.f32.mrb[0].mxu0
        %v4539 = vadd.f32 0.0, %v4538
        %v4540 = vpop.f32.mrb[0].mxu0
        %v4541 = vpop.f32.mrb[0].mxu0
        %v4542 = vpop.f32.mrb[0].mxu0
        %4543 = vdwg.mxu0
        %v4545 = vsel %vm3436, %v4414, 0
        %4547 = vmatprep.subr.bf16.mxu0 0
        %4548 = vmatpush1.bf16.msra.mxu0 %v4182
        %4549 = vmatprep.subr.bf16.mxu0 0
        %4550 = vmatpush1.bf16.msra.mxu0 0
        %4551 = vmatprep.subr.bf16.mxu0 0
        %4552 = vmatpush1.bf16.msra.mxu0 0
        %4553 = vmatprep.subr.bf16.mxu0 0
        %4554 = vmatpush1.bf16.msra.mxu0 0
        %4555 = vmatprep.subr.bf16.mxu0 0
        %4556 = vmatpush1.bf16.msra.mxu0 0
        %4557 = vmatprep.subr.bf16.mxu0 0
        %4558 = vmatpush1.bf16.msra.mxu0 0
        %4559 = vmatprep.subr.bf16.mxu0 0
        %4560 = vmatpush1.bf16.msra.mxu0 0
        %4561 = vmatprep.subr.bf16.mxu0 0
        %4562 = vmatpush1.bf16.msra.mxu0 0
        %4563 = vmatprep.subr.bf16.mxu0 0
        %4564 = vmatpush1.bf16.msra.mxu0 0
        %4565 = vmatprep.subr.bf16.mxu0 0
        %4566 = vmatpush1.bf16.msra.mxu0 0
        %4567 = vmatprep.subr.bf16.mxu0 0
        %4568 = vmatpush1.bf16.msra.mxu0 0
        %4569 = vmatprep.subr.bf16.mxu0 0
        %4570 = vmatpush1.bf16.msra.mxu0 0
        %4571 = vmatprep.subr.bf16.mxu0 0
        %4572 = vmatpush1.bf16.msra.mxu0 0
        %4573 = vmatprep.subr.bf16.mxu0 0
        %4574 = vmatpush1.bf16.msra.mxu0 0
        %4575 = vmatprep.subr.bf16.mxu0 0
        %4576 = vmatpush1.bf16.msra.mxu0 0
        %4577 = vmatprep.subr.bf16.mxu0 0
        %4578 = vmatpush1.bf16.msra.mxu0 0
        %4579 = vmatprep.mubr.bf16.mxu0 0
        %4580 = vmatmul.mubr.bf16.gmra.mrb[0].mxu0 %v4545
        %v4581 = vpop.f32.mrb[0].mxu0
        %v4582 = vadd.f32 0.0, %v4581
        %v4583 = vpop.f32.mrb[0].mxu0
        %v4584 = vpop.f32.mrb[0].mxu0
        %v4585 = vpop.f32.mrb[0].mxu0
        %4586 = vdwg.mxu0
        %4587 = vxpose.xlu0.b32.start [1/16] %v4453, 128
        %4588 = vxpose.xlu0.b32.cont [2/16] 0.0, 128
        %4589 = vxpose.xlu0.b32.cont [3/16] 0.0, 128
        %4590 = vxpose.xlu0.b32.cont [4/16] 0.0, 128
        %4591 = vxpose.xlu0.b32.cont [5/16] 0.0, 128
        %4592 = vxpose.xlu0.b32.cont [6/16] 0.0, 128
        %4593 = vxpose.xlu0.b32.cont [7/16] 0.0, 128
        %4594 = vxpose.xlu0.b32.cont [8/16] 0.0, 128
        %4595 = vxpose.xlu0.b32.cont [9/16] 0.0, 128
        %4596 = vxpose.xlu0.b32.cont [10/16] 0.0, 128
        %4597 = vxpose.xlu0.b32.cont [11/16] 0.0, 128
        %4598 = vxpose.xlu0.b32.cont [12/16] 0.0, 128
        %4599 = vxpose.xlu0.b32.cont [13/16] 0.0, 128
        %4600 = vxpose.xlu0.b32.cont [14/16] 0.0, 128
        %4601 = vxpose.xlu0.b32.cont [15/16] 0.0, 128
        %4602 = vxpose.xlu0.b32.end [16/16] 0.0, 128
        %v4603 = vpop.trf.xlu0
        %v4604 = vpop.trf.xlu0
        %v4605 = vpop.trf.xlu0
        %v4606 = vpop.trf.xlu0
        %v4607 = vpop.trf.xlu0
        %v4608 = vpop.trf.xlu0
        %v4609 = vpop.trf.xlu0
        %v4610 = vpop.trf.xlu0
        %v4611 = vpop.trf.xlu0
        %v4612 = vpop.trf.xlu0
        %v4613 = vpop.trf.xlu0
        %v4614 = vpop.trf.xlu0
        %v4615 = vpop.trf.xlu0
        %v4616 = vpop.trf.xlu0
        %v4617 = vpop.trf.xlu0
        %v4618 = vpop.trf.xlu0
        %4619 = vxpose.xlu0.b32.start [1/16] %v4496, 128
        %4620 = vxpose.xlu0.b32.cont [2/16] 0.0, 128
        %4621 = vxpose.xlu0.b32.cont [3/16] 0.0, 128
        %4622 = vxpose.xlu0.b32.cont [4/16] 0.0, 128
        %4623 = vxpose.xlu0.b32.cont [5/16] 0.0, 128
        %4624 = vxpose.xlu0.b32.cont [6/16] 0.0, 128
        %4625 = vxpose.xlu0.b32.cont [7/16] 0.0, 128
        %4626 = vxpose.xlu0.b32.cont [8/16] 0.0, 128
        %4627 = vxpose.xlu0.b32.cont [9/16] 0.0, 128
        %4628 = vxpose.xlu0.b32.cont [10/16] 0.0, 128
        %4629 = vxpose.xlu0.b32.cont [11/16] 0.0, 128
        %4630 = vxpose.xlu0.b32.cont [12/16] 0.0, 128
        %4631 = vxpose.xlu0.b32.cont [13/16] 0.0, 128
        %4632 = vxpose.xlu0.b32.cont [14/16] 0.0, 128
        %4633 = vxpose.xlu0.b32.cont [15/16] 0.0, 128
        %4634 = vxpose.xlu0.b32.end [16/16] 0.0, 128
        %v4635 = vpop.trf.xlu0
        %v4636 = vpop.trf.xlu0
        %v4637 = vpop.trf.xlu0
        %v4638 = vpop.trf.xlu0
        %v4639 = vpop.trf.xlu0
        %v4640 = vpop.trf.xlu0
        %v4641 = vpop.trf.xlu0
        %v4642 = vpop.trf.xlu0
        %v4643 = vpop.trf.xlu0
        %v4644 = vpop.trf.xlu0
        %v4645 = vpop.trf.xlu0
        %v4646 = vpop.trf.xlu0
        %v4647 = vpop.trf.xlu0
        %v4648 = vpop.trf.xlu0
        %v4649 = vpop.trf.xlu0
        %v4650 = vpop.trf.xlu0
        %4651 = vxpose.xlu0.b32.start [1/16] %v4539, 128
        %4652 = vxpose.xlu0.b32.cont [2/16] 0.0, 128
        %4653 = vxpose.xlu0.b32.cont [3/16] 0.0, 128
        %4654 = vxpose.xlu0.b32.cont [4/16] 0.0, 128
        %4655 = vxpose.xlu0.b32.cont [5/16] 0.0, 128
        %4656 = vxpose.xlu0.b32.cont [6/16] 0.0, 128
        %4657 = vxpose.xlu0.b32.cont [7/16] 0.0, 128
        %4658 = vxpose.xlu0.b32.cont [8/16] 0.0, 128
        %4659 = vxpose.xlu0.b32.cont [9/16] 0.0, 128
        %4660 = vxpose.xlu0.b32.cont [10/16] 0.0, 128
        %4661 = vxpose.xlu0.b32.cont [11/16] 0.0, 128
        %4662 = vxpose.xlu0.b32.cont [12/16] 0.0, 128
        %4663 = vxpose.xlu0.b32.cont [13/16] 0.0, 128
        %4664 = vxpose.xlu0.b32.cont [14/16] 0.0, 128
        %4665 = vxpose.xlu0.b32.cont [15/16] 0.0, 128
        %4666 = vxpose.xlu0.b32.end [16/16] 0.0, 128
        %v4667 = vpop.trf.xlu0
        %v4668 = vpop.trf.xlu0
        %v4669 = vpop.trf.xlu0
        %v4670 = vpop.trf.xlu0
        %v4671 = vpop.trf.xlu0
        %v4672 = vpop.trf.xlu0
        %v4673 = vpop.trf.xlu0
        %v4674 = vpop.trf.xlu0
        %v4675 = vpop.trf.xlu0
        %v4676 = vpop.trf.xlu0
        %v4677 = vpop.trf.xlu0
        %v4678 = vpop.trf.xlu0
        %v4679 = vpop.trf.xlu0
        %v4680 = vpop.trf.xlu0
        %v4681 = vpop.trf.xlu0
        %v4682 = vpop.trf.xlu0
        %4683 = vxpose.xlu0.b32.start [1/16] %v4582, 128
        %4684 = vxpose.xlu0.b32.cont [2/16] 0.0, 128
        %4685 = vxpose.xlu0.b32.cont [3/16] 0.0, 128
        %4686 = vxpose.xlu0.b32.cont [4/16] 0.0, 128
        %4687 = vxpose.xlu0.b32.cont [5/16] 0.0, 128
        %4688 = vxpose.xlu0.b32.cont [6/16] 0.0, 128
        %4689 = vxpose.xlu0.b32.cont [7/16] 0.0, 128
        %4690 = vxpose.xlu0.b32.cont [8/16] 0.0, 128
        %4691 = vxpose.xlu0.b32.cont [9/16] 0.0, 128
        %4692 = vxpose.xlu0.b32.cont [10/16] 0.0, 128
        %4693 = vxpose.xlu0.b32.cont [11/16] 0.0, 128
        %4694 = vxpose.xlu0.b32.cont [12/16] 0.0, 128
        %4695 = vxpose.xlu0.b32.cont [13/16] 0.0, 128
        %4696 = vxpose.xlu0.b32.cont [14/16] 0.0, 128
        %4697 = vxpose.xlu0.b32.cont [15/16] 0.0, 128
        %4698 = vxpose.xlu0.b32.end [16/16] 0.0, 128
        %v4699 = vpop.trf.xlu0
        %v4700 = vpop.trf.xlu0
        %v4701 = vpop.trf.xlu0
        %v4702 = vpop.trf.xlu0
        %v4703 = vpop.trf.xlu0
        %v4704 = vpop.trf.xlu0
        %v4705 = vpop.trf.xlu0
        %v4706 = vpop.trf.xlu0
        %v4707 = vpop.trf.xlu0
        %v4708 = vpop.trf.xlu0
        %v4709 = vpop.trf.xlu0
        %v4710 = vpop.trf.xlu0
        %v4711 = vpop.trf.xlu0
        %v4712 = vpop.trf.xlu0
        %v4713 = vpop.trf.xlu0
        %v4714 = vpop.trf.xlu0
        %4715 = vxpose.xlu0.b32.start [1/16] %v4603, 128
        %4716 = vxpose.xlu0.b32.cont [2/16] %v4635, 128
        %4717 = vxpose.xlu0.b32.cont [3/16] %v4667, 128
        %4718 = vxpose.xlu0.b32.cont [4/16] %v4699, 128
        %4719 = vxpose.xlu0.b32.cont [5/16] 0.0, 128
        %4720 = vxpose.xlu0.b32.cont [6/16] 0.0, 128
        %4721 = vxpose.xlu0.b32.cont [7/16] 0.0, 128
        %4722 = vxpose.xlu0.b32.cont [8/16] 0.0, 128
        %4723 = vxpose.xlu0.b32.cont [9/16] 0.0, 128
        %4724 = vxpose.xlu0.b32.cont [10/16] 0.0, 128
        %4725 = vxpose.xlu0.b32.cont [11/16] 0.0, 128
        %4726 = vxpose.xlu0.b32.cont [12/16] 0.0, 128
        %4727 = vxpose.xlu0.b32.cont [13/16] 0.0, 128
        %4728 = vxpose.xlu0.b32.cont [14/16] 0.0, 128
        %4729 = vxpose.xlu0.b32.cont [15/16] 0.0, 128
        %4730 = vxpose.xlu0.b32.end [16/16] 0.0, 128
        %v4731 = vpop.trf.xlu0
        %v4732 = vpop.trf.xlu0
        %v4733 = vpop.trf.xlu0
        %v4734 = vpop.trf.xlu0
        %v4735 = vpop.trf.xlu0
        %v4736 = vpop.trf.xlu0
        %v4737 = vpop.trf.xlu0
        %v4738 = vpop.trf.xlu0
        %v4739 = vpop.trf.xlu0
        %v4740 = vpop.trf.xlu0
        %v4741 = vpop.trf.xlu0
        %v4742 = vpop.trf.xlu0
        %v4743 = vpop.trf.xlu0
        %v4744 = vpop.trf.xlu0
        %v4745 = vpop.trf.xlu0
        %v4746 = vpop.trf.xlu0
        %4747 = vst.msk [vmem:[#allocation2 + $0x8] sm:$0xff] %vm510, %v4731
        %v4748 = vld [vmem:[#allocation2] sm:$0xff]
        %v4749 = vld [vmem:[#allocation2 + $0x8] sm:$0xff]
        %v4750 = vpack.c.bf16 %v4749, %v4748
        %s4751 = scalar_lea.vmem %s405, 80 [#allocation11]
        %v4752 = vld [vmem:[%s4751] sm:$0xf]
        %v4753 = vld [vmem:[%s4751 + $0x4] sm:$0xf]
        %v4754 = vld [vmem:[%s4751 + $0x8] sm:$0xf]
        %v4755 = vld [vmem:[%s4751 + $0xc] sm:$0xf]
        %v4756 = vlaneseq
        %v4757 = vshrl.u32 %v4756, 7
        %v4758 = vsub.s32 7, %v4757
        %v4759 = vrot.slane %v489, %v4758
        %v4764 = vunpack.c.l.b16 %v4752
        %v4765 = vunpack.c.l.b16 %v4753
        %v4766 = vunpack.c.l.b16 %v4754
        %v4767 = vunpack.c.l.b16 %v4755
        %v4768 = vpack.c.b16 %v4765, %v4764
        %v4769 = vpack.c.b16 %v4767, %v4766
        %v4773 = vsel %vm510, %v4750, 0
        %4775 = vmatprep.subr.bf16.mxu0 0
        %4776 = vmatpush1.bf16.msra.mxu0 %v4768
        %4777 = vmatprep.subr.bf16.mxu0 0
        %4778 = vmatpush1.bf16.msra.mxu0 %v4769
        %4779 = vmatprep.subr.bf16.mxu0 0
        %4780 = vmatpush1.bf16.msra.mxu0 0
        %4781 = vmatprep.subr.bf16.mxu0 0
        %4782 = vmatpush1.bf16.msra.mxu0 0
        %4783 = vmatprep.subr.bf16.mxu0 0
        %4784 = vmatpush1.bf16.msra.mxu0 0
        %4785 = vmatprep.subr.bf16.mxu0 0
        %4786 = vmatpush1.bf16.msra.mxu0 0
        %4787 = vmatprep.subr.bf16.mxu0 0
        %4788 = vmatpush1.bf16.msra.mxu0 0
        %4789 = vmatprep.subr.bf16.mxu0 0
        %4790 = vmatpush1.bf16.msra.mxu0 0
        %4791 = vmatprep.subr.bf16.mxu0 0
        %4792 = vmatpush1.bf16.msra.mxu0 0
        %4793 = vmatprep.subr.bf16.mxu0 0
        %4794 = vmatpush1.bf16.msra.mxu0 0
        %4795 = vmatprep.subr.bf16.mxu0 0
        %4796 = vmatpush1.bf16.msra.mxu0 0
        %4797 = vmatprep.subr.bf16.mxu0 0
        %4798 = vmatpush1.bf16.msra.mxu0 0
        %4799 = vmatprep.subr.bf16.mxu0 0
        %4800 = vmatpush1.bf16.msra.mxu0 0
        %4801 = vmatprep.subr.bf16.mxu0 0
        %4802 = vmatpush1.bf16.msra.mxu0 0
        %4803 = vmatprep.subr.bf16.mxu0 0
        %4804 = vmatpush1.bf16.msra.mxu0 0
        %4805 = vmatprep.subr.bf16.mxu0 0
        %4806 = vmatpush1.bf16.msra.mxu0 0
        %4807 = vmatprep.mubr.bf16.mxu0 0
        %4808 = vmatmul.mubr.bf16.gmra.mrb[0].mxu0 %v4773
        %v4809 = vpop.f32.mrb[0].mxu0
        %v4810 = vadd.f32 %v4759, %v4809
        %v4811 = vpop.f32.mrb[0].mxu0
        %v4812 = vpop.f32.mrb[0].mxu0
        %v4813 = vadd.f32 %v4759, %v4812
        %v4814 = vpop.f32.mrb[0].mxu0
        %4815 = vdwg.mxu0
        %v4816 = vadd.f32 %v2637, %v4810
        %v4817 = vadd.f32 %v2638, %v4813
        %v4818 = vsel %vm510, %v4816, 0.0
        %4819 = vadd.xlane.f32.xlu0 %v4818
        %v4820 = vpop.xlane.xlu0 %4819
        %v4821 = vsel %vm510, %v4817, 0.0
        %4822 = vadd.xlane.f32.xlu0 %v4821
        %v4823 = vpop.xlane.xlu0 %4822
        %v4824 = vmul.f32 %v4820, %v2606
        %v4825 = vmul.f32 %v4823, %v2606
        %v4826 = vsub.f32 %v4816, %v4824
        %v4827 = vsub.f32 %v4817, %v4825
        %v4828 = vmul.f32 %v4826, %v4826
        %v4829 = vmul.f32 %v4827, %v4827
        %v4830 = vsel %vm510, %v4828, 0.0
        %4831 = vadd.xlane.f32.xlu0 %v4830
        %v4832 = vpop.xlane.xlu0 %4831
        %v4833 = vsel %vm510, %v4829, 0.0
        %4834 = vadd.xlane.f32.xlu0 %v4833
        %v4835 = vpop.xlane.xlu0 %4834
        %v4836 = vmul.f32 %v4832, %v2606
        %v4837 = vmul.f32 %v4835, %v2606
        %v4838 = vadd.f32 %v4836, 1e-05
        %v4839 = vadd.f32 %v4837, 1e-05
        %v4840 = vrsqrt.pop %v4838
        %v4841 = vrsqrt.pop %v4839
        %v4842 = vmul.f32 %v4826, %v4840
        %v4843 = vmul.f32 %v4827, %v4841
        %v4844 = vlaneseq
        %v4845 = vshrl.u32 %v4844, 7
        %v4846 = vsub.s32 4, %v4845
        %v4847 = vrot.slane %v490, %v4846
        %v4848 = vmul.f32 %v4842, %v4847
        %v4849 = vmul.f32 %v4843, %v4847
        %v4850 = vlaneseq
        %v4851 = vshrl.u32 %v4850, 7
        %v4852 = vsub.s32 5, %v4851
        %v4853 = vrot.slane %v490, %v4852
        %v4854 = vadd.f32 %v4848, %v4853
        %v4855 = vadd.f32 %v4849, %v4853
        %v4856 = vpack.c.bf16 %v4855, %v4854
        %v4857 = vld [vmem:[%s464] sm:$0xf]
        %v4858 = vld [vmem:[%s464 + $0x4] sm:$0xf]
        %v4859 = vld [vmem:[%s464 + $0x8] sm:$0xf]
        %v4860 = vld [vmem:[%s464 + $0xc] sm:$0xf]
        %v4861 = vlaneseq
        %v4862 = vshrl.u32 %v4861, 7
        %v4863 = vsub.s32 0, %v4862
        %v4864 = vrot.slane %v490, %v4863
        %v4869 = vunpack.c.l.b16 %v4857
        %v4870 = vunpack.c.l.b16 %v4858
        %v4871 = vunpack.c.l.b16 %v4859
        %v4872 = vunpack.c.l.b16 %v4860
        %v4873 = vpack.c.b16 %v4870, %v4869
        %v4874 = vpack.c.b16 %v4872, %v4871
        %v4878 = vsel %vm510, %v4856, 0
        %4880 = vmatprep.subr.bf16.mxu0 0
        %4881 = vmatpush1.bf16.msra.mxu0 %v4873
        %4882 = vmatprep.subr.bf16.mxu0 0
        %4883 = vmatpush1.bf16.msra.mxu0 %v4874
        %4884 = vmatprep.subr.bf16.mxu0 0
        %4885 = vmatpush1.bf16.msra.mxu0 0
        %4886 = vmatprep.subr.bf16.mxu0 0
        %4887 = vmatpush1.bf16.msra.mxu0 0
        %4888 = vmatprep.subr.bf16.mxu0 0
        %4889 = vmatpush1.bf16.msra.mxu0 0
        %4890 = vmatprep.subr.bf16.mxu0 0
        %4891 = vmatpush1.bf16.msra.mxu0 0
        %4892 = vmatprep.subr.bf16.mxu0 0
        %4893 = vmatpush1.bf16.msra.mxu0 0
        %4894 = vmatprep.subr.bf16.mxu0 0
        %4895 = vmatpush1.bf16.msra.mxu0 0
        %4896 = vmatprep.subr.bf16.mxu0 0
        %4897 = vmatpush1.bf16.msra.mxu0 0
        %4898 = vmatprep.subr.bf16.mxu0 0
        %4899 = vmatpush1.bf16.msra.mxu0 0
        %4900 = vmatprep.subr.bf16.mxu0 0
        %4901 = vmatpush1.bf16.msra.mxu0 0
        %4902 = vmatprep.subr.bf16.mxu0 0
        %4903 = vmatpush1.bf16.msra.mxu0 0
        %4904 = vmatprep.subr.bf16.mxu0 0
        %4905 = vmatpush1.bf16.msra.mxu0 0
        %4906 = vmatprep.subr.bf16.mxu0 0
        %4907 = vmatpush1.bf16.msra.mxu0 0
        %4908 = vmatprep.subr.bf16.mxu0 0
        %4909 = vmatpush1.bf16.msra.mxu0 0
        %4910 = vmatprep.subr.bf16.mxu0 0
        %4911 = vmatpush1.bf16.msra.mxu0 0
        %4912 = vmatprep.mubr.bf16.mxu0 0
        %4913 = vmatmul.mubr.bf16.gmra.mrb[0].mxu0 %v4878
        %v4914 = vpop.f32.mrb[0].mxu0
        %v4915 = vadd.f32 %v4864, %v4914
        %v4916 = vpop.f32.mrb[0].mxu0
        %v4917 = vpop.f32.mrb[0].mxu0
        %v4918 = vadd.f32 %v4864, %v4917
        %v4919 = vpop.f32.mrb[0].mxu0
        %4920 = vdwg.mxu0
        %v4921 = vmax.f32 %v4915, 0.0
        %v4922 = vmax.f32 %v4918, 0.0
        %v4923 = vpack.c.bf16 %v4922, %v4921
        %v4924 = vld [vmem:[%s469] sm:$0xf]
        %v4925 = vld [vmem:[%s469 + $0x4] sm:$0xf]
        %v4926 = vld [vmem:[%s469 + $0x8] sm:$0xf]
        %v4927 = vld [vmem:[%s469 + $0xc] sm:$0xf]
        %v4928 = vld [vmem:[%s469 + $0x10] sm:$0xf]
        %v4929 = vld [vmem:[%s469 + $0x14] sm:$0xf]
        %v4930 = vld [vmem:[%s469 + $0x18] sm:$0xf]
        %v4931 = vld [vmem:[%s469 + $0x1c] sm:$0xf]
        %v4932 = vlaneseq
        %v4933 = vshrl.u32 %v4932, 7
        %v4934 = vsub.s32 1, %v4933
        %v4935 = vrot.slane %v490, %v4934
        %v4944 = vunpack.c.l.b16 %v4924
        %v4945 = vunpack.c.l.b16 %v4925
        %v4946 = vunpack.c.l.b16 %v4926
        %v4947 = vunpack.c.l.b16 %v4927
        %v4948 = vunpack.c.l.b16 %v4928
        %v4949 = vunpack.c.l.b16 %v4929
        %v4950 = vunpack.c.l.b16 %v4930
        %v4951 = vunpack.c.l.b16 %v4931
        %v4952 = vpack.c.b16 %v4945, %v4944
        %v4953 = vpack.c.b16 %v4947, %v4946
        %v4954 = vpack.c.b16 %v4949, %v4948
        %v4955 = vpack.c.b16 %v4951, %v4950
        %vm4960 = vcmask 523264
        %v4962 = vsel %vm4960, %v4923, 0
        %4964 = vmatprep.subr.bf16.mxu0 0
        %4965 = vmatpush1.bf16.msra.mxu0 %v4952
        %4966 = vmatprep.subr.bf16.mxu0 0
        %4967 = vmatpush1.bf16.msra.mxu0 %v4953
        %4968 = vmatprep.subr.bf16.mxu0 0
        %4969 = vmatpush1.bf16.msra.mxu0 %v4954
        %4970 = vmatprep.subr.bf16.mxu0 0
        %4971 = vmatpush1.bf16.msra.mxu0 %v4955
        %4972 = vmatprep.subr.bf16.mxu0 0
        %4973 = vmatpush1.bf16.msra.mxu0 0
        %4974 = vmatprep.subr.bf16.mxu0 0
        %4975 = vmatpush1.bf16.msra.mxu0 0
        %4976 = vmatprep.subr.bf16.mxu0 0
        %4977 = vmatpush1.bf16.msra.mxu0 0
        %4978 = vmatprep.subr.bf16.mxu0 0
        %4979 = vmatpush1.bf16.msra.mxu0 0
        %4980 = vmatprep.subr.bf16.mxu0 0
        %4981 = vmatpush1.bf16.msra.mxu0 0
        %4982 = vmatprep.subr.bf16.mxu0 0
        %4983 = vmatpush1.bf16.msra.mxu0 0
        %4984 = vmatprep.subr.bf16.mxu0 0
        %4985 = vmatpush1.bf16.msra.mxu0 0
        %4986 = vmatprep.subr.bf16.mxu0 0
        %4987 = vmatpush1.bf16.msra.mxu0 0
        %4988 = vmatprep.subr.bf16.mxu0 0
        %4989 = vmatpush1.bf16.msra.mxu0 0
        %4990 = vmatprep.subr.bf16.mxu0 0
        %4991 = vmatpush1.bf16.msra.mxu0 0
        %4992 = vmatprep.subr.bf16.mxu0 0
        %4993 = vmatpush1.bf16.msra.mxu0 0
        %4994 = vmatprep.subr.bf16.mxu0 0
        %4995 = vmatpush1.bf16.msra.mxu0 0
        %4996 = vmatprep.mubr.bf16.mxu0 0
        %4997 = vmatmul.mubr.bf16.gmra.mrb[0].mxu0 %v4962
        %v4998 = vpop.f32.mrb[0].mxu0
        %v4999 = vadd.f32 %v4935, %v4998
        %v5000 = vpop.f32.mrb[0].mxu0
        %v5001 = vpop.f32.mrb[0].mxu0
        %v5002 = vadd.f32 %v4935, %v5001
        %v5003 = vpop.f32.mrb[0].mxu0
        %5004 = vdwg.mxu0
        %v5005 = vadd.f32 %v4854, %v4999
        %v5006 = vadd.f32 %v4855, %v5002
        %v5007 = vsel %vm510, %v5005, 0.0
        %5008 = vadd.xlane.f32.xlu0 %v5007
        %v5009 = vpop.xlane.xlu0 %5008
        %v5010 = vsel %vm510, %v5006, 0.0
        %5011 = vadd.xlane.f32.xlu0 %v5010
        %v5012 = vpop.xlane.xlu0 %5011
        %v5013 = vmul.f32 %v5009, %v2606
        %v5014 = vmul.f32 %v5012, %v2606
        %v5015 = vsub.f32 %v5005, %v5013
        %v5016 = vsub.f32 %v5006, %v5014
        %v5017 = vmul.f32 %v5015, %v5015
        %v5018 = vmul.f32 %v5016, %v5016
        %v5019 = vsel %vm510, %v5017, 0.0
        %5020 = vadd.xlane.f32.xlu0 %v5019
        %v5021 = vpop.xlane.xlu0 %5020
        %v5022 = vsel %vm510, %v5018, 0.0
        %5023 = vadd.xlane.f32.xlu0 %v5022
        %v5024 = vpop.xlane.xlu0 %5023
        %v5025 = vmul.f32 %v5021, %v2606
        %v5026 = vmul.f32 %v5024, %v2606
        %v5027 = vadd.f32 %v5025, 1e-05
        %v5028 = vadd.f32 %v5026, 1e-05
        %v5029 = vrsqrt.pop %v5027
        %v5030 = vrsqrt.pop %v5028
        %v5031 = vmul.f32 %v5015, %v5029
        %v5032 = vmul.f32 %v5016, %v5030
        %v5033 = vlaneseq
        %v5034 = vshrl.u32 %v5033, 7
        %v5035 = vsub.s32 6, %v5034
        %v5036 = vrot.slane %v490, %v5035
        %v5037 = vmul.f32 %v5031, %v5036
        %v5038 = vmul.f32 %v5032, %v5036
        %v5039 = vlaneseq
        %v5040 = vshrl.u32 %v5039, 7
        %v5041 = vsub.s32 7, %v5040
        %v5042 = vrot.slane %v490, %v5041
        %v5043 = vadd.f32 %v5037, %v5042
        %v5044 = vadd.f32 %v5038, %v5042
        %5045 = vst.msk [vmem:[#allocation12] sm:$0xff] %vm510, %v5043
        %5046 = vst.msk [vmem:[#allocation12 + $0x8] sm:$0xff] %vm510, %v5044
        // Predicated region
        $region81: #{tpu_custom_call.1} parent=55 // pred_check
          %p5047 = pneg %p251
        $region82: #{tpu_custom_call.1} parent=55 // pred_check_branch
          %5049 = sbr.rel (%p5047) target = $region84
        $region83: #{tpu_custom_call.1} parent=55 // pred_region
          %s5051 = ssub.s32 256, 256
          %5052 = vsyncadd [#allocation5], %s5051
          %s5053 = sshll.u32 [#allocation12], 4
          %s5054 = int_to_ptr.vmem [resolvable:$true] %s5053
          %5059 = dma.vmem_to_hbm [thread:$0]  %s5054, 256, %s9, [#allocation5], 128, 128, 8
        $region84: #{tpu_custom_call.1} parent=55 // pred_fallthru
          _
        // Predicated region
        $region85: #{tpu_custom_call.1} parent=55 // pred_check
          %p5060 = pneg %p251
        $region86: #{tpu_custom_call.1} parent=55 // pred_check_branch
          %5062 = sbr.rel (%p5060) target = $region88
        $region87: #{tpu_custom_call.1} parent=55 // pred_region
          %5063 = dma.done [#allocation5], 256
        $region88: #{tpu_custom_call.1} parent=55 // pred_fallthru
          _
      $region56: #{tpu_custom_call.1} parent=5 // pred_fallthru
        _
      %p5064 = scmp.le.s32.totalorder 2, %s19
      // Predicated region
      $region89: #{tpu_custom_call.1} parent=5 // pred_check
        %p5065 = pneg %p5064
      $region90: #{tpu_custom_call.1} parent=5 // pred_check_branch
        %5067 = sbr.rel (%p5065) target = $region92
      $region91: #{tpu_custom_call.1} parent=5 // pred_region
        %s5068 = ssub.s32 %s19, 2
      $region92: #{tpu_custom_call.1} parent=5 // pred_fallthru
        _
    $region6: #{tpu_custom_call.1} parent=1 // loop_footer
      %s23 = sadd.s32 1, %s19
    $region7: #{tpu_custom_call.1} parent=1 // loop_footer_branch
      %18 = sbr.rel target = $region3
    $region8: #{tpu_custom_call.1} parent=1 // loop_exit
      _
    %5069 = vsyncpa [#allocation4], 1
    %s5070 = scalar_lea.sflag [#allocation4], 1
    %5071 = vsyncpa %s5070, 1
    %5072 = vsyncpa [#allocation7], 1
    %5073 = vsyncpa [#allocation10], 1
    %5074 = vsyncpa [#allocation5], 1
    %s5075 = scalar_lea.sflag [#allocation5], 1
    %5076 = vsyncpa %s5075, 1

</llo_original>
